<compile_context>
chip_gen: v7x
topology: tpu7x:2x2x1
jax: 0.10.0
libtpu: 0.0.40
codegen_flags: <defaults>
</compile_context>

<pallas_src>
import numpy as np
import jax
import jax.numpy as jnp
from jax.experimental import pallas as pl
from jax.experimental.pallas import tpu as pltpu

# ---------------- deterministic config (scaled-down StyleGAN shapes) -------------------
BATCH   = 256        # total PPL samples drawn per call ("batch_size" of forward())
TM      = 128        # samples per grid step (branch matmuls run at M = 2*TM = 256 rows)
ZDIM    = 128        # latent dim (512 in the reference)
WDIM    = 128        # w dim
NUM_WS  = 12         # .repeat(1, 12, 1)
C       = 3          # image channels
HS = WS_ = 16        # synthesis output spatial size
HO = WO  = 32        # F.interpolate target (256 in the reference)
FDIM    = 128        # LPIPS feature dim
SYN     = C * HS * WS_    # 768  flattened synthesis image
IMG     = C * HO * WO     # 3072 flattened upsampled image (folded away on host)
EPS     = 1e-4       # self.epsilon
LRELU   = 0.2

# TODO(synk): space == 'z' slerp branch, pdb.set_trace() and genBlock.saveImage() are
#             debugging / alternate paths and are not reproduced here.


def _ppl_kernel(t_ref, z0_ref, z1_ref, wm_ref, bm_ref, ws_ref, bs_ref,
                wve_ref, be_ref, dist_ref):
    # --- G_Mapper on the stacked [z0; z1] batch: one MXU pass for both latents ------
    z = jnp.concatenate([z0_ref[...], z1_ref[...]], axis=0)          # [2*TM, ZDIM]
    h = jnp.dot(z, wm_ref[...], preferred_element_type=jnp.float32) + bm_ref[...]
    w = jnp.where(h > 0, h, LRELU * h)                               # [2*TM, WDIM]
    w0 = w[:TM]
    w1 = w[TM:]

    # torch.lerp(w0, w1, t) / torch.lerp(w0, w1, t + eps)
    t = t_ref[...]                                                   # [TM, 1]
    dw = w1 - w0
    wt0 = w0 + t * dw
    wt1 = wt0 + EPS * dw

    # .repeat(1, 12, 1) folded into Ws (Ws_folded = sum of its 12 row blocks);
    # both eps-branches stacked into one M = 2*TM MXU pass.
    wt = jnp.concatenate([wt0, wt1], axis=0)                         # [2*TM, WDIM]

    # synthetic G_Synthesis -> image in [-1, 1]
    x = jnp.tanh(jnp.dot(wt, ws_ref[...], preferred_element_type=jnp.float32)
                 + bs_ref[...])                                      # [2*TM, SYN]

    # bilinear align_corners=True resize + (img+1)*127.5 + vgg16 linear features,
    # folded on host into Wv_eff = 127.5*(U @ Wv), b_eff = 127.5*colsum(Wv) (exact).
    f = jnp.maximum(jnp.dot(x, wve_ref[...], preferred_element_type=jnp.float32)
                    + be_ref[...], 0.0)                              # [2*TM, FDIM]
    # unit-normalized LPIPS features
    f = f * jax.lax.rsqrt(jnp.sum(f * f, axis=-1, keepdims=True) + 1e-8)

    d = f[:TM] - f[TM:]                                              # [TM, FDIM]
    # lane-dense per-sample reduction: contract FDIM, samples land on the lane axis.
    ones_f = jnp.ones((1, FDIM), jnp.float32)
    sq = jnp.einsum('of,mf->om', ones_f, d * d,
                    preferred_element_type=jnp.float32)              # [1, TM]
    # dist = (lpips_t0 - lpips_t1).square().sum(1) / eps**2
    dist_ref[...] = sq * (1.0 / (EPS * EPS))


def _bilinear_matrix(out_size, in_size):
    """Row-interpolation matrix, mode='bilinear', align_corners=True."""
    s = np.arange(out_size, dtype=np.float64) * (in_size - 1) / (out_size - 1)
    lo = np.floor(s).astype(np.int64)
    hi = np.minimum(lo + 1, in_size - 1)
    frac = s - lo
    M = np.zeros((out_size, in_size), dtype=np.float32)
    M[np.arange(out_size), lo] += (1.0 - frac).astype(np.float32)
    M[np.arange(out_size), hi] += frac.astype(np.float32)
    return M


def make_params():
    """Deterministic synthetic weights; all algebraic folds are done here on host."""
    k = jax.random.PRNGKey(42)
    k1, k2, k3 = jax.random.split(k, 3)

    Wm = jax.random.normal(k1, (ZDIM, WDIM), jnp.float32) / np.sqrt(ZDIM)
    bm = jnp.zeros((1, WDIM), jnp.float32)

    # synthetic G_Synthesis weight over the 12 repeated w vectors, then fold the
    # repeat: every [WDIM, SYN] block multiplies the same w, so summing is exact.
    Ws = jax.random.normal(k2, (NUM_WS * WDIM, SYN), jnp.float32) / np.sqrt(NUM_WS * WDIM)
    Ws_folded = jnp.sum(Ws.reshape(NUM_WS, WDIM, SYN), axis=0)       # [WDIM, SYN]
    bs = jnp.zeros((1, SYN), jnp.float32)

    # synthetic vgg16 feature weight on the upsampled 3x32x32 image
    Wv = np.asarray(jax.random.normal(k3, (IMG, FDIM), jnp.float32)) / np.sqrt(IMG)

    # bilinear upsample as a block-diagonal operator, folded with the affine and Wv:
    #   f_pre = ((x @ U) + 1) * 127.5 @ Wv  ==  x @ (127.5 * U @ Wv) + 127.5*colsum(Wv)
    A  = _bilinear_matrix(HO, HS)                                    # [HO, HS]
    Bw = _bilinear_matrix(WO, WS_)                                   # [WO, WS]
    K  = np.kron(A, Bw)                                              # [HO*WO, HS*WS]
    U  = np.kron(np.eye(C, dtype=np.float32), K).T.astype(np.float32)  # [SYN, IMG]
    Wv_eff = jnp.asarray(127.5 * (U @ Wv), jnp.float32)              # [SYN, FDIM]
    b_eff  = jnp.asarray(127.5 * Wv.sum(axis=0, keepdims=True), jnp.float32)  # [1, FDIM]

    return Wm, bm, Ws_folded, bs, Wv_eff, b_eff


def ppl_sampler(t, z0, z1, params):
    Wm, bm, Ws_f, bs, Wv_eff, b_eff = params
    n = t.shape[0]
    assert n % TM == 0, "total samples must be a multiple of TM"
    grid = (n // TM,)
    const = lambda g: (0, 0)      # weights: constant block -> stay VMEM-resident

    out = pl.pallas_call(
        _ppl_kernel,
        out_shape=jax.ShapeDtypeStruct((1, n), jnp.float32),
        grid=grid,
        in_specs=[
            pl.BlockSpec((TM, 1),      lambda g: (g, 0)),   # t
            pl.BlockSpec((TM, ZDIM),   lambda g: (g, 0)),   # z0
            pl.BlockSpec((TM, ZDIM),   lambda g: (g, 0)),   # z1
            pl.BlockSpec((ZDIM, WDIM), const),              # Wm
            pl.BlockSpec((1, WDIM),    const),              # bm
            pl.BlockSpec((WDIM, SYN),  const),              # Ws_folded
            pl.BlockSpec((1, SYN),     const),              # bs
            pl.BlockSpec((SYN, FDIM),  const),              # Wv_eff
            pl.BlockSpec((1, FDIM),    const),              # b_eff
        ],
        out_specs=pl.BlockSpec((1, TM), lambda g: (0, g)),  # lane-dense dist
        compiler_params=pltpu.CompilerParams(
            dimension_semantics=("parallel",)),             # shards over TCs on v7x
    )(t, z0, z1, Wm, bm, Ws_f, bs, Wv_eff, b_eff)
    return out[0]                                           # dist: [n]


if __name__ == "__main__":
    key = jax.random.PRNGKey(0)
    kt, kz = jax.random.split(key)
    # t = torch.rand(batch_size)[:, None]
    t = jax.random.uniform(kt, (BATCH, 1), jnp.float32)
    # z0, z1 = torch.randn([batch_size*2, 512]).chunk(2)
    z = jax.random.normal(kz, (2 * BATCH, ZDIM), jnp.float32)
    z0, z1 = z[:BATCH], z[BATCH:]

    params = make_params()
    dist = jax.block_until_ready(ppl_sampler(t, z0, z1, params))
    assert dist.shape == (BATCH,) and bool(jnp.all(jnp.isfinite(dist)))
    print("KERNEL_OK")
</pallas_src>

<mosaic_0001>
module attributes {stable_mosaic.version = 11 : i64} {
  func.func @_ppl_kernel(%arg0: i32, %arg1: memref<128x1xf32, #tpu.memory_space<vmem>>, %arg2: memref<128x128xf32, #tpu.memory_space<vmem>>, %arg3: memref<128x128xf32, #tpu.memory_space<vmem>>, %arg4: memref<128x128xf32, #tpu.memory_space<vmem>>, %arg5: memref<1x128xf32, #tpu.memory_space<vmem>>, %arg6: memref<128x768xf32, #tpu.memory_space<vmem>>, %arg7: memref<1x768xf32, #tpu.memory_space<vmem>>, %arg8: memref<768x128xf32, #tpu.memory_space<vmem>>, %arg9: memref<1x128xf32, #tpu.memory_space<vmem>>, %arg10: memref<1x128xf32, #tpu.memory_space<vmem>>) attributes {dimension_semantics = [#tpu.dimension_semantics<parallel>], iteration_bounds = array<i64: 2>, scalar_prefetch = 0 : i64, scratch_operands = 0 : i64, tpu.core_type = #tpu.core_type<tc>, window_params = [{transform_indices = @transform_0, window_bounds = array<i64: 128, 1>}, {transform_indices = @transform_1, window_bounds = array<i64: 128, 128>}, {transform_indices = @transform_2, window_bounds = array<i64: 128, 128>}, {pipeline_mode = #tpu.pipeline_mode<synchronous>, transform_indices = @transform_3, window_bounds = array<i64: 128, 128>}, {pipeline_mode = #tpu.pipeline_mode<synchronous>, transform_indices = @transform_4, window_bounds = array<i64: 1, 128>}, {pipeline_mode = #tpu.pipeline_mode<synchronous>, transform_indices = @transform_5, window_bounds = array<i64: 128, 768>}, {pipeline_mode = #tpu.pipeline_mode<synchronous>, transform_indices = @transform_6, window_bounds = array<i64: 1, 768>}, {pipeline_mode = #tpu.pipeline_mode<synchronous>, transform_indices = @transform_7, window_bounds = array<i64: 768, 128>}, {pipeline_mode = #tpu.pipeline_mode<synchronous>, transform_indices = @transform_8, window_bounds = array<i64: 1, 128>}, {transform_indices = @transform_9, window_bounds = array<i64: 1, 128>}]} {
    %c0 = arith.constant 0 : index
    %c0_0 = arith.constant 0 : index
    %0 = vector.load %arg2[%c0, %c0_0] : memref<128x128xf32, #tpu.memory_space<vmem>>, vector<128x128xf32>
    %c0_1 = arith.constant 0 : index
    %c0_2 = arith.constant 0 : index
    %1 = vector.load %arg3[%c0_1, %c0_2] : memref<128x128xf32, #tpu.memory_space<vmem>>, vector<128x128xf32>
    %2 = tpu.concatenate %0, %1 in 0 : vector<128x128xf32>, vector<128x128xf32> -> vector<256x128xf32>
    %c0_3 = arith.constant 0 : index
    %c0_4 = arith.constant 0 : index
    %3 = vector.load %arg4[%c0_3, %c0_4] : memref<128x128xf32, #tpu.memory_space<vmem>>, vector<128x128xf32>
    %cst = arith.constant dense<0.000000e+00> : vector<256x128xf32>
    %4 = tpu.matmul %2, %3, %cst {dimension_numbers = #tpu.dot_dimension_numbers<[1], [0], [0], [1], [0, 0, 1, 1], [], []>} : vector<256x128xf32>, vector<128x128xf32>, vector<256x128xf32> -> vector<256x128xf32>
    %c0_5 = arith.constant 0 : index
    %c0_6 = arith.constant 0 : index
    %5 = vector.load %arg5[%c0_5, %c0_6] : memref<1x128xf32, #tpu.memory_space<vmem>>, vector<1x128xf32>
    %6 = vector.broadcast %5 : vector<1x128xf32> to vector<256x128xf32>
    %7 = arith.addf %4, %6 : vector<256x128xf32>
    %cst_7 = arith.constant 0.000000e+00 : f32
    %8 = vector.broadcast %cst_7 : f32 to vector<256x128xf32>
    %9 = arith.cmpf ogt, %7, %8 : vector<256x128xf32>
    %cst_8 = arith.constant 2.000000e-01 : f32
    %10 = vector.broadcast %cst_8 : f32 to vector<256x128xf32>
    %11 = arith.mulf %10, %7 : vector<256x128xf32>
    %12 = arith.select %9, %7, %11 : vector<256x128xi1>, vector<256x128xf32>
    %13 = vector.extract_strided_slice %12 {offsets = [0, 0], sizes = [128, 128], strides = [1, 1]} : vector<256x128xf32> to vector<128x128xf32>
    %14 = vector.extract_strided_slice %12 {offsets = [128, 0], sizes = [128, 128], strides = [1, 1]} : vector<256x128xf32> to vector<128x128xf32>
    %c0_9 = arith.constant 0 : index
    %c0_10 = arith.constant 0 : index
    %15 = vector.load %arg1[%c0_9, %c0_10] : memref<128x1xf32, #tpu.memory_space<vmem>>, vector<128x1xf32>
    %16 = arith.subf %14, %13 : vector<128x128xf32>
    %17 = vector.broadcast %15 : vector<128x1xf32> to vector<128x128xf32>
    %18 = arith.mulf %17, %16 : vector<128x128xf32>
    %19 = arith.addf %13, %18 : vector<128x128xf32>
    %cst_11 = arith.constant 9.99999974E-5 : f32
    %20 = vector.broadcast %cst_11 : f32 to vector<128x128xf32>
    %21 = arith.mulf %20, %16 : vector<128x128xf32>
    %22 = arith.addf %19, %21 : vector<128x128xf32>
    %23 = tpu.concatenate %19, %22 in 0 : vector<128x128xf32>, vector<128x128xf32> -> vector<256x128xf32>
    %c0_12 = arith.constant 0 : index
    %c0_13 = arith.constant 0 : index
    %24 = vector.load %arg6[%c0_12, %c0_13] : memref<128x768xf32, #tpu.memory_space<vmem>>, vector<128x768xf32>
    %cst_14 = arith.constant dense<0.000000e+00> : vector<256x768xf32>
    %25 = tpu.matmul %23, %24, %cst_14 {dimension_numbers = #tpu.dot_dimension_numbers<[1], [0], [0], [1], [0, 0, 1, 1], [], []>} : vector<256x128xf32>, vector<128x768xf32>, vector<256x768xf32> -> vector<256x768xf32>
    %c0_15 = arith.constant 0 : index
    %c0_16 = arith.constant 0 : index
    %26 = vector.load %arg7[%c0_15, %c0_16] : memref<1x768xf32, #tpu.memory_space<vmem>>, vector<1x768xf32>
    %27 = vector.broadcast %26 : vector<1x768xf32> to vector<256x768xf32>
    %28 = arith.addf %25, %27 : vector<256x768xf32>
    %29 = math.tanh %28 : vector<256x768xf32>
    %c0_17 = arith.constant 0 : index
    %c0_18 = arith.constant 0 : index
    %30 = vector.load %arg8[%c0_17, %c0_18] : memref<768x128xf32, #tpu.memory_space<vmem>>, vector<768x128xf32>
    %cst_19 = arith.constant dense<0.000000e+00> : vector<256x128xf32>
    %31 = tpu.matmul %29, %30, %cst_19 {dimension_numbers = #tpu.dot_dimension_numbers<[1], [0], [0], [1], [0, 0, 1, 1], [], []>} : vector<256x768xf32>, vector<768x128xf32>, vector<256x128xf32> -> vector<256x128xf32>
    %c0_20 = arith.constant 0 : index
    %c0_21 = arith.constant 0 : index
    %32 = vector.load %arg9[%c0_20, %c0_21] : memref<1x128xf32, #tpu.memory_space<vmem>>, vector<1x128xf32>
    %33 = vector.broadcast %32 : vector<1x128xf32> to vector<256x128xf32>
    %34 = arith.addf %31, %33 : vector<256x128xf32>
    %cst_22 = arith.constant 0.000000e+00 : f32
    %35 = vector.broadcast %cst_22 : f32 to vector<256x128xf32>
    %36 = arith.maximumf %34, %35 : vector<256x128xf32>
    %37 = arith.mulf %36, %36 : vector<256x128xf32>
    %cst_23 = arith.constant dense<0.000000e+00> : vector<256xf32>
    %38 = vector.multi_reduction <add>, %37, %cst_23 [1] : vector<256x128xf32> to vector<256xf32>
    %39 = vector.shape_cast %38 : vector<256xf32> to vector<256x1xf32>
    %cst_24 = arith.constant 9.99999993E-9 : f32
    %40 = vector.broadcast %cst_24 : f32 to vector<256x1xf32>
    %41 = arith.addf %39, %40 : vector<256x1xf32>
    %42 = math.rsqrt %41 : vector<256x1xf32>
    %43 = vector.broadcast %42 : vector<256x1xf32> to vector<256x128xf32>
    %44 = arith.mulf %36, %43 : vector<256x128xf32>
    %45 = vector.extract_strided_slice %44 {offsets = [0, 0], sizes = [128, 128], strides = [1, 1]} : vector<256x128xf32> to vector<128x128xf32>
    %46 = vector.extract_strided_slice %44 {offsets = [128, 0], sizes = [128, 128], strides = [1, 1]} : vector<256x128xf32> to vector<128x128xf32>
    %47 = arith.subf %45, %46 : vector<128x128xf32>
    %cst_25 = arith.constant 1.000000e+00 : f32
    %48 = vector.broadcast %cst_25 : f32 to vector<1x128xf32>
    %49 = arith.mulf %47, %47 : vector<128x128xf32>
    "tpu.trace_start"() <{level = 10 : i32, message = "of,mf->om"}> : () -> ()
    %cst_26 = arith.constant dense<0.000000e+00> : vector<1x128xf32>
    %50 = tpu.matmul %48, %49, %cst_26 {dimension_numbers = #tpu.dot_dimension_numbers<[1], [1], [0], [0], [0, 0, 1, 0], [], []>} : vector<1x128xf32>, vector<128x128xf32>, vector<1x128xf32> -> vector<1x128xf32>
    "tpu.trace_stop"() : () -> ()
    %cst_27 = arith.constant 1.000000e+08 : f32
    %51 = vector.broadcast %cst_27 : f32 to vector<1x128xf32>
    %52 = arith.mulf %50, %51 : vector<1x128xf32>
    %c0_28 = arith.constant 0 : index
    %c0_29 = arith.constant 0 : index
    %53 = vector.load %arg10[%c0_28, %c0_29] : memref<1x128xf32, #tpu.memory_space<vmem>>, vector<1x128xf32>
    tpu.vector_store %arg10[%c0_28, %c0_29], %52 {strides = array<i32>} : memref<1x128xf32, #tpu.memory_space<vmem>>, vector<1x128xf32>,
    return
  }
  func.func @transform_0(%arg0: i32) -> (i32, i32) {
    %c0_i32 = arith.constant 0 : i32
    %c0_i32_0 = arith.constant 0 : i32
    return %arg0, %c0_i32 : i32, i32
  }
  func.func @transform_1(%arg0: i32) -> (i32, i32) {
    %c0_i32 = arith.constant 0 : i32
    %c0_i32_0 = arith.constant 0 : i32
    return %arg0, %c0_i32 : i32, i32
  }
  func.func @transform_2(%arg0: i32) -> (i32, i32) {
    %c0_i32 = arith.constant 0 : i32
    %c0_i32_0 = arith.constant 0 : i32
    return %arg0, %c0_i32 : i32, i32
  }
  func.func @transform_3(%arg0: i32) -> (i32, i32) {
    %c0_i32 = arith.constant 0 : i32
    %c0_i32_0 = arith.constant 0 : i32
    %c0_i32_1 = arith.constant 0 : i32
    return %c0_i32, %c0_i32_0 : i32, i32
  }
  func.func @transform_4(%arg0: i32) -> (i32, i32) {
    %c0_i32 = arith.constant 0 : i32
    %c0_i32_0 = arith.constant 0 : i32
    %c0_i32_1 = arith.constant 0 : i32
    return %c0_i32, %c0_i32_0 : i32, i32
  }
  func.func @transform_5(%arg0: i32) -> (i32, i32) {
    %c0_i32 = arith.constant 0 : i32
    %c0_i32_0 = arith.constant 0 : i32
    %c0_i32_1 = arith.constant 0 : i32
    return %c0_i32, %c0_i32_0 : i32, i32
  }
  func.func @transform_6(%arg0: i32) -> (i32, i32) {
    %c0_i32 = arith.constant 0 : i32
    %c0_i32_0 = arith.constant 0 : i32
    %c0_i32_1 = arith.constant 0 : i32
    return %c0_i32, %c0_i32_0 : i32, i32
  }
  func.func @transform_7(%arg0: i32) -> (i32, i32) {
    %c0_i32 = arith.constant 0 : i32
    %c0_i32_0 = arith.constant 0 : i32
    %c0_i32_1 = arith.constant 0 : i32
    return %c0_i32, %c0_i32_0 : i32, i32
  }
  func.func @transform_8(%arg0: i32) -> (i32, i32) {
    %c0_i32 = arith.constant 0 : i32
    %c0_i32_0 = arith.constant 0 : i32
    %c0_i32_1 = arith.constant 0 : i32
    return %c0_i32, %c0_i32_0 : i32, i32
  }
  func.func @transform_9(%arg0: i32) -> (i32, i32) {
    %c0_i32 = arith.constant 0 : i32
    %c0_i32_0 = arith.constant 0 : i32
    return %c0_i32, %arg0 : i32, i32
  }
}

</mosaic_0001>

<llo_original>
// kernel: tpu_custom_call.1
$region0: #{tpu_custom_call.1}
  #allocation0 [shape = 'u32[]', space=smem, size = 0x4, offset = 0x4, fixed_abs, tag = 'smem constant byte address 0x4 - core index']
  #allocation1 [shape = 'u32[144,128]{1,0:T(1,128)}', space=vmem, size = 0x12000, scoped, tag = 'internal scratch']
  %s0 = inlined_call_operand.vmem [shape: f32[256,1], index: 0, kind: input, shape index: {}]
  %s1 = inlined_call_operand.vmem [shape: f32[256,128], index: 1, kind: input, shape index: {}]
  %s2 = inlined_call_operand.hbm [shape: f32[256,128], index: 2, kind: input, shape index: {}]
  %s3 = inlined_call_operand.hbm [shape: f32[128,128], index: 3, kind: input, shape index: {}]
  %s4 = inlined_call_operand.vmem [shape: f32[1,128], index: 4, kind: input, shape index: {}]
  %s5 = inlined_call_operand.hbm [shape: f32[128,768], index: 5, kind: input, shape index: {}]
  %s6 = inlined_call_operand.vmem [shape: f32[1,768], index: 6, kind: input, shape index: {}]
  %s7 = inlined_call_operand.hbm [shape: f32[768,128], index: 7, kind: input, shape index: {}]
  %s8 = inlined_call_operand.vmem [shape: f32[1,128], index: 8, kind: input, shape index: {}]
  %s9 = inlined_call_operand.hbm [shape: f32[1,256], index: 9, kind: output, shape index: {}]
  %s10 = sld [smem:[#allocation0]]
  $region85: #{tpu_custom_call.1} parent=0
    _
  %s12 = ssub.s32 1, %s10
  %s13 = scalar_select 0, %s12, %s10
  $region1: #{tpu_custom_call.1} parent=0
    #allocation2 [shape = 'u8[131072]{0}', space=vmem, size = 0x20000, scoped, tag = 'input window, operand 2']
    #allocation3 [shape = 's32[2]{0}', space=sflag, size = 0x8, scoped, tag = 'scoped memory for tpu_custom_call.1']
    #allocation4 [shape = 's32[2]{0}', space=sflag, size = 0x8, scoped, tag = 'scoped memory for tpu_custom_call.1']
    #allocation5 [shape = 'u8[65536]{0}', space=vmem, size = 0x10000, scoped, tag = 'input window, operand 3, single buffered']
    #allocation6 [shape = 's32[1]{0}', space=sflag, size = 0x4, scoped, tag = 'scoped memory for tpu_custom_call.1']
    #allocation7 [shape = 'u8[393216]{0}', space=vmem, size = 0x60000, scoped, tag = 'input window, operand 5, single buffered']
    #allocation8 [shape = 'u8[393216]{0}', space=vmem, size = 0x60000, scoped, tag = 'input window, operand 7, single buffered']
    #allocation9 [shape = 's32[1]{0}', space=sflag, size = 0x4, scoped, tag = 'scoped memory for tpu_custom_call.1']
    #allocation10 [shape = 'u8[1024]{0}', space=vmem, size = 0x400, scoped, tag = 'output window, operand 0']
    %14 = vsyncpa [#allocation3], 0
    %s15 = scalar_lea.sflag [#allocation3], 1
    %16 = vsyncpa %s15, 0
    %17 = vsyncpa [#allocation6], 0
    %18 = vsyncpa [#allocation9], 0
    %19 = vsyncpa [#allocation4], 0
    %s20 = scalar_lea.sflag [#allocation4], 1
    %21 = vsyncpa %s20, 0
    loop: start=0, step=1, limit=4
    $region2: #{tpu_custom_call.1} parent=1 // loop_pre_header
      _
    $region3: #{tpu_custom_call.1} parent=1 // loop_header
      %s23 = sphi 0, %s27
      %p24 = scmp.ge.s32.totalorder %s23, 4
      %s33 = sphi 0, %s35
      %s36 = sphi 0, %s33
      %s37 = sphi 0, %s36
      %s53 = sphi 0, %s37
      %s59 = sphi 0, %s61
      %s62 = sphi 0, %s59
      %s63 = sphi 0, %s62
      %s79 = sphi 0, %s63
      %s85 = sphi 0, %s87
      %s88 = sphi 0, %s85
      %s89 = sphi 0, %s88
      %s105 = sphi 0, %s89
      %s109 = sphi 0, %s109
      %s111 = sphi 0, %s109
      %s112 = sphi 0, %s111
      %s126 = sphi 0, %s112
      %s130 = sphi 0, %s130
      %s132 = sphi 0, %s130
      %s133 = sphi 0, %s132
      %s147 = sphi 0, %s133
      %s151 = sphi 0, %s151
      %s153 = sphi 0, %s151
      %s154 = sphi 0, %s153
      %s168 = sphi 0, %s154
      %s172 = sphi 0, %s172
      %s174 = sphi 0, %s172
      %s175 = sphi 0, %s174
      %s189 = sphi 0, %s175
      %s193 = sphi 0, %s193
      %s195 = sphi 0, %s193
      %s196 = sphi 0, %s195
      %s210 = sphi 0, %s196
      %s214 = sphi 0, %s214
      %s216 = sphi 0, %s214
      %s217 = sphi 0, %s216
      %s231 = sphi 0, %s217
      %s237 = sphi 0, %s239
      %s240 = sphi 0, %s237
      %s241 = sphi 0, %s240
      %s257 = sphi 0, %s241
    $region4: #{tpu_custom_call.1} parent=1 // loop_header_branch
      %26 = sbr.rel (%p24) target = $region8
    $region5: #{tpu_custom_call.1} parent=1 // loop_body
      %s28 = ssub.s32 %s23, 1
      %s29 = ssub.s32 %s23, 2
      %s30 = sadd.s32 %s23, 1
      %s31 = ssub.s32 %s23, %s30
      %p32 = scmp.eq.s32.totalorder %s31, 0
      %s34 = sadd.s32 %s33, 1
      %s35 = scalar_select %p32, %s33, %s34
      %p38 = pneg %p32
      %p39 = scmp.eq.s32.totalorder %s23, 1
      %p40 = por %p38, %p39
      %p41 = scmp.ne.s32.totalorder %s33, %s36
      %p42 = scmp.eq.s32.totalorder %s23, 0
      %p43 = por %p41, %p42
      %p44 = scmp.ne.s32.totalorder %s33, %s36
      %p45 = scmp.eq.s32.totalorder %s28, 1
      %p46 = por %p44, %p45
      %p47 = scmp.ne.s32.totalorder %s36, %s37
      %p48 = scmp.eq.s32.totalorder %s28, 0
      %p49 = por %p47, %p48
      %p50 = scmp.ne.s32.totalorder %s36, %s37
      %p51 = scmp.eq.s32.totalorder %s29, 1
      %p52 = por %p50, %p51
      %p54 = scmp.ne.s32.totalorder %s37, %s53
      %p55 = scmp.eq.s32.totalorder %s29, 0
      %p56 = por %p54, %p55
      %s57 = ssub.s32 %s23, %s30
      %p58 = scmp.eq.s32.totalorder %s57, 0
      %s60 = sadd.s32 %s59, 1
      %s61 = scalar_select %p58, %s59, %s60
      %p64 = pneg %p58
      %p65 = scmp.eq.s32.totalorder %s23, 1
      %p66 = por %p64, %p65
      %p67 = scmp.ne.s32.totalorder %s59, %s62
      %p68 = scmp.eq.s32.totalorder %s23, 0
      %p69 = por %p67, %p68
      %p70 = scmp.ne.s32.totalorder %s59, %s62
      %p71 = scmp.eq.s32.totalorder %s28, 1
      %p72 = por %p70, %p71
      %p73 = scmp.ne.s32.totalorder %s62, %s63
      %p74 = scmp.eq.s32.totalorder %s28, 0
      %p75 = por %p73, %p74
      %p76 = scmp.ne.s32.totalorder %s62, %s63
      %p77 = scmp.eq.s32.totalorder %s29, 1
      %p78 = por %p76, %p77
      %p80 = scmp.ne.s32.totalorder %s63, %s79
      %p81 = scmp.eq.s32.totalorder %s29, 0
      %p82 = por %p80, %p81
      %s83 = ssub.s32 %s23, %s30
      %p84 = scmp.eq.s32.totalorder %s83, 0
      %s86 = sadd.s32 %s85, 1
      %s87 = scalar_select %p84, %s85, %s86
      %p90 = pneg %p84
      %p91 = scmp.eq.s32.totalorder %s23, 1
      %p92 = por %p90, %p91
      %p93 = scmp.ne.s32.totalorder %s85, %s88
      %p94 = scmp.eq.s32.totalorder %s23, 0
      %p95 = por %p93, %p94
      %p96 = scmp.ne.s32.totalorder %s85, %s88
      %p97 = scmp.eq.s32.totalorder %s28, 1
      %p98 = por %p96, %p97
      %p99 = scmp.ne.s32.totalorder %s88, %s89
      %p100 = scmp.eq.s32.totalorder %s28, 0
      %p101 = por %p99, %p100
      %p102 = scmp.ne.s32.totalorder %s88, %s89
      %p103 = scmp.eq.s32.totalorder %s29, 1
      %p104 = por %p102, %p103
      %p106 = scmp.ne.s32.totalorder %s89, %s105
      %p107 = scmp.eq.s32.totalorder %s29, 0
      %p108 = por %p106, %p107
      %s110 = sadd.s32 %s109, 1
      %p113 = scmp.eq.s32.totalorder %s23, 1
      %p114 = scmp.ne.s32.totalorder %s109, %s111
      %p115 = scmp.eq.s32.totalorder %s23, 0
      %p116 = por %p114, %p115
      %p117 = scmp.ne.s32.totalorder %s109, %s111
      %p118 = scmp.eq.s32.totalorder %s28, 1
      %p119 = por %p117, %p118
      %p120 = scmp.ne.s32.totalorder %s111, %s112
      %p121 = scmp.eq.s32.totalorder %s28, 0
      %p122 = por %p120, %p121
      %p123 = scmp.ne.s32.totalorder %s111, %s112
      %p124 = scmp.eq.s32.totalorder %s29, 1
      %p125 = por %p123, %p124
      %p127 = scmp.ne.s32.totalorder %s112, %s126
      %p128 = scmp.eq.s32.totalorder %s29, 0
      %p129 = por %p127, %p128
      %s131 = sadd.s32 %s130, 1
      %p134 = scmp.eq.s32.totalorder %s23, 1
      %p135 = scmp.ne.s32.totalorder %s130, %s132
      %p136 = scmp.eq.s32.totalorder %s23, 0
      %p137 = por %p135, %p136
      %p138 = scmp.ne.s32.totalorder %s130, %s132
      %p139 = scmp.eq.s32.totalorder %s28, 1
      %p140 = por %p138, %p139
      %p141 = scmp.ne.s32.totalorder %s132, %s133
      %p142 = scmp.eq.s32.totalorder %s28, 0
      %p143 = por %p141, %p142
      %p144 = scmp.ne.s32.totalorder %s132, %s133
      %p145 = scmp.eq.s32.totalorder %s29, 1
      %p146 = por %p144, %p145
      %p148 = scmp.ne.s32.totalorder %s133, %s147
      %p149 = scmp.eq.s32.totalorder %s29, 0
      %p150 = por %p148, %p149
      %s152 = sadd.s32 %s151, 1
      %p155 = scmp.eq.s32.totalorder %s23, 1
      %p156 = scmp.ne.s32.totalorder %s151, %s153
      %p157 = scmp.eq.s32.totalorder %s23, 0
      %p158 = por %p156, %p157
      %p159 = scmp.ne.s32.totalorder %s151, %s153
      %p160 = scmp.eq.s32.totalorder %s28, 1
      %p161 = por %p159, %p160
      %p162 = scmp.ne.s32.totalorder %s153, %s154
      %p163 = scmp.eq.s32.totalorder %s28, 0
      %p164 = por %p162, %p163
      %p165 = scmp.ne.s32.totalorder %s153, %s154
      %p166 = scmp.eq.s32.totalorder %s29, 1
      %p167 = por %p165, %p166
      %p169 = scmp.ne.s32.totalorder %s154, %s168
      %p170 = scmp.eq.s32.totalorder %s29, 0
      %p171 = por %p169, %p170
      %s173 = sadd.s32 %s172, 1
      %p176 = scmp.eq.s32.totalorder %s23, 1
      %p177 = scmp.ne.s32.totalorder %s172, %s174
      %p178 = scmp.eq.s32.totalorder %s23, 0
      %p179 = por %p177, %p178
      %p180 = scmp.ne.s32.totalorder %s172, %s174
      %p181 = scmp.eq.s32.totalorder %s28, 1
      %p182 = por %p180, %p181
      %p183 = scmp.ne.s32.totalorder %s174, %s175
      %p184 = scmp.eq.s32.totalorder %s28, 0
      %p185 = por %p183, %p184
      %p186 = scmp.ne.s32.totalorder %s174, %s175
      %p187 = scmp.eq.s32.totalorder %s29, 1
      %p188 = por %p186, %p187
      %p190 = scmp.ne.s32.totalorder %s175, %s189
      %p191 = scmp.eq.s32.totalorder %s29, 0
      %p192 = por %p190, %p191
      %s194 = sadd.s32 %s193, 1
      %p197 = scmp.eq.s32.totalorder %s23, 1
      %p198 = scmp.ne.s32.totalorder %s193, %s195
      %p199 = scmp.eq.s32.totalorder %s23, 0
      %p200 = por %p198, %p199
      %p201 = scmp.ne.s32.totalorder %s193, %s195
      %p202 = scmp.eq.s32.totalorder %s28, 1
      %p203 = por %p201, %p202
      %p204 = scmp.ne.s32.totalorder %s195, %s196
      %p205 = scmp.eq.s32.totalorder %s28, 0
      %p206 = por %p204, %p205
      %p207 = scmp.ne.s32.totalorder %s195, %s196
      %p208 = scmp.eq.s32.totalorder %s29, 1
      %p209 = por %p207, %p208
      %p211 = scmp.ne.s32.totalorder %s196, %s210
      %p212 = scmp.eq.s32.totalorder %s29, 0
      %p213 = por %p211, %p212
      %s215 = sadd.s32 %s214, 1
      %p218 = scmp.eq.s32.totalorder %s23, 1
      %p219 = scmp.ne.s32.totalorder %s214, %s216
      %p220 = scmp.eq.s32.totalorder %s23, 0
      %p221 = por %p219, %p220
      %p222 = scmp.ne.s32.totalorder %s214, %s216
      %p223 = scmp.eq.s32.totalorder %s28, 1
      %p224 = por %p222, %p223
      %p225 = scmp.ne.s32.totalorder %s216, %s217
      %p226 = scmp.eq.s32.totalorder %s28, 0
      %p227 = por %p225, %p226
      %p228 = scmp.ne.s32.totalorder %s216, %s217
      %p229 = scmp.eq.s32.totalorder %s29, 1
      %p230 = por %p228, %p229
      %p232 = scmp.ne.s32.totalorder %s217, %s231
      %p233 = scmp.eq.s32.totalorder %s29, 0
      %p234 = por %p232, %p233
      %s235 = ssub.s32 %s23, %s30
      %p236 = scmp.eq.s32.totalorder %s235, 0
      %s238 = sadd.s32 %s237, 1
      %s239 = scalar_select %p236, %s237, %s238
      %p242 = pneg %p236
      %p243 = scmp.eq.s32.totalorder %s23, 1
      %p244 = por %p242, %p243
      %p245 = scmp.ne.s32.totalorder %s237, %s240
      %p246 = scmp.eq.s32.totalorder %s23, 0
      %p247 = por %p245, %p246
      %p248 = scmp.ne.s32.totalorder %s237, %s240
      %p249 = scmp.eq.s32.totalorder %s28, 1
      %p250 = por %p248, %p249
      %p251 = scmp.ne.s32.totalorder %s240, %s241
      %p252 = scmp.eq.s32.totalorder %s28, 0
      %p253 = por %p251, %p252
      %p254 = scmp.ne.s32.totalorder %s240, %s241
      %p255 = scmp.eq.s32.totalorder %s29, 1
      %p256 = por %p254, %p255
      %p258 = scmp.ne.s32.totalorder %s241, %s257
      %p259 = scmp.eq.s32.totalorder %s29, 0
      %p260 = por %p258, %p259
      %p261 = scmp.le.s32.totalorder 1, %s23
      %p262 = scmp.lt.s32.totalorder %s23, 3
      %p263 = pnand %p261, %p262
      %p264 = pneg %p263
      // Predicated region
      $region9: #{tpu_custom_call.1} parent=5 // pred_check
        _
      $region10: #{tpu_custom_call.1} parent=5 // pred_check_branch
        %266 = sbr.rel (%p263) target = $region12
      $region11: #{tpu_custom_call.1} parent=5 // pred_region
        %s267 = ssub.s32 %s23, 1
        // Predicated region
        $region13: #{tpu_custom_call.1} parent=11 // pred_check
          %p268 = pneg %p122
        $region14: #{tpu_custom_call.1} parent=11 // pred_check_branch
          %270 = sbr.rel (%p268) target = $region16
        $region15: #{tpu_custom_call.1} parent=11 // pred_region
          %s272 = ssub.s32 2048, 2048
          %273 = vsyncadd [#allocation6], %s272
          %s274 = sshll.u32 [#allocation5], 4
          %s275 = int_to_ptr.vmem [resolvable:$true] %s274
          %280 = dma.hbm_to_vmem [thread:$0]  %s3, 2048, %s275, [#allocation6], 128, 128, 8
        $region16: #{tpu_custom_call.1} parent=11 // pred_fallthru
          _
        // Predicated region
        $region17: #{tpu_custom_call.1} parent=11 // pred_check
          %p281 = pneg %p143
        $region18: #{tpu_custom_call.1} parent=11 // pred_check_branch
          %283 = sbr.rel (%p281) target = $region20
        $region19: #{tpu_custom_call.1} parent=11 // pred_region
          _
        $region20: #{tpu_custom_call.1} parent=11 // pred_fallthru
          _
        // Predicated region
        $region21: #{tpu_custom_call.1} parent=11 // pred_check
          %p284 = pneg %p164
        $region22: #{tpu_custom_call.1} parent=11 // pred_check_branch
          %286 = sbr.rel (%p284) target = $region24
        $region23: #{tpu_custom_call.1} parent=11 // pred_region
          %s288 = ssub.s32 12288, 12288
          %289 = vsyncadd [#allocation6], %s288
          %s290 = sshll.u32 [#allocation7], 4
          %s291 = int_to_ptr.vmem [resolvable:$true] %s290
          %296 = dma.hbm_to_vmem [thread:$0]  %s5, 12288, %s291, [#allocation6], 768, 768, 48
        $region24: #{tpu_custom_call.1} parent=11 // pred_fallthru
          _
        // Predicated region
        $region25: #{tpu_custom_call.1} parent=11 // pred_check
          %p297 = pneg %p185
        $region26: #{tpu_custom_call.1} parent=11 // pred_check_branch
          %299 = sbr.rel (%p297) target = $region28
        $region27: #{tpu_custom_call.1} parent=11 // pred_region
          _
        $region28: #{tpu_custom_call.1} parent=11 // pred_fallthru
          _
        // Predicated region
        $region29: #{tpu_custom_call.1} parent=11 // pred_check
          %p300 = pneg %p206
        $region30: #{tpu_custom_call.1} parent=11 // pred_check_branch
          %302 = sbr.rel (%p300) target = $region32
        $region31: #{tpu_custom_call.1} parent=11 // pred_region
          %s304 = ssub.s32 12288, 12288
          %305 = vsyncadd [#allocation9], %s304
          %s306 = sshll.u32 [#allocation8], 4
          %s307 = int_to_ptr.vmem [resolvable:$true] %s306
          %312 = dma.hbm_to_vmem [thread:$0]  %s7, 12288, %s307, [#allocation9], 128, 128, 8
        $region32: #{tpu_custom_call.1} parent=11 // pred_fallthru
          _
        // Predicated region
        $region33: #{tpu_custom_call.1} parent=11 // pred_check
          %p313 = pneg %p227
        $region34: #{tpu_custom_call.1} parent=11 // pred_check_branch
          %315 = sbr.rel (%p313) target = $region36
        $region35: #{tpu_custom_call.1} parent=11 // pred_region
          _
        $region36: #{tpu_custom_call.1} parent=11 // pred_fallthru
          _
      $region12: #{tpu_custom_call.1} parent=5 // pred_fallthru
        _
      %p316 = scmp.lt.s32.totalorder %s23, 2
      // Predicated region
      $region37: #{tpu_custom_call.1} parent=5 // pred_check
        %p317 = pneg %p316
      $region38: #{tpu_custom_call.1} parent=5 // pred_check_branch
        %319 = sbr.rel (%p317) target = $region40
      $region39: #{tpu_custom_call.1} parent=5 // pred_region
        // Predicated region
        $region41: #{tpu_custom_call.1} parent=39 // pred_check
          %p320 = pneg %p43
        $region42: #{tpu_custom_call.1} parent=39 // pred_check_branch
          %322 = sbr.rel (%p320) target = $region44
        $region43: #{tpu_custom_call.1} parent=39 // pred_region
          %s323 = smul.u32 16, %s23
          %p324 = scmp.lt.s32.totalorder %s323, 31
          %s325 = scalar_select %p324, %s323, 31
          %s326 = smul.addr %s325, 8
          %s327 = scalar_lea.vmem %s0, %s326
          %s328 = smul.u32 16, %s23
        $region44: #{tpu_custom_call.1} parent=39 // pred_fallthru
          _
        // Predicated region
        $region45: #{tpu_custom_call.1} parent=39 // pred_check
          %p329 = pneg %p69
        $region46: #{tpu_custom_call.1} parent=39 // pred_check_branch
          %331 = sbr.rel (%p329) target = $region48
        $region47: #{tpu_custom_call.1} parent=39 // pred_region
          %s332 = smul.u32 16, %s23
          %p333 = scmp.lt.s32.totalorder %s332, 31
          %s334 = scalar_select %p333, %s332, 31
          %s335 = smul.addr %s334, 8
          %s336 = scalar_lea.vmem %s1, %s335
          %s337 = smul.u32 16, %s23
        $region48: #{tpu_custom_call.1} parent=39 // pred_fallthru
          _
        // Predicated region
        $region49: #{tpu_custom_call.1} parent=39 // pred_check
          %p338 = pneg %p95
        $region50: #{tpu_custom_call.1} parent=39 // pred_check_branch
          %340 = sbr.rel (%p338) target = $region52
        $region51: #{tpu_custom_call.1} parent=39 // pred_region
          %s341 = sand.u32 %s85, 1
          %s342 = scalar_lea.sflag [#allocation3], %s341
          %s343 = sand.u32 %s85, 1
          %s344 = smul.addr %s343, 128
          %s345 = scalar_lea.vmem [#allocation2], %s344
          %s346 = smul.u32 16, %s23
          %s348 = ssub.s32 2048, 2048
          %349 = vsyncadd %s342, %s348
          %s350 = smul.addr %s346, 128
          %s351 = scalar_lea.hbm %s2, %s350
          %s352 = sshll.u32 %s345, 4
          %s353 = int_to_ptr.vmem [resolvable:$true] %s352
          %358 = dma.hbm_to_vmem [thread:$0]  %s351, 2048, %s353, %s342, 128, 128, 8
        $region52: #{tpu_custom_call.1} parent=39 // pred_fallthru
          _
      $region40: #{tpu_custom_call.1} parent=5 // pred_fallthru
        _
      %p359 = scmp.le.s32.totalorder 1, %s23
      %p360 = scmp.lt.s32.totalorder %s23, 3
      %p361 = pnand %p359, %p360
      %p362 = pneg %p361
      // Predicated region
      $region53: #{tpu_custom_call.1} parent=5 // pred_check
        _
      $region54: #{tpu_custom_call.1} parent=5 // pred_check_branch
        %364 = sbr.rel (%p361) target = $region56
      $region55: #{tpu_custom_call.1} parent=5 // pred_region
        %s365 = ssub.s32 %s23, 1
        %s366 = sand.u32 %s88, 1
        %s367 = scalar_lea.sflag [#allocation3], %s366
        %s368 = sand.u32 %s88, 1
        %s369 = smul.addr %s368, 128
        %s370 = scalar_lea.vmem [#allocation2], %s369
        // Predicated region
        $region57: #{tpu_custom_call.1} parent=55 // pred_check
          %p371 = pneg %p101
        $region58: #{tpu_custom_call.1} parent=55 // pred_check_branch
          %373 = sbr.rel (%p371) target = $region60
        $region59: #{tpu_custom_call.1} parent=55 // pred_region
          %374 = dma.done %s367, 2048
        $region60: #{tpu_custom_call.1} parent=55 // pred_fallthru
          _
        // Predicated region
        $region61: #{tpu_custom_call.1} parent=55 // pred_check
          %p375 = pneg %p122
        $region62: #{tpu_custom_call.1} parent=55 // pred_check_branch
          %377 = sbr.rel (%p375) target = $region64
        $region63: #{tpu_custom_call.1} parent=55 // pred_region
          %378 = dma.done [#allocation6], 2048
        $region64: #{tpu_custom_call.1} parent=55 // pred_fallthru
          _
        // Predicated region
        $region65: #{tpu_custom_call.1} parent=55 // pred_check
          %p379 = pneg %p164
        $region66: #{tpu_custom_call.1} parent=55 // pred_check_branch
          %381 = sbr.rel (%p379) target = $region68
        $region67: #{tpu_custom_call.1} parent=55 // pred_region
          %382 = dma.done [#allocation6], 12288
        $region68: #{tpu_custom_call.1} parent=55 // pred_fallthru
          _
        // Predicated region
        $region69: #{tpu_custom_call.1} parent=55 // pred_check
          %p383 = pneg %p206
        $region70: #{tpu_custom_call.1} parent=55 // pred_check_branch
          %385 = sbr.rel (%p383) target = $region72
        $region71: #{tpu_custom_call.1} parent=55 // pred_region
          %386 = dma.done [#allocation9], 12288
        $region72: #{tpu_custom_call.1} parent=55 // pred_fallthru
          _
        %s387 = smul.u32 16, %s28
        %p388 = scmp.lt.s32.totalorder %s387, 31
        %s389 = scalar_select %p388, %s387, 31
        %s390 = smul.addr %s389, 8
        %s391 = scalar_lea.vmem %s0, %s390
        %p392 = pneg %p49
        %p393 = pneg %p46
        %s394 = smul.u32 16, %s28
        %p395 = scmp.lt.s32.totalorder %s394, 31
        %s396 = scalar_select %p395, %s394, 31
        %s397 = smul.addr %s396, 8
        %s398 = scalar_lea.vmem %s1, %s397
        %p399 = pneg %p75
        %p400 = pneg %p72
        %s401 = sand.u32 %s88, 1
        %s402 = scalar_lea.sflag [#allocation3], %s401
        %s403 = sand.u32 %s88, 1
        %s404 = smul.addr %s403, 128
        %s405 = scalar_lea.vmem [#allocation2], %s404
        %p406 = pneg %p101
        %p407 = pneg %p98
        %p408 = pneg %p122
        %p409 = pneg %p119
        %p410 = pneg %p143
        %p411 = pneg %p140
        %p412 = pneg %p164
        %p413 = pneg %p161
        %p414 = pneg %p185
        %p415 = pneg %p182
        %p416 = pneg %p206
        %p417 = pneg %p203
        %p418 = pneg %p227
        %p419 = pneg %p224
        %p420 = pneg %p253
        %p421 = pneg %p250
        %s422 = sand.u32 %s240, 1
        %s423 = scalar_lea.sflag [#allocation4], %s422
        %s424 = sand.u32 %s240, 1
        %s425 = scalar_lea.vmem [#allocation10], %s424
        %s426 = smul.u32 16, %s28
        %p427 = scmp.lt.s32.totalorder %s426, 31
        %s428 = scalar_select %p427, %s426, 31
        %s429 = smul.addr %s428, 8
        %s430 = scalar_lea.vmem %s0, %s429
        %s431 = smul.u32 16, %s28
        %s432 = smul.u32 16, %s28
        %p433 = scmp.lt.s32.totalorder %s432, 31
        %s434 = scalar_select %p433, %s432, 31
        %s435 = smul.addr %s434, 8
        %s436 = scalar_lea.vmem %s1, %s435
        %s437 = smul.u32 16, %s28
        %s438 = smul.u32 16, %s28
        %v439 = vld [vmem:[%s436] sm:$0xff]
        %v440 = vld [vmem:[%s436 + $0x8] sm:$0xff]
        %v441 = vld [vmem:[%s436 + $0x10] sm:$0xff]
        %v442 = vld [vmem:[%s436 + $0x18] sm:$0xff]
        %v443 = vld [vmem:[%s436 + $0x20] sm:$0xff]
        %v444 = vld [vmem:[%s436 + $0x28] sm:$0xff]
        %v445 = vld [vmem:[%s436 + $0x30] sm:$0xff]
        %v446 = vld [vmem:[%s436 + $0x38] sm:$0xff]
        %v447 = vld [vmem:[%s436 + $0x40] sm:$0xff]
        %v448 = vld [vmem:[%s436 + $0x48] sm:$0xff]
        %v449 = vld [vmem:[%s436 + $0x50] sm:$0xff]
        %v450 = vld [vmem:[%s436 + $0x58] sm:$0xff]
        %v451 = vld [vmem:[%s436 + $0x60] sm:$0xff]
        %v452 = vld [vmem:[%s436 + $0x68] sm:$0xff]
        %v453 = vld [vmem:[%s436 + $0x70] sm:$0xff]
        %v454 = vld [vmem:[%s436 + $0x78] sm:$0xff]
        %v455 = vld [vmem:[%s370] sm:$0xff]
        %v456 = vld [vmem:[%s370 + $0x8] sm:$0xff]
        %v457 = vld [vmem:[%s370 + $0x10] sm:$0xff]
        %v458 = vld [vmem:[%s370 + $0x18] sm:$0xff]
        %v459 = vld [vmem:[%s370 + $0x20] sm:$0xff]
        %v460 = vld [vmem:[%s370 + $0x28] sm:$0xff]
        %v461 = vld [vmem:[%s370 + $0x30] sm:$0xff]
        %v462 = vld [vmem:[%s370 + $0x38] sm:$0xff]
        %v463 = vld [vmem:[%s370 + $0x40] sm:$0xff]
        %v464 = vld [vmem:[%s370 + $0x48] sm:$0xff]
        %v465 = vld [vmem:[%s370 + $0x50] sm:$0xff]
        %v466 = vld [vmem:[%s370 + $0x58] sm:$0xff]
        %v467 = vld [vmem:[%s370 + $0x60] sm:$0xff]
        %v468 = vld [vmem:[%s370 + $0x68] sm:$0xff]
        %v469 = vld [vmem:[%s370 + $0x70] sm:$0xff]
        %v470 = vld [vmem:[%s370 + $0x78] sm:$0xff]
        %v471 = vld [vmem:[#allocation5] sm:$0xff]
        %v472 = vld [vmem:[#allocation5 + $0x8] sm:$0xff]
        %v473 = vld [vmem:[#allocation5 + $0x10] sm:$0xff]
        %v474 = vld [vmem:[#allocation5 + $0x18] sm:$0xff]
        %v475 = vld [vmem:[#allocation5 + $0x20] sm:$0xff]
        %v476 = vld [vmem:[#allocation5 + $0x28] sm:$0xff]
        %v477 = vld [vmem:[#allocation5 + $0x30] sm:$0xff]
        %v478 = vld [vmem:[#allocation5 + $0x38] sm:$0xff]
        %v479 = vld [vmem:[#allocation5 + $0x40] sm:$0xff]
        %v480 = vld [vmem:[#allocation5 + $0x48] sm:$0xff]
        %v481 = vld [vmem:[#allocation5 + $0x50] sm:$0xff]
        %v482 = vld [vmem:[#allocation5 + $0x58] sm:$0xff]
        %v483 = vld [vmem:[#allocation5 + $0x60] sm:$0xff]
        %v484 = vld [vmem:[#allocation5 + $0x68] sm:$0xff]
        %v485 = vld [vmem:[#allocation5 + $0x70] sm:$0xff]
        %v486 = vld [vmem:[#allocation5 + $0x78] sm:$0xff]
        %v487 = vld [vmem:[%s4] sm:$0x1]
        %v489 = vlaneseq
        %v490 = vshrl.u32 %v489, 7
        %v491 = vsub.s32 0, %v490
        %v492 = vrot.slane %v487, %v491
        %494 = vmatprep.subr.mxu0 0.0
        %495 = vmatpush1.msra.mxu0 %v471
        %496 = vmatprep.subr.mxu0 0.0
        %497 = vmatpush1.msra.mxu0 %v472
        %498 = vmatprep.subr.mxu0 0.0
        %499 = vmatpush1.msra.mxu0 %v473
        %500 = vmatprep.subr.mxu0 0.0
        %501 = vmatpush1.msra.mxu0 %v474
        %502 = vmatprep.subr.mxu0 0.0
        %503 = vmatpush1.msra.mxu0 %v475
        %504 = vmatprep.subr.mxu0 0.0
        %505 = vmatpush1.msra.mxu0 %v476
        %506 = vmatprep.subr.mxu0 0.0
        %507 = vmatpush1.msra.mxu0 %v477
        %508 = vmatprep.subr.mxu0 0.0
        %509 = vmatpush1.msra.mxu0 %v478
        %510 = vmatprep.subr.mxu0 0.0
        %511 = vmatpush1.msra.mxu0 %v479
        %512 = vmatprep.subr.mxu0 0.0
        %513 = vmatpush1.msra.mxu0 %v480
        %514 = vmatprep.subr.mxu0 0.0
        %515 = vmatpush1.msra.mxu0 %v481
        %516 = vmatprep.subr.mxu0 0.0
        %517 = vmatpush1.msra.mxu0 %v482
        %518 = vmatprep.subr.mxu0 0.0
        %519 = vmatpush1.msra.mxu0 %v483
        %520 = vmatprep.subr.mxu0 0.0
        %521 = vmatpush1.msra.mxu0 %v484
        %522 = vmatprep.subr.mxu0 0.0
        %523 = vmatpush1.msra.mxu0 %v485
        %524 = vmatprep.subr.mxu0 0.0
        %525 = vmatpush1.msra.mxu0 %v486
        %526 = vmatprep.subr.mxu0 0.0
        %527 = vmatpush1.msra.mxu0 0.0
        %528 = vmatprep.subr.mxu0 0.0
        %529 = vmatpush1.msra.mxu0 0.0
        %530 = vmatprep.subr.mxu0 0.0
        %531 = vmatpush1.msra.mxu0 0.0
        %532 = vmatprep.subr.mxu0 0.0
        %533 = vmatpush1.msra.mxu0 0.0
        %534 = vmatprep.subr.mxu0 0.0
        %535 = vmatpush1.msra.mxu0 0.0
        %536 = vmatprep.subr.mxu0 0.0
        %537 = vmatpush1.msra.mxu0 0.0
        %538 = vmatprep.subr.mxu0 0.0
        %539 = vmatpush1.msra.mxu0 0.0
        %540 = vmatprep.subr.mxu0 0.0
        %541 = vmatpush1.msra.mxu0 0.0
        %542 = vmatprep.subr.mxu0 0.0
        %543 = vmatpush1.msra.mxu0 0.0
        %544 = vmatprep.subr.mxu0 0.0
        %545 = vmatpush1.msra.mxu0 0.0
        %546 = vmatprep.subr.mxu0 0.0
        %547 = vmatpush1.msra.mxu0 0.0
        %548 = vmatprep.subr.mxu0 0.0
        %549 = vmatpush1.msra.mxu0 0.0
        %550 = vmatprep.subr.mxu0 0.0
        %551 = vmatpush1.msra.mxu0 0.0
        %552 = vmatprep.subr.mxu0 0.0
        %553 = vmatpush1.msra.mxu0 0.0
        %554 = vmatprep.subr.mxu0 0.0
        %555 = vmatpush1.msra.mxu0 0.0
        %556 = vmatprep.subr.mxu0 0.0
        %557 = vmatpush1.msra.mxu0 0.0
        %558 = vmatprep.mubr.f32.mxu0 0.0
        %559 = vmatmul.mubr.f32.gmra.mrb[0].mxu0 %v439
        %v560 = vpop.f32.mrb[0].mxu0
        %v561 = vadd.f32 %v492, %v560
        %v562 = vpop.f32.mrb[0].mxu0
        %563 = vmatprep.mubr.f32.mxu0 0.0
        %564 = vmatmul.mubr.f32.gmra.mrb[0].mxu0 %v440
        %v565 = vpop.f32.mrb[0].mxu0
        %v566 = vadd.f32 %v492, %v565
        %v567 = vpop.f32.mrb[0].mxu0
        %568 = vmatprep.mubr.f32.mxu0 0.0
        %569 = vmatmul.mubr.f32.gmra.mrb[0].mxu0 %v441
        %v570 = vpop.f32.mrb[0].mxu0
        %v571 = vadd.f32 %v492, %v570
        %v572 = vpop.f32.mrb[0].mxu0
        %573 = vmatprep.mubr.f32.mxu0 0.0
        %574 = vmatmul.mubr.f32.gmra.mrb[0].mxu0 %v442
        %v575 = vpop.f32.mrb[0].mxu0
        %v576 = vadd.f32 %v492, %v575
        %v577 = vpop.f32.mrb[0].mxu0
        %578 = vmatprep.mubr.f32.mxu0 0.0
        %579 = vmatmul.mubr.f32.gmra.mrb[0].mxu0 %v443
        %v580 = vpop.f32.mrb[0].mxu0
        %v581 = vadd.f32 %v492, %v580
        %v582 = vpop.f32.mrb[0].mxu0
        %583 = vmatprep.mubr.f32.mxu0 0.0
        %584 = vmatmul.mubr.f32.gmra.mrb[0].mxu0 %v444
        %v585 = vpop.f32.mrb[0].mxu0
        %v586 = vadd.f32 %v492, %v585
        %v587 = vpop.f32.mrb[0].mxu0
        %588 = vmatprep.mubr.f32.mxu0 0.0
        %589 = vmatmul.mubr.f32.gmra.mrb[0].mxu0 %v445
        %v590 = vpop.f32.mrb[0].mxu0
        %v591 = vadd.f32 %v492, %v590
        %v592 = vpop.f32.mrb[0].mxu0
        %593 = vmatprep.mubr.f32.mxu0 0.0
        %594 = vmatmul.mubr.f32.gmra.mrb[0].mxu0 %v446
        %v595 = vpop.f32.mrb[0].mxu0
        %v596 = vadd.f32 %v492, %v595
        %v597 = vpop.f32.mrb[0].mxu0
        %598 = vmatprep.mubr.f32.mxu0 0.0
        %599 = vmatmul.mubr.f32.gmra.mrb[0].mxu0 %v447
        %v600 = vpop.f32.mrb[0].mxu0
        %v601 = vadd.f32 %v492, %v600
        %v602 = vpop.f32.mrb[0].mxu0
        %603 = vmatprep.mubr.f32.mxu0 0.0
        %604 = vmatmul.mubr.f32.gmra.mrb[0].mxu0 %v448
        %v605 = vpop.f32.mrb[0].mxu0
        %v606 = vadd.f32 %v492, %v605
        %v607 = vpop.f32.mrb[0].mxu0
        %608 = vmatprep.mubr.f32.mxu0 0.0
        %609 = vmatmul.mubr.f32.gmra.mrb[0].mxu0 %v449
        %v610 = vpop.f32.mrb[0].mxu0
        %v611 = vadd.f32 %v492, %v610
        %v612 = vpop.f32.mrb[0].mxu0
        %613 = vmatprep.mubr.f32.mxu0 0.0
        %614 = vmatmul.mubr.f32.gmra.mrb[0].mxu0 %v450
        %v615 = vpop.f32.mrb[0].mxu0
        %v616 = vadd.f32 %v492, %v615
        %v617 = vpop.f32.mrb[0].mxu0
        %618 = vmatprep.mubr.f32.mxu0 0.0
        %619 = vmatmul.mubr.f32.gmra.mrb[0].mxu0 %v451
        %v620 = vpop.f32.mrb[0].mxu0
        %v621 = vadd.f32 %v492, %v620
        %v622 = vpop.f32.mrb[0].mxu0
        %623 = vmatprep.mubr.f32.mxu0 0.0
        %624 = vmatmul.mubr.f32.gmra.mrb[0].mxu0 %v452
        %v625 = vpop.f32.mrb[0].mxu0
        %v626 = vadd.f32 %v492, %v625
        %v627 = vpop.f32.mrb[0].mxu0
        %628 = vmatprep.mubr.f32.mxu0 0.0
        %629 = vmatmul.mubr.f32.gmra.mrb[0].mxu0 %v453
        %v630 = vpop.f32.mrb[0].mxu0
        %v631 = vadd.f32 %v492, %v630
        %v632 = vpop.f32.mrb[0].mxu0
        %633 = vmatprep.mubr.f32.mxu0 0.0
        %634 = vmatmul.mubr.f32.gmra.mrb[0].mxu0 %v454
        %v635 = vpop.f32.mrb[0].mxu0
        %v636 = vadd.f32 %v492, %v635
        %v637 = vpop.f32.mrb[0].mxu0
        %638 = vmatprep.mubr.f32.mxu0 0.0
        %639 = vmatmul.mubr.f32.gmra.mrb[0].mxu0 %v455
        %v640 = vpop.f32.mrb[0].mxu0
        %v641 = vadd.f32 %v492, %v640
        %v642 = vpop.f32.mrb[0].mxu0
        %643 = vmatprep.mubr.f32.mxu0 0.0
        %644 = vmatmul.mubr.f32.gmra.mrb[0].mxu0 %v456
        %v645 = vpop.f32.mrb[0].mxu0
        %v646 = vadd.f32 %v492, %v645
        %v647 = vpop.f32.mrb[0].mxu0
        %648 = vmatprep.mubr.f32.mxu0 0.0
        %649 = vmatmul.mubr.f32.gmra.mrb[0].mxu0 %v457
        %v650 = vpop.f32.mrb[0].mxu0
        %v651 = vadd.f32 %v492, %v650
        %v652 = vpop.f32.mrb[0].mxu0
        %653 = vmatprep.mubr.f32.mxu0 0.0
        %654 = vmatmul.mubr.f32.gmra.mrb[0].mxu0 %v458
        %v655 = vpop.f32.mrb[0].mxu0
        %v656 = vadd.f32 %v492, %v655
        %v657 = vpop.f32.mrb[0].mxu0
        %658 = vmatprep.mubr.f32.mxu0 0.0
        %659 = vmatmul.mubr.f32.gmra.mrb[0].mxu0 %v459
        %v660 = vpop.f32.mrb[0].mxu0
        %v661 = vadd.f32 %v492, %v660
        %v662 = vpop.f32.mrb[0].mxu0
        %663 = vmatprep.mubr.f32.mxu0 0.0
        %664 = vmatmul.mubr.f32.gmra.mrb[0].mxu0 %v460
        %v665 = vpop.f32.mrb[0].mxu0
        %v666 = vadd.f32 %v492, %v665
        %v667 = vpop.f32.mrb[0].mxu0
        %668 = vmatprep.mubr.f32.mxu0 0.0
        %669 = vmatmul.mubr.f32.gmra.mrb[0].mxu0 %v461
        %v670 = vpop.f32.mrb[0].mxu0
        %v671 = vadd.f32 %v492, %v670
        %v672 = vpop.f32.mrb[0].mxu0
        %673 = vmatprep.mubr.f32.mxu0 0.0
        %674 = vmatmul.mubr.f32.gmra.mrb[0].mxu0 %v462
        %v675 = vpop.f32.mrb[0].mxu0
        %v676 = vadd.f32 %v492, %v675
        %v677 = vpop.f32.mrb[0].mxu0
        %678 = vmatprep.mubr.f32.mxu0 0.0
        %679 = vmatmul.mubr.f32.gmra.mrb[0].mxu0 %v463
        %v680 = vpop.f32.mrb[0].mxu0
        %v681 = vadd.f32 %v492, %v680
        %v682 = vpop.f32.mrb[0].mxu0
        %683 = vmatprep.mubr.f32.mxu0 0.0
        %684 = vmatmul.mubr.f32.gmra.mrb[0].mxu0 %v464
        %v685 = vpop.f32.mrb[0].mxu0
        %v686 = vadd.f32 %v492, %v685
        %v687 = vpop.f32.mrb[0].mxu0
        %688 = vmatprep.mubr.f32.mxu0 0.0
        %689 = vmatmul.mubr.f32.gmra.mrb[0].mxu0 %v465
        %v690 = vpop.f32.mrb[0].mxu0
        %v691 = vadd.f32 %v492, %v690
        %v692 = vpop.f32.mrb[0].mxu0
        %693 = vmatprep.mubr.f32.mxu0 0.0
        %694 = vmatmul.mubr.f32.gmra.mrb[0].mxu0 %v466
        %v695 = vpop.f32.mrb[0].mxu0
        %v696 = vadd.f32 %v492, %v695
        %v697 = vpop.f32.mrb[0].mxu0
        %698 = vmatprep.mubr.f32.mxu0 0.0
        %699 = vmatmul.mubr.f32.gmra.mrb[0].mxu0 %v467
        %v700 = vpop.f32.mrb[0].mxu0
        %v701 = vadd.f32 %v492, %v700
        %v702 = vpop.f32.mrb[0].mxu0
        %703 = vmatprep.mubr.f32.mxu0 0.0
        %704 = vmatmul.mubr.f32.gmra.mrb[0].mxu0 %v468
        %v705 = vpop.f32.mrb[0].mxu0
        %v706 = vadd.f32 %v492, %v705
        %v707 = vpop.f32.mrb[0].mxu0
        %708 = vmatprep.mubr.f32.mxu0 0.0
        %709 = vmatmul.mubr.f32.gmra.mrb[0].mxu0 %v469
        %v710 = vpop.f32.mrb[0].mxu0
        %v711 = vadd.f32 %v492, %v710
        %v712 = vpop.f32.mrb[0].mxu0
        %713 = vmatprep.mubr.f32.mxu0 0.0
        %714 = vmatmul.mubr.f32.gmra.mrb[0].mxu0 %v470
        %v715 = vpop.f32.mrb[0].mxu0
        %v716 = vadd.f32 %v492, %v715
        %v717 = vpop.f32.mrb[0].mxu0
        %718 = vdwg.mxu0
        %vm719 = vcmp.gt.f32.partialorder %v561, 0.0
        %vm720 = vcmp.gt.f32.partialorder %v566, 0.0
        %vm721 = vcmp.gt.f32.partialorder %v571, 0.0
        %vm722 = vcmp.gt.f32.partialorder %v576, 0.0
        %vm723 = vcmp.gt.f32.partialorder %v581, 0.0
        %vm724 = vcmp.gt.f32.partialorder %v586, 0.0
        %vm725 = vcmp.gt.f32.partialorder %v591, 0.0
        %vm726 = vcmp.gt.f32.partialorder %v596, 0.0
        %vm727 = vcmp.gt.f32.partialorder %v601, 0.0
        %vm728 = vcmp.gt.f32.partialorder %v606, 0.0
        %vm729 = vcmp.gt.f32.partialorder %v611, 0.0
        %vm730 = vcmp.gt.f32.partialorder %v616, 0.0
        %vm731 = vcmp.gt.f32.partialorder %v621, 0.0
        %vm732 = vcmp.gt.f32.partialorder %v626, 0.0
        %vm733 = vcmp.gt.f32.partialorder %v631, 0.0
        %vm734 = vcmp.gt.f32.partialorder %v636, 0.0
        %vm735 = vcmp.gt.f32.partialorder %v641, 0.0
        %vm736 = vcmp.gt.f32.partialorder %v646, 0.0
        %vm737 = vcmp.gt.f32.partialorder %v651, 0.0
        %vm738 = vcmp.gt.f32.partialorder %v656, 0.0
        %vm739 = vcmp.gt.f32.partialorder %v661, 0.0
        %vm740 = vcmp.gt.f32.partialorder %v666, 0.0
        %vm741 = vcmp.gt.f32.partialorder %v671, 0.0
        %vm742 = vcmp.gt.f32.partialorder %v676, 0.0
        %vm743 = vcmp.gt.f32.partialorder %v681, 0.0
        %vm744 = vcmp.gt.f32.partialorder %v686, 0.0
        %vm745 = vcmp.gt.f32.partialorder %v691, 0.0
        %vm746 = vcmp.gt.f32.partialorder %v696, 0.0
        %vm747 = vcmp.gt.f32.partialorder %v701, 0.0
        %vm748 = vcmp.gt.f32.partialorder %v706, 0.0
        %vm749 = vcmp.gt.f32.partialorder %v711, 0.0
        %vm750 = vcmp.gt.f32.partialorder %v716, 0.0
        %v751 = vmul.f32 %v561, 0.2
        %v752 = vmul.f32 %v566, 0.2
        %v753 = vmul.f32 %v571, 0.2
        %v754 = vmul.f32 %v576, 0.2
        %v755 = vmul.f32 %v581, 0.2
        %v756 = vmul.f32 %v586, 0.2
        %v757 = vmul.f32 %v591, 0.2
        %v758 = vmul.f32 %v596, 0.2
        %v759 = vmul.f32 %v601, 0.2
        %v760 = vmul.f32 %v606, 0.2
        %v761 = vmul.f32 %v611, 0.2
        %v762 = vmul.f32 %v616, 0.2
        %v763 = vmul.f32 %v621, 0.2
        %v764 = vmul.f32 %v626, 0.2
        %v765 = vmul.f32 %v631, 0.2
        %v766 = vmul.f32 %v636, 0.2
        %v767 = vmul.f32 %v641, 0.2
        %v768 = vmul.f32 %v646, 0.2
        %v769 = vmul.f32 %v651, 0.2
        %v770 = vmul.f32 %v656, 0.2
        %v771 = vmul.f32 %v661, 0.2
        %v772 = vmul.f32 %v666, 0.2
        %v773 = vmul.f32 %v671, 0.2
        %v774 = vmul.f32 %v676, 0.2
        %v775 = vmul.f32 %v681, 0.2
        %v776 = vmul.f32 %v686, 0.2
        %v777 = vmul.f32 %v691, 0.2
        %v778 = vmul.f32 %v696, 0.2
        %v779 = vmul.f32 %v701, 0.2
        %v780 = vmul.f32 %v706, 0.2
        %v781 = vmul.f32 %v711, 0.2
        %v782 = vmul.f32 %v716, 0.2
        %v783 = vsel %vm719, %v561, %v751
        %v784 = vsel %vm720, %v566, %v752
        %v785 = vsel %vm721, %v571, %v753
        %v786 = vsel %vm722, %v576, %v754
        %v787 = vsel %vm723, %v581, %v755
        %v788 = vsel %vm724, %v586, %v756
        %v789 = vsel %vm725, %v591, %v757
        %v790 = vsel %vm726, %v596, %v758
        %v791 = vsel %vm727, %v601, %v759
        %v792 = vsel %vm728, %v606, %v760
        %v793 = vsel %vm729, %v611, %v761
        %v794 = vsel %vm730, %v616, %v762
        %v795 = vsel %vm731, %v621, %v763
        %v796 = vsel %vm732, %v626, %v764
        %v797 = vsel %vm733, %v631, %v765
        %v798 = vsel %vm734, %v636, %v766
        %v799 = vsel %vm735, %v641, %v767
        %v800 = vsel %vm736, %v646, %v768
        %v801 = vsel %vm737, %v651, %v769
        %v802 = vsel %vm738, %v656, %v770
        %v803 = vsel %vm739, %v661, %v771
        %v804 = vsel %vm740, %v666, %v772
        %v805 = vsel %vm741, %v671, %v773
        %v806 = vsel %vm742, %v676, %v774
        %v807 = vsel %vm743, %v681, %v775
        %v808 = vsel %vm744, %v686, %v776
        %v809 = vsel %vm745, %v691, %v777
        %v810 = vsel %vm746, %v696, %v778
        %v811 = vsel %vm747, %v701, %v779
        %v812 = vsel %vm748, %v706, %v780
        %v813 = vsel %vm749, %v711, %v781
        %v814 = vsel %vm750, %v716, %v782
        %v815 = vld [vmem:[%s430] sm:$0xff]
        %v816 = vld [vmem:[%s430 + $0x8] sm:$0xff]
        %v817 = vld [vmem:[%s430 + $0x10] sm:$0xff]
        %v818 = vld [vmem:[%s430 + $0x18] sm:$0xff]
        %v819 = vld [vmem:[%s430 + $0x20] sm:$0xff]
        %v820 = vld [vmem:[%s430 + $0x28] sm:$0xff]
        %v821 = vld [vmem:[%s430 + $0x30] sm:$0xff]
        %v822 = vld [vmem:[%s430 + $0x38] sm:$0xff]
        %v823 = vld [vmem:[%s430 + $0x40] sm:$0xff]
        %v824 = vld [vmem:[%s430 + $0x48] sm:$0xff]
        %v825 = vld [vmem:[%s430 + $0x50] sm:$0xff]
        %v826 = vld [vmem:[%s430 + $0x58] sm:$0xff]
        %v827 = vld [vmem:[%s430 + $0x60] sm:$0xff]
        %v828 = vld [vmem:[%s430 + $0x68] sm:$0xff]
        %v829 = vld [vmem:[%s430 + $0x70] sm:$0xff]
        %v830 = vld [vmem:[%s430 + $0x78] sm:$0xff]
        %v831 = vsub.f32 %v799, %v783
        %v832 = vsub.f32 %v800, %v784
        %v833 = vsub.f32 %v801, %v785
        %v834 = vsub.f32 %v802, %v786
        %v835 = vsub.f32 %v803, %v787
        %v836 = vsub.f32 %v804, %v788
        %v837 = vsub.f32 %v805, %v789
        %v838 = vsub.f32 %v806, %v790
        %v839 = vsub.f32 %v807, %v791
        %v840 = vsub.f32 %v808, %v792
        %v841 = vsub.f32 %v809, %v793
        %v842 = vsub.f32 %v810, %v794
        %v843 = vsub.f32 %v811, %v795
        %v844 = vsub.f32 %v812, %v796
        %v845 = vsub.f32 %v813, %v797
        %v846 = vsub.f32 %v814, %v798
        %848 = vset.pattern.permute.xlu0 0
        %849 = vperm.xlu0 %848, %v815
        %v850 = vpop.permute.xlu0 %849
        %853 = vset.pattern.permute.xlu0 0
        %854 = vperm.xlu0 %853, %v816
        %v855 = vpop.permute.xlu0 %854
        %858 = vset.pattern.permute.xlu0 0
        %859 = vperm.xlu0 %858, %v817
        %v860 = vpop.permute.xlu0 %859
        %863 = vset.pattern.permute.xlu0 0
        %864 = vperm.xlu0 %863, %v818
        %v865 = vpop.permute.xlu0 %864
        %868 = vset.pattern.permute.xlu0 0
        %869 = vperm.xlu0 %868, %v819
        %v870 = vpop.permute.xlu0 %869
        %873 = vset.pattern.permute.xlu0 0
        %874 = vperm.xlu0 %873, %v820
        %v875 = vpop.permute.xlu0 %874
        %878 = vset.pattern.permute.xlu0 0
        %879 = vperm.xlu0 %878, %v821
        %v880 = vpop.permute.xlu0 %879
        %883 = vset.pattern.permute.xlu0 0
        %884 = vperm.xlu0 %883, %v822
        %v885 = vpop.permute.xlu0 %884
        %888 = vset.pattern.permute.xlu0 0
        %889 = vperm.xlu0 %888, %v823
        %v890 = vpop.permute.xlu0 %889
        %893 = vset.pattern.permute.xlu0 0
        %894 = vperm.xlu0 %893, %v824
        %v895 = vpop.permute.xlu0 %894
        %898 = vset.pattern.permute.xlu0 0
        %899 = vperm.xlu0 %898, %v825
        %v900 = vpop.permute.xlu0 %899
        %903 = vset.pattern.permute.xlu0 0
        %904 = vperm.xlu0 %903, %v826
        %v905 = vpop.permute.xlu0 %904
        %908 = vset.pattern.permute.xlu0 0
        %909 = vperm.xlu0 %908, %v827
        %v910 = vpop.permute.xlu0 %909
        %913 = vset.pattern.permute.xlu0 0
        %914 = vperm.xlu0 %913, %v828
        %v915 = vpop.permute.xlu0 %914
        %918 = vset.pattern.permute.xlu0 0
        %919 = vperm.xlu0 %918, %v829
        %v920 = vpop.permute.xlu0 %919
        %923 = vset.pattern.permute.xlu0 0
        %924 = vperm.xlu0 %923, %v830
        %v925 = vpop.permute.xlu0 %924
        %v927 = vmul.f32 %v850, %v831
        %v928 = vmul.f32 %v855, %v832
        %v929 = vmul.f32 %v860, %v833
        %v930 = vmul.f32 %v865, %v834
        %v931 = vmul.f32 %v870, %v835
        %v932 = vmul.f32 %v875, %v836
        %v933 = vmul.f32 %v880, %v837
        %v934 = vmul.f32 %v885, %v838
        %v935 = vmul.f32 %v890, %v839
        %v936 = vmul.f32 %v895, %v840
        %v937 = vmul.f32 %v900, %v841
        %v938 = vmul.f32 %v905, %v842
        %v939 = vmul.f32 %v910, %v843
        %v940 = vmul.f32 %v915, %v844
        %v941 = vmul.f32 %v920, %v845
        %v942 = vmul.f32 %v925, %v846
        %v943 = vadd.f32 %v783, %v927
        %v944 = vadd.f32 %v784, %v928
        %v945 = vadd.f32 %v785, %v929
        %v946 = vadd.f32 %v786, %v930
        %v947 = vadd.f32 %v787, %v931
        %v948 = vadd.f32 %v788, %v932
        %v949 = vadd.f32 %v789, %v933
        %v950 = vadd.f32 %v790, %v934
        %v951 = vadd.f32 %v791, %v935
        %v952 = vadd.f32 %v792, %v936
        %v953 = vadd.f32 %v793, %v937
        %v954 = vadd.f32 %v794, %v938
        %v955 = vadd.f32 %v795, %v939
        %v956 = vadd.f32 %v796, %v940
        %v957 = vadd.f32 %v797, %v941
        %v958 = vadd.f32 %v798, %v942
        %v959 = vmul.f32 %v831, 0.0001
        %v960 = vmul.f32 %v832, 0.0001
        %v961 = vmul.f32 %v833, 0.0001
        %v962 = vmul.f32 %v834, 0.0001
        %v963 = vmul.f32 %v835, 0.0001
        %v964 = vmul.f32 %v836, 0.0001
        %v965 = vmul.f32 %v837, 0.0001
        %v966 = vmul.f32 %v838, 0.0001
        %v967 = vmul.f32 %v839, 0.0001
        %v968 = vmul.f32 %v840, 0.0001
        %v969 = vmul.f32 %v841, 0.0001
        %v970 = vmul.f32 %v842, 0.0001
        %v971 = vmul.f32 %v843, 0.0001
        %v972 = vmul.f32 %v844, 0.0001
        %v973 = vmul.f32 %v845, 0.0001
        %v974 = vmul.f32 %v846, 0.0001
        %v975 = vadd.f32 %v943, %v959
        %v976 = vadd.f32 %v944, %v960
        %v977 = vadd.f32 %v945, %v961
        %v978 = vadd.f32 %v946, %v962
        %v979 = vadd.f32 %v947, %v963
        %v980 = vadd.f32 %v948, %v964
        %v981 = vadd.f32 %v949, %v965
        %v982 = vadd.f32 %v950, %v966
        %v983 = vadd.f32 %v951, %v967
        %v984 = vadd.f32 %v952, %v968
        %v985 = vadd.f32 %v953, %v969
        %v986 = vadd.f32 %v954, %v970
        %v987 = vadd.f32 %v955, %v971
        %v988 = vadd.f32 %v956, %v972
        %v989 = vadd.f32 %v957, %v973
        %v990 = vadd.f32 %v958, %v974
        %v991 = vld [vmem:[#allocation7] sm:$0xff]
        %v992 = vld [vmem:[#allocation7 + $0x8] sm:$0xff]
        %v993 = vld [vmem:[#allocation7 + $0x10] sm:$0xff]
        %v994 = vld [vmem:[#allocation7 + $0x18] sm:$0xff]
        %v995 = vld [vmem:[#allocation7 + $0x20] sm:$0xff]
        %v996 = vld [vmem:[#allocation7 + $0x28] sm:$0xff]
        %v997 = vld [vmem:[#allocation7 + $0x30] sm:$0xff]
        %v998 = vld [vmem:[#allocation7 + $0x38] sm:$0xff]
        %v999 = vld [vmem:[#allocation7 + $0x40] sm:$0xff]
        %v1000 = vld [vmem:[#allocation7 + $0x48] sm:$0xff]
        %v1001 = vld [vmem:[#allocation7 + $0x50] sm:$0xff]
        %v1002 = vld [vmem:[#allocation7 + $0x58] sm:$0xff]
        %v1003 = vld [vmem:[#allocation7 + $0x60] sm:$0xff]
        %v1004 = vld [vmem:[#allocation7 + $0x68] sm:$0xff]
        %v1005 = vld [vmem:[#allocation7 + $0x70] sm:$0xff]
        %v1006 = vld [vmem:[#allocation7 + $0x78] sm:$0xff]
        %v1007 = vld [vmem:[#allocation7 + $0x80] sm:$0xff]
        %v1008 = vld [vmem:[#allocation7 + $0x88] sm:$0xff]
        %v1009 = vld [vmem:[#allocation7 + $0x90] sm:$0xff]
        %v1010 = vld [vmem:[#allocation7 + $0x98] sm:$0xff]
        %v1011 = vld [vmem:[#allocation7 + $0xa0] sm:$0xff]
        %v1012 = vld [vmem:[#allocation7 + $0xa8] sm:$0xff]
        %v1013 = vld [vmem:[#allocation7 + $0xb0] sm:$0xff]
        %v1014 = vld [vmem:[#allocation7 + $0xb8] sm:$0xff]
        %v1015 = vld [vmem:[#allocation7 + $0xc0] sm:$0xff]
        %v1016 = vld [vmem:[#allocation7 + $0xc8] sm:$0xff]
        %v1017 = vld [vmem:[#allocation7 + $0xd0] sm:$0xff]
        %v1018 = vld [vmem:[#allocation7 + $0xd8] sm:$0xff]
        %v1019 = vld [vmem:[#allocation7 + $0xe0] sm:$0xff]
        %v1020 = vld [vmem:[#allocation7 + $0xe8] sm:$0xff]
        %v1021 = vld [vmem:[#allocation7 + $0xf0] sm:$0xff]
        %v1022 = vld [vmem:[#allocation7 + $0xf8] sm:$0xff]
        %v1023 = vld [vmem:[#allocation7 + $0x100] sm:$0xff]
        %v1024 = vld [vmem:[#allocation7 + $0x108] sm:$0xff]
        %v1025 = vld [vmem:[#allocation7 + $0x110] sm:$0xff]
        %v1026 = vld [vmem:[#allocation7 + $0x118] sm:$0xff]
        %v1027 = vld [vmem:[#allocation7 + $0x120] sm:$0xff]
        %v1028 = vld [vmem:[#allocation7 + $0x128] sm:$0xff]
        %v1029 = vld [vmem:[#allocation7 + $0x130] sm:$0xff]
        %v1030 = vld [vmem:[#allocation7 + $0x138] sm:$0xff]
        %v1031 = vld [vmem:[#allocation7 + $0x140] sm:$0xff]
        %v1032 = vld [vmem:[#allocation7 + $0x148] sm:$0xff]
        %v1033 = vld [vmem:[#allocation7 + $0x150] sm:$0xff]
        %v1034 = vld [vmem:[#allocation7 + $0x158] sm:$0xff]
        %v1035 = vld [vmem:[#allocation7 + $0x160] sm:$0xff]
        %v1036 = vld [vmem:[#allocation7 + $0x168] sm:$0xff]
        %v1037 = vld [vmem:[#allocation7 + $0x170] sm:$0xff]
        %v1038 = vld [vmem:[#allocation7 + $0x178] sm:$0xff]
        %v1039 = vld [vmem:[#allocation7 + $0x180] sm:$0xff]
        %v1040 = vld [vmem:[#allocation7 + $0x188] sm:$0xff]
        %v1041 = vld [vmem:[#allocation7 + $0x190] sm:$0xff]
        %v1042 = vld [vmem:[#allocation7 + $0x198] sm:$0xff]
        %v1043 = vld [vmem:[#allocation7 + $0x1a0] sm:$0xff]
        %v1044 = vld [vmem:[#allocation7 + $0x1a8] sm:$0xff]
        %v1045 = vld [vmem:[#allocation7 + $0x1b0] sm:$0xff]
        %v1046 = vld [vmem:[#allocation7 + $0x1b8] sm:$0xff]
        %v1047 = vld [vmem:[#allocation7 + $0x1c0] sm:$0xff]
        %v1048 = vld [vmem:[#allocation7 + $0x1c8] sm:$0xff]
        %v1049 = vld [vmem:[#allocation7 + $0x1d0] sm:$0xff]
        %v1050 = vld [vmem:[#allocation7 + $0x1d8] sm:$0xff]
        %v1051 = vld [vmem:[#allocation7 + $0x1e0] sm:$0xff]
        %v1052 = vld [vmem:[#allocation7 + $0x1e8] sm:$0xff]
        %v1053 = vld [vmem:[#allocation7 + $0x1f0] sm:$0xff]
        %v1054 = vld [vmem:[#allocation7 + $0x1f8] sm:$0xff]
        %v1055 = vld [vmem:[#allocation7 + $0x200] sm:$0xff]
        %v1056 = vld [vmem:[#allocation7 + $0x208] sm:$0xff]
        %v1057 = vld [vmem:[#allocation7 + $0x210] sm:$0xff]
        %v1058 = vld [vmem:[#allocation7 + $0x218] sm:$0xff]
        %v1059 = vld [vmem:[#allocation7 + $0x220] sm:$0xff]
        %v1060 = vld [vmem:[#allocation7 + $0x228] sm:$0xff]
        %v1061 = vld [vmem:[#allocation7 + $0x230] sm:$0xff]
        %v1062 = vld [vmem:[#allocation7 + $0x238] sm:$0xff]
        %v1063 = vld [vmem:[#allocation7 + $0x240] sm:$0xff]
        %v1064 = vld [vmem:[#allocation7 + $0x248] sm:$0xff]
        %v1065 = vld [vmem:[#allocation7 + $0x250] sm:$0xff]
        %v1066 = vld [vmem:[#allocation7 + $0x258] sm:$0xff]
        %v1067 = vld [vmem:[#allocation7 + $0x260] sm:$0xff]
        %v1068 = vld [vmem:[#allocation7 + $0x268] sm:$0xff]
        %v1069 = vld [vmem:[#allocation7 + $0x270] sm:$0xff]
        %v1070 = vld [vmem:[#allocation7 + $0x278] sm:$0xff]
        %v1071 = vld [vmem:[#allocation7 + $0x280] sm:$0xff]
        %v1072 = vld [vmem:[#allocation7 + $0x288] sm:$0xff]
        %v1073 = vld [vmem:[#allocation7 + $0x290] sm:$0xff]
        %v1074 = vld [vmem:[#allocation7 + $0x298] sm:$0xff]
        %v1075 = vld [vmem:[#allocation7 + $0x2a0] sm:$0xff]
        %v1076 = vld [vmem:[#allocation7 + $0x2a8] sm:$0xff]
        %v1077 = vld [vmem:[#allocation7 + $0x2b0] sm:$0xff]
        %v1078 = vld [vmem:[#allocation7 + $0x2b8] sm:$0xff]
        %v1079 = vld [vmem:[#allocation7 + $0x2c0] sm:$0xff]
        %v1080 = vld [vmem:[#allocation7 + $0x2c8] sm:$0xff]
        %v1081 = vld [vmem:[#allocation7 + $0x2d0] sm:$0xff]
        %v1082 = vld [vmem:[#allocation7 + $0x2d8] sm:$0xff]
        %v1083 = vld [vmem:[#allocation7 + $0x2e0] sm:$0xff]
        %v1084 = vld [vmem:[#allocation7 + $0x2e8] sm:$0xff]
        %v1085 = vld [vmem:[#allocation7 + $0x2f0] sm:$0xff]
        %v1086 = vld [vmem:[#allocation7 + $0x2f8] sm:$0xff]
        %v1087 = vld [vmem:[%s6] sm:$0x3f]
        %v1089 = vlaneseq
        %v1090 = vshrl.u32 %v1089, 7
        %v1091 = vsub.s32 0, %v1090
        %v1092 = vrot.slane %v1087, %v1091
        %v1093 = vlaneseq
        %v1094 = vshrl.u32 %v1093, 7
        %v1095 = vsub.s32 1, %v1094
        %v1096 = vrot.slane %v1087, %v1095
        %v1097 = vlaneseq
        %v1098 = vshrl.u32 %v1097, 7
        %v1099 = vsub.s32 2, %v1098
        %v1100 = vrot.slane %v1087, %v1099
        %v1101 = vlaneseq
        %v1102 = vshrl.u32 %v1101, 7
        %v1103 = vsub.s32 3, %v1102
        %v1104 = vrot.slane %v1087, %v1103
        %v1105 = vlaneseq
        %v1106 = vshrl.u32 %v1105, 7
        %v1107 = vsub.s32 4, %v1106
        %v1108 = vrot.slane %v1087, %v1107
        %v1109 = vlaneseq
        %v1110 = vshrl.u32 %v1109, 7
        %v1111 = vsub.s32 5, %v1110
        %v1112 = vrot.slane %v1087, %v1111
        %1119 = vmatprep.subr.mxu0 %v992
        %1120 = vmatpush1.msra.mxu0 %v991
        %1121 = vmatprep.subr.mxu0 %v998
        %1122 = vmatpush1.msra.mxu0 %v997
        %1123 = vmatprep.subr.mxu0 %v1004
        %1124 = vmatpush1.msra.mxu0 %v1003
        %1125 = vmatprep.subr.mxu0 %v1010
        %1126 = vmatpush1.msra.mxu0 %v1009
        %1127 = vmatprep.subr.mxu0 %v1016
        %1128 = vmatpush1.msra.mxu0 %v1015
        %1129 = vmatprep.subr.mxu0 %v1022
        %1130 = vmatpush1.msra.mxu0 %v1021
        %1131 = vmatprep.subr.mxu0 %v1028
        %1132 = vmatpush1.msra.mxu0 %v1027
        %1133 = vmatprep.subr.mxu0 %v1034
        %1134 = vmatpush1.msra.mxu0 %v1033
        %1135 = vmatprep.subr.mxu0 %v1040
        %1136 = vmatpush1.msra.mxu0 %v1039
        %1137 = vmatprep.subr.mxu0 %v1046
        %1138 = vmatpush1.msra.mxu0 %v1045
        %1139 = vmatprep.subr.mxu0 %v1052
        %1140 = vmatpush1.msra.mxu0 %v1051
        %1141 = vmatprep.subr.mxu0 %v1058
        %1142 = vmatpush1.msra.mxu0 %v1057
        %1143 = vmatprep.subr.mxu0 %v1064
        %1144 = vmatpush1.msra.mxu0 %v1063
        %1145 = vmatprep.subr.mxu0 %v1070
        %1146 = vmatpush1.msra.mxu0 %v1069
        %1147 = vmatprep.subr.mxu0 %v1076
        %1148 = vmatpush1.msra.mxu0 %v1075
        %1149 = vmatprep.subr.mxu0 %v1082
        %1150 = vmatpush1.msra.mxu0 %v1081
        %1151 = vmatprep.subr.mxu0 0.0
        %1152 = vmatpush1.msra.mxu0 0.0
        %1153 = vmatprep.subr.mxu0 0.0
        %1154 = vmatpush1.msra.mxu0 0.0
        %1155 = vmatprep.subr.mxu0 0.0
        %1156 = vmatpush1.msra.mxu0 0.0
        %1157 = vmatprep.subr.mxu0 0.0
        %1158 = vmatpush1.msra.mxu0 0.0
        %1159 = vmatprep.subr.mxu0 0.0
        %1160 = vmatpush1.msra.mxu0 0.0
        %1161 = vmatprep.subr.mxu0 0.0
        %1162 = vmatpush1.msra.mxu0 0.0
        %1163 = vmatprep.subr.mxu0 0.0
        %1164 = vmatpush1.msra.mxu0 0.0
        %1165 = vmatprep.subr.mxu0 0.0
        %1166 = vmatpush1.msra.mxu0 0.0
        %1167 = vmatprep.subr.mxu0 0.0
        %1168 = vmatpush1.msra.mxu0 0.0
        %1169 = vmatprep.subr.mxu0 0.0
        %1170 = vmatpush1.msra.mxu0 0.0
        %1171 = vmatprep.subr.mxu0 0.0
        %1172 = vmatpush1.msra.mxu0 0.0
        %1173 = vmatprep.subr.mxu0 0.0
        %1174 = vmatpush1.msra.mxu0 0.0
        %1175 = vmatprep.subr.mxu0 0.0
        %1176 = vmatpush1.msra.mxu0 0.0
        %1177 = vmatprep.subr.mxu0 0.0
        %1178 = vmatpush1.msra.mxu0 0.0
        %1179 = vmatprep.subr.mxu0 0.0
        %1180 = vmatpush1.msra.mxu0 0.0
        %1181 = vmatprep.subr.mxu0 0.0
        %1182 = vmatpush1.msra.mxu0 0.0
        %1183 = vmatprep.mubr.f32.mxu0 0.0
        %1184 = vmatmul.mubr.f32.gmra.mrb[0].mxu0 %v943
        %v1185 = vpop.f32.mrb[0].mxu0
        %v1186 = vadd.f32 %v1092, %v1185
        %v1187 = vpop.f32.mrb[0].mxu0
        %v1188 = vadd.f32 %v1096, %v1187
        %1189 = vmatprep.mubr.f32.mxu0 0.0
        %1190 = vmatmul.mubr.f32.gmra.mrb[0].mxu0 %v944
        %v1191 = vpop.f32.mrb[0].mxu0
        %v1192 = vadd.f32 %v1092, %v1191
        %v1193 = vpop.f32.mrb[0].mxu0
        %v1194 = vadd.f32 %v1096, %v1193
        %1195 = vmatprep.mubr.f32.mxu0 0.0
        %1196 = vmatmul.mubr.f32.gmra.mrb[0].mxu0 %v945
        %v1197 = vpop.f32.mrb[0].mxu0
        %v1198 = vadd.f32 %v1092, %v1197
        %v1199 = vpop.f32.mrb[0].mxu0
        %v1200 = vadd.f32 %v1096, %v1199
        %1201 = vmatprep.mubr.f32.mxu0 0.0
        %1202 = vmatmul.mubr.f32.gmra.mrb[0].mxu0 %v946
        %v1203 = vpop.f32.mrb[0].mxu0
        %v1204 = vadd.f32 %v1092, %v1203
        %v1205 = vpop.f32.mrb[0].mxu0
        %v1206 = vadd.f32 %v1096, %v1205
        %1207 = vmatprep.mubr.f32.mxu0 0.0
        %1208 = vmatmul.mubr.f32.gmra.mrb[0].mxu0 %v947
        %v1209 = vpop.f32.mrb[0].mxu0
        %v1210 = vadd.f32 %v1092, %v1209
        %v1211 = vpop.f32.mrb[0].mxu0
        %v1212 = vadd.f32 %v1096, %v1211
        %1213 = vmatprep.mubr.f32.mxu0 0.0
        %1214 = vmatmul.mubr.f32.gmra.mrb[0].mxu0 %v948
        %v1215 = vpop.f32.mrb[0].mxu0
        %v1216 = vadd.f32 %v1092, %v1215
        %v1217 = vpop.f32.mrb[0].mxu0
        %v1218 = vadd.f32 %v1096, %v1217
        %1219 = vmatprep.mubr.f32.mxu0 0.0
        %1220 = vmatmul.mubr.f32.gmra.mrb[0].mxu0 %v949
        %v1221 = vpop.f32.mrb[0].mxu0
        %v1222 = vadd.f32 %v1092, %v1221
        %v1223 = vpop.f32.mrb[0].mxu0
        %v1224 = vadd.f32 %v1096, %v1223
        %1225 = vmatprep.mubr.f32.mxu0 0.0
        %1226 = vmatmul.mubr.f32.gmra.mrb[0].mxu0 %v950
        %v1227 = vpop.f32.mrb[0].mxu0
        %v1228 = vadd.f32 %v1092, %v1227
        %v1229 = vpop.f32.mrb[0].mxu0
        %v1230 = vadd.f32 %v1096, %v1229
        %1231 = vmatprep.mubr.f32.mxu0 0.0
        %1232 = vmatmul.mubr.f32.gmra.mrb[0].mxu0 %v951
        %v1233 = vpop.f32.mrb[0].mxu0
        %v1234 = vadd.f32 %v1092, %v1233
        %v1235 = vpop.f32.mrb[0].mxu0
        %v1236 = vadd.f32 %v1096, %v1235
        %1237 = vmatprep.mubr.f32.mxu0 0.0
        %1238 = vmatmul.mubr.f32.gmra.mrb[0].mxu0 %v952
        %v1239 = vpop.f32.mrb[0].mxu0
        %v1240 = vadd.f32 %v1092, %v1239
        %v1241 = vpop.f32.mrb[0].mxu0
        %v1242 = vadd.f32 %v1096, %v1241
        %1243 = vmatprep.mubr.f32.mxu0 0.0
        %1244 = vmatmul.mubr.f32.gmra.mrb[0].mxu0 %v953
        %v1245 = vpop.f32.mrb[0].mxu0
        %v1246 = vadd.f32 %v1092, %v1245
        %v1247 = vpop.f32.mrb[0].mxu0
        %v1248 = vadd.f32 %v1096, %v1247
        %1249 = vmatprep.mubr.f32.mxu0 0.0
        %1250 = vmatmul.mubr.f32.gmra.mrb[0].mxu0 %v954
        %v1251 = vpop.f32.mrb[0].mxu0
        %v1252 = vadd.f32 %v1092, %v1251
        %v1253 = vpop.f32.mrb[0].mxu0
        %v1254 = vadd.f32 %v1096, %v1253
        %1255 = vmatprep.mubr.f32.mxu0 0.0
        %1256 = vmatmul.mubr.f32.gmra.mrb[0].mxu0 %v955
        %v1257 = vpop.f32.mrb[0].mxu0
        %v1258 = vadd.f32 %v1092, %v1257
        %v1259 = vpop.f32.mrb[0].mxu0
        %v1260 = vadd.f32 %v1096, %v1259
        %1261 = vmatprep.mubr.f32.mxu0 0.0
        %1262 = vmatmul.mubr.f32.gmra.mrb[0].mxu0 %v956
        %v1263 = vpop.f32.mrb[0].mxu0
        %v1264 = vadd.f32 %v1092, %v1263
        %v1265 = vpop.f32.mrb[0].mxu0
        %v1266 = vadd.f32 %v1096, %v1265
        %1267 = vmatprep.mubr.f32.mxu0 0.0
        %1268 = vmatmul.mubr.f32.gmra.mrb[0].mxu0 %v957
        %v1269 = vpop.f32.mrb[0].mxu0
        %v1270 = vadd.f32 %v1092, %v1269
        %v1271 = vpop.f32.mrb[0].mxu0
        %v1272 = vadd.f32 %v1096, %v1271
        %1273 = vmatprep.mubr.f32.mxu0 0.0
        %1274 = vmatmul.mubr.f32.gmra.mrb[0].mxu0 %v958
        %v1275 = vpop.f32.mrb[0].mxu0
        %v1276 = vadd.f32 %v1092, %v1275
        %v1277 = vpop.f32.mrb[0].mxu0
        %v1278 = vadd.f32 %v1096, %v1277
        %1279 = vmatprep.mubr.f32.mxu0 0.0
        %1280 = vmatmul.mubr.f32.gmra.mrb[0].mxu0 %v975
        %v1281 = vpop.f32.mrb[0].mxu0
        %v1282 = vadd.f32 %v1092, %v1281
        %v1283 = vpop.f32.mrb[0].mxu0
        %v1284 = vadd.f32 %v1096, %v1283
        %1285 = vmatprep.mubr.f32.mxu0 0.0
        %1286 = vmatmul.mubr.f32.gmra.mrb[0].mxu0 %v976
        %v1287 = vpop.f32.mrb[0].mxu0
        %v1288 = vadd.f32 %v1092, %v1287
        %v1289 = vpop.f32.mrb[0].mxu0
        %v1290 = vadd.f32 %v1096, %v1289
        %1291 = vmatprep.mubr.f32.mxu0 0.0
        %1292 = vmatmul.mubr.f32.gmra.mrb[0].mxu0 %v977
        %v1293 = vpop.f32.mrb[0].mxu0
        %v1294 = vadd.f32 %v1092, %v1293
        %v1295 = vpop.f32.mrb[0].mxu0
        %v1296 = vadd.f32 %v1096, %v1295
        %1297 = vmatprep.mubr.f32.mxu0 0.0
        %1298 = vmatmul.mubr.f32.gmra.mrb[0].mxu0 %v978
        %v1299 = vpop.f32.mrb[0].mxu0
        %v1300 = vadd.f32 %v1092, %v1299
        %v1301 = vpop.f32.mrb[0].mxu0
        %v1302 = vadd.f32 %v1096, %v1301
        %1303 = vmatprep.mubr.f32.mxu0 0.0
        %1304 = vmatmul.mubr.f32.gmra.mrb[0].mxu0 %v979
        %v1305 = vpop.f32.mrb[0].mxu0
        %v1306 = vadd.f32 %v1092, %v1305
        %v1307 = vpop.f32.mrb[0].mxu0
        %v1308 = vadd.f32 %v1096, %v1307
        %1309 = vmatprep.mubr.f32.mxu0 0.0
        %1310 = vmatmul.mubr.f32.gmra.mrb[0].mxu0 %v980
        %v1311 = vpop.f32.mrb[0].mxu0
        %v1312 = vadd.f32 %v1092, %v1311
        %v1313 = vpop.f32.mrb[0].mxu0
        %v1314 = vadd.f32 %v1096, %v1313
        %1315 = vmatprep.mubr.f32.mxu0 0.0
        %1316 = vmatmul.mubr.f32.gmra.mrb[0].mxu0 %v981
        %v1317 = vpop.f32.mrb[0].mxu0
        %v1318 = vadd.f32 %v1092, %v1317
        %v1319 = vpop.f32.mrb[0].mxu0
        %v1320 = vadd.f32 %v1096, %v1319
        %1321 = vmatprep.mubr.f32.mxu0 0.0
        %1322 = vmatmul.mubr.f32.gmra.mrb[0].mxu0 %v982
        %v1323 = vpop.f32.mrb[0].mxu0
        %v1324 = vadd.f32 %v1092, %v1323
        %v1325 = vpop.f32.mrb[0].mxu0
        %v1326 = vadd.f32 %v1096, %v1325
        %1327 = vmatprep.mubr.f32.mxu0 0.0
        %1328 = vmatmul.mubr.f32.gmra.mrb[0].mxu0 %v983
        %v1329 = vpop.f32.mrb[0].mxu0
        %v1330 = vadd.f32 %v1092, %v1329
        %v1331 = vpop.f32.mrb[0].mxu0
        %v1332 = vadd.f32 %v1096, %v1331
        %1333 = vmatprep.mubr.f32.mxu0 0.0
        %1334 = vmatmul.mubr.f32.gmra.mrb[0].mxu0 %v984
        %v1335 = vpop.f32.mrb[0].mxu0
        %v1336 = vadd.f32 %v1092, %v1335
        %v1337 = vpop.f32.mrb[0].mxu0
        %v1338 = vadd.f32 %v1096, %v1337
        %1339 = vmatprep.mubr.f32.mxu0 0.0
        %1340 = vmatmul.mubr.f32.gmra.mrb[0].mxu0 %v985
        %v1341 = vpop.f32.mrb[0].mxu0
        %v1342 = vadd.f32 %v1092, %v1341
        %v1343 = vpop.f32.mrb[0].mxu0
        %v1344 = vadd.f32 %v1096, %v1343
        %1345 = vmatprep.mubr.f32.mxu0 0.0
        %1346 = vmatmul.mubr.f32.gmra.mrb[0].mxu0 %v986
        %v1347 = vpop.f32.mrb[0].mxu0
        %v1348 = vadd.f32 %v1092, %v1347
        %v1349 = vpop.f32.mrb[0].mxu0
        %v1350 = vadd.f32 %v1096, %v1349
        %1351 = vmatprep.mubr.f32.mxu0 0.0
        %1352 = vmatmul.mubr.f32.gmra.mrb[0].mxu0 %v987
        %v1353 = vpop.f32.mrb[0].mxu0
        %v1354 = vadd.f32 %v1092, %v1353
        %v1355 = vpop.f32.mrb[0].mxu0
        %v1356 = vadd.f32 %v1096, %v1355
        %1357 = vmatprep.mubr.f32.mxu0 0.0
        %1358 = vmatmul.mubr.f32.gmra.mrb[0].mxu0 %v988
        %v1359 = vpop.f32.mrb[0].mxu0
        %v1360 = vadd.f32 %v1092, %v1359
        %v1361 = vpop.f32.mrb[0].mxu0
        %v1362 = vadd.f32 %v1096, %v1361
        %1363 = vmatprep.mubr.f32.mxu0 0.0
        %1364 = vmatmul.mubr.f32.gmra.mrb[0].mxu0 %v989
        %v1365 = vpop.f32.mrb[0].mxu0
        %v1366 = vadd.f32 %v1092, %v1365
        %v1367 = vpop.f32.mrb[0].mxu0
        %v1368 = vadd.f32 %v1096, %v1367
        %1369 = vmatprep.mubr.f32.mxu0 0.0
        %1370 = vmatmul.mubr.f32.gmra.mrb[0].mxu0 %v990
        %v1371 = vpop.f32.mrb[0].mxu0
        %v1372 = vadd.f32 %v1092, %v1371
        %v1373 = vpop.f32.mrb[0].mxu0
        %v1374 = vadd.f32 %v1096, %v1373
        %1375 = vdwg.mxu0
        %1376 = vmatprep.subr.mxu0 %v994
        %1377 = vmatpush1.msra.mxu0 %v993
        %1378 = vmatprep.subr.mxu0 %v1000
        %1379 = vmatpush1.msra.mxu0 %v999
        %1380 = vmatprep.subr.mxu0 %v1006
        %1381 = vmatpush1.msra.mxu0 %v1005
        %1382 = vmatprep.subr.mxu0 %v1012
        %1383 = vmatpush1.msra.mxu0 %v1011
        %1384 = vmatprep.subr.mxu0 %v1018
        %1385 = vmatpush1.msra.mxu0 %v1017
        %1386 = vmatprep.subr.mxu0 %v1024
        %1387 = vmatpush1.msra.mxu0 %v1023
        %1388 = vmatprep.subr.mxu0 %v1030
        %1389 = vmatpush1.msra.mxu0 %v1029
        %1390 = vmatprep.subr.mxu0 %v1036
        %1391 = vmatpush1.msra.mxu0 %v1035
        %1392 = vmatprep.subr.mxu0 %v1042
        %1393 = vmatpush1.msra.mxu0 %v1041
        %1394 = vmatprep.subr.mxu0 %v1048
        %1395 = vmatpush1.msra.mxu0 %v1047
        %1396 = vmatprep.subr.mxu0 %v1054
        %1397 = vmatpush1.msra.mxu0 %v1053
        %1398 = vmatprep.subr.mxu0 %v1060
        %1399 = vmatpush1.msra.mxu0 %v1059
        %1400 = vmatprep.subr.mxu0 %v1066
        %1401 = vmatpush1.msra.mxu0 %v1065
        %1402 = vmatprep.subr.mxu0 %v1072
        %1403 = vmatpush1.msra.mxu0 %v1071
        %1404 = vmatprep.subr.mxu0 %v1078
        %1405 = vmatpush1.msra.mxu0 %v1077
        %1406 = vmatprep.subr.mxu0 %v1084
        %1407 = vmatpush1.msra.mxu0 %v1083
        %1408 = vmatprep.subr.mxu0 0.0
        %1409 = vmatpush1.msra.mxu0 0.0
        %1410 = vmatprep.subr.mxu0 0.0
        %1411 = vmatpush1.msra.mxu0 0.0
        %1412 = vmatprep.subr.mxu0 0.0
        %1413 = vmatpush1.msra.mxu0 0.0
        %1414 = vmatprep.subr.mxu0 0.0
        %1415 = vmatpush1.msra.mxu0 0.0
        %1416 = vmatprep.subr.mxu0 0.0
        %1417 = vmatpush1.msra.mxu0 0.0
        %1418 = vmatprep.subr.mxu0 0.0
        %1419 = vmatpush1.msra.mxu0 0.0
        %1420 = vmatprep.subr.mxu0 0.0
        %1421 = vmatpush1.msra.mxu0 0.0
        %1422 = vmatprep.subr.mxu0 0.0
        %1423 = vmatpush1.msra.mxu0 0.0
        %1424 = vmatprep.subr.mxu0 0.0
        %1425 = vmatpush1.msra.mxu0 0.0
        %1426 = vmatprep.subr.mxu0 0.0
        %1427 = vmatpush1.msra.mxu0 0.0
        %1428 = vmatprep.subr.mxu0 0.0
        %1429 = vmatpush1.msra.mxu0 0.0
        %1430 = vmatprep.subr.mxu0 0.0
        %1431 = vmatpush1.msra.mxu0 0.0
        %1432 = vmatprep.subr.mxu0 0.0
        %1433 = vmatpush1.msra.mxu0 0.0
        %1434 = vmatprep.subr.mxu0 0.0
        %1435 = vmatpush1.msra.mxu0 0.0
        %1436 = vmatprep.subr.mxu0 0.0
        %1437 = vmatpush1.msra.mxu0 0.0
        %1438 = vmatprep.subr.mxu0 0.0
        %1439 = vmatpush1.msra.mxu0 0.0
        %1440 = vmatprep.mubr.f32.mxu0 0.0
        %1441 = vmatmul.mubr.f32.gmra.mrb[0].mxu0 %v943
        %v1442 = vpop.f32.mrb[0].mxu0
        %v1443 = vadd.f32 %v1100, %v1442
        %v1444 = vpop.f32.mrb[0].mxu0
        %v1445 = vadd.f32 %v1104, %v1444
        %1446 = vmatprep.mubr.f32.mxu0 0.0
        %1447 = vmatmul.mubr.f32.gmra.mrb[0].mxu0 %v944
        %v1448 = vpop.f32.mrb[0].mxu0
        %v1449 = vadd.f32 %v1100, %v1448
        %v1450 = vpop.f32.mrb[0].mxu0
        %v1451 = vadd.f32 %v1104, %v1450
        %1452 = vmatprep.mubr.f32.mxu0 0.0
        %1453 = vmatmul.mubr.f32.gmra.mrb[0].mxu0 %v945
        %v1454 = vpop.f32.mrb[0].mxu0
        %v1455 = vadd.f32 %v1100, %v1454
        %v1456 = vpop.f32.mrb[0].mxu0
        %v1457 = vadd.f32 %v1104, %v1456
        %1458 = vmatprep.mubr.f32.mxu0 0.0
        %1459 = vmatmul.mubr.f32.gmra.mrb[0].mxu0 %v946
        %v1460 = vpop.f32.mrb[0].mxu0
        %v1461 = vadd.f32 %v1100, %v1460
        %v1462 = vpop.f32.mrb[0].mxu0
        %v1463 = vadd.f32 %v1104, %v1462
        %1464 = vmatprep.mubr.f32.mxu0 0.0
        %1465 = vmatmul.mubr.f32.gmra.mrb[0].mxu0 %v947
        %v1466 = vpop.f32.mrb[0].mxu0
        %v1467 = vadd.f32 %v1100, %v1466
        %v1468 = vpop.f32.mrb[0].mxu0
        %v1469 = vadd.f32 %v1104, %v1468
        %1470 = vmatprep.mubr.f32.mxu0 0.0
        %1471 = vmatmul.mubr.f32.gmra.mrb[0].mxu0 %v948
        %v1472 = vpop.f32.mrb[0].mxu0
        %v1473 = vadd.f32 %v1100, %v1472
        %v1474 = vpop.f32.mrb[0].mxu0
        %v1475 = vadd.f32 %v1104, %v1474
        %1476 = vmatprep.mubr.f32.mxu0 0.0
        %1477 = vmatmul.mubr.f32.gmra.mrb[0].mxu0 %v949
        %v1478 = vpop.f32.mrb[0].mxu0
        %v1479 = vadd.f32 %v1100, %v1478
        %v1480 = vpop.f32.mrb[0].mxu0
        %v1481 = vadd.f32 %v1104, %v1480
        %1482 = vmatprep.mubr.f32.mxu0 0.0
        %1483 = vmatmul.mubr.f32.gmra.mrb[0].mxu0 %v950
        %v1484 = vpop.f32.mrb[0].mxu0
        %v1485 = vadd.f32 %v1100, %v1484
        %v1486 = vpop.f32.mrb[0].mxu0
        %v1487 = vadd.f32 %v1104, %v1486
        %1488 = vmatprep.mubr.f32.mxu0 0.0
        %1489 = vmatmul.mubr.f32.gmra.mrb[0].mxu0 %v951
        %v1490 = vpop.f32.mrb[0].mxu0
        %v1491 = vadd.f32 %v1100, %v1490
        %v1492 = vpop.f32.mrb[0].mxu0
        %v1493 = vadd.f32 %v1104, %v1492
        %1494 = vmatprep.mubr.f32.mxu0 0.0
        %1495 = vmatmul.mubr.f32.gmra.mrb[0].mxu0 %v952
        %v1496 = vpop.f32.mrb[0].mxu0
        %v1497 = vadd.f32 %v1100, %v1496
        %v1498 = vpop.f32.mrb[0].mxu0
        %v1499 = vadd.f32 %v1104, %v1498
        %1500 = vmatprep.mubr.f32.mxu0 0.0
        %1501 = vmatmul.mubr.f32.gmra.mrb[0].mxu0 %v953
        %v1502 = vpop.f32.mrb[0].mxu0
        %v1503 = vadd.f32 %v1100, %v1502
        %v1504 = vpop.f32.mrb[0].mxu0
        %v1505 = vadd.f32 %v1104, %v1504
        %1506 = vmatprep.mubr.f32.mxu0 0.0
        %1507 = vmatmul.mubr.f32.gmra.mrb[0].mxu0 %v954
        %v1508 = vpop.f32.mrb[0].mxu0
        %v1509 = vadd.f32 %v1100, %v1508
        %v1510 = vpop.f32.mrb[0].mxu0
        %v1511 = vadd.f32 %v1104, %v1510
        %1512 = vmatprep.mubr.f32.mxu0 0.0
        %1513 = vmatmul.mubr.f32.gmra.mrb[0].mxu0 %v955
        %v1514 = vpop.f32.mrb[0].mxu0
        %v1515 = vadd.f32 %v1100, %v1514
        %v1516 = vpop.f32.mrb[0].mxu0
        %v1517 = vadd.f32 %v1104, %v1516
        %1518 = vmatprep.mubr.f32.mxu0 0.0
        %1519 = vmatmul.mubr.f32.gmra.mrb[0].mxu0 %v956
        %v1520 = vpop.f32.mrb[0].mxu0
        %v1521 = vadd.f32 %v1100, %v1520
        %v1522 = vpop.f32.mrb[0].mxu0
        %v1523 = vadd.f32 %v1104, %v1522
        %1524 = vmatprep.mubr.f32.mxu0 0.0
        %1525 = vmatmul.mubr.f32.gmra.mrb[0].mxu0 %v957
        %v1526 = vpop.f32.mrb[0].mxu0
        %v1527 = vadd.f32 %v1100, %v1526
        %v1528 = vpop.f32.mrb[0].mxu0
        %v1529 = vadd.f32 %v1104, %v1528
        %1530 = vmatprep.mubr.f32.mxu0 0.0
        %1531 = vmatmul.mubr.f32.gmra.mrb[0].mxu0 %v958
        %v1532 = vpop.f32.mrb[0].mxu0
        %v1533 = vadd.f32 %v1100, %v1532
        %v1534 = vpop.f32.mrb[0].mxu0
        %v1535 = vadd.f32 %v1104, %v1534
        %1536 = vmatprep.mubr.f32.mxu0 0.0
        %1537 = vmatmul.mubr.f32.gmra.mrb[0].mxu0 %v975
        %v1538 = vpop.f32.mrb[0].mxu0
        %v1539 = vadd.f32 %v1100, %v1538
        %v1540 = vpop.f32.mrb[0].mxu0
        %v1541 = vadd.f32 %v1104, %v1540
        %1542 = vmatprep.mubr.f32.mxu0 0.0
        %1543 = vmatmul.mubr.f32.gmra.mrb[0].mxu0 %v976
        %v1544 = vpop.f32.mrb[0].mxu0
        %v1545 = vadd.f32 %v1100, %v1544
        %v1546 = vpop.f32.mrb[0].mxu0
        %v1547 = vadd.f32 %v1104, %v1546
        %1548 = vmatprep.mubr.f32.mxu0 0.0
        %1549 = vmatmul.mubr.f32.gmra.mrb[0].mxu0 %v977
        %v1550 = vpop.f32.mrb[0].mxu0
        %v1551 = vadd.f32 %v1100, %v1550
        %v1552 = vpop.f32.mrb[0].mxu0
        %v1553 = vadd.f32 %v1104, %v1552
        %1554 = vmatprep.mubr.f32.mxu0 0.0
        %1555 = vmatmul.mubr.f32.gmra.mrb[0].mxu0 %v978
        %v1556 = vpop.f32.mrb[0].mxu0
        %v1557 = vadd.f32 %v1100, %v1556
        %v1558 = vpop.f32.mrb[0].mxu0
        %v1559 = vadd.f32 %v1104, %v1558
        %1560 = vmatprep.mubr.f32.mxu0 0.0
        %1561 = vmatmul.mubr.f32.gmra.mrb[0].mxu0 %v979
        %v1562 = vpop.f32.mrb[0].mxu0
        %v1563 = vadd.f32 %v1100, %v1562
        %v1564 = vpop.f32.mrb[0].mxu0
        %v1565 = vadd.f32 %v1104, %v1564
        %1566 = vmatprep.mubr.f32.mxu0 0.0
        %1567 = vmatmul.mubr.f32.gmra.mrb[0].mxu0 %v980
        %v1568 = vpop.f32.mrb[0].mxu0
        %v1569 = vadd.f32 %v1100, %v1568
        %v1570 = vpop.f32.mrb[0].mxu0
        %v1571 = vadd.f32 %v1104, %v1570
        %1572 = vmatprep.mubr.f32.mxu0 0.0
        %1573 = vmatmul.mubr.f32.gmra.mrb[0].mxu0 %v981
        %v1574 = vpop.f32.mrb[0].mxu0
        %v1575 = vadd.f32 %v1100, %v1574
        %v1576 = vpop.f32.mrb[0].mxu0
        %v1577 = vadd.f32 %v1104, %v1576
        %1578 = vmatprep.mubr.f32.mxu0 0.0
        %1579 = vmatmul.mubr.f32.gmra.mrb[0].mxu0 %v982
        %v1580 = vpop.f32.mrb[0].mxu0
        %v1581 = vadd.f32 %v1100, %v1580
        %v1582 = vpop.f32.mrb[0].mxu0
        %v1583 = vadd.f32 %v1104, %v1582
        %1584 = vmatprep.mubr.f32.mxu0 0.0
        %1585 = vmatmul.mubr.f32.gmra.mrb[0].mxu0 %v983
        %v1586 = vpop.f32.mrb[0].mxu0
        %v1587 = vadd.f32 %v1100, %v1586
        %v1588 = vpop.f32.mrb[0].mxu0
        %v1589 = vadd.f32 %v1104, %v1588
        %1590 = vmatprep.mubr.f32.mxu0 0.0
        %1591 = vmatmul.mubr.f32.gmra.mrb[0].mxu0 %v984
        %v1592 = vpop.f32.mrb[0].mxu0
        %v1593 = vadd.f32 %v1100, %v1592
        %v1594 = vpop.f32.mrb[0].mxu0
        %v1595 = vadd.f32 %v1104, %v1594
        %1596 = vmatprep.mubr.f32.mxu0 0.0
        %1597 = vmatmul.mubr.f32.gmra.mrb[0].mxu0 %v985
        %v1598 = vpop.f32.mrb[0].mxu0
        %v1599 = vadd.f32 %v1100, %v1598
        %v1600 = vpop.f32.mrb[0].mxu0
        %v1601 = vadd.f32 %v1104, %v1600
        %1602 = vmatprep.mubr.f32.mxu0 0.0
        %1603 = vmatmul.mubr.f32.gmra.mrb[0].mxu0 %v986
        %v1604 = vpop.f32.mrb[0].mxu0
        %v1605 = vadd.f32 %v1100, %v1604
        %v1606 = vpop.f32.mrb[0].mxu0
        %v1607 = vadd.f32 %v1104, %v1606
        %1608 = vmatprep.mubr.f32.mxu0 0.0
        %1609 = vmatmul.mubr.f32.gmra.mrb[0].mxu0 %v987
        %v1610 = vpop.f32.mrb[0].mxu0
        %v1611 = vadd.f32 %v1100, %v1610
        %v1612 = vpop.f32.mrb[0].mxu0
        %v1613 = vadd.f32 %v1104, %v1612
        %1614 = vmatprep.mubr.f32.mxu0 0.0
        %1615 = vmatmul.mubr.f32.gmra.mrb[0].mxu0 %v988
        %v1616 = vpop.f32.mrb[0].mxu0
        %v1617 = vadd.f32 %v1100, %v1616
        %v1618 = vpop.f32.mrb[0].mxu0
        %v1619 = vadd.f32 %v1104, %v1618
        %1620 = vmatprep.mubr.f32.mxu0 0.0
        %1621 = vmatmul.mubr.f32.gmra.mrb[0].mxu0 %v989
        %v1622 = vpop.f32.mrb[0].mxu0
        %v1623 = vadd.f32 %v1100, %v1622
        %v1624 = vpop.f32.mrb[0].mxu0
        %v1625 = vadd.f32 %v1104, %v1624
        %1626 = vmatprep.mubr.f32.mxu0 0.0
        %1627 = vmatmul.mubr.f32.gmra.mrb[0].mxu0 %v990
        %v1628 = vpop.f32.mrb[0].mxu0
        %v1629 = vadd.f32 %v1100, %v1628
        %v1630 = vpop.f32.mrb[0].mxu0
        %v1631 = vadd.f32 %v1104, %v1630
        %1632 = vdwg.mxu0
        %1633 = vmatprep.subr.mxu0 %v996
        %1634 = vmatpush1.msra.mxu0 %v995
        %1635 = vmatprep.subr.mxu0 %v1002
        %1636 = vmatpush1.msra.mxu0 %v1001
        %1637 = vmatprep.subr.mxu0 %v1008
        %1638 = vmatpush1.msra.mxu0 %v1007
        %1639 = vmatprep.subr.mxu0 %v1014
        %1640 = vmatpush1.msra.mxu0 %v1013
        %1641 = vmatprep.subr.mxu0 %v1020
        %1642 = vmatpush1.msra.mxu0 %v1019
        %1643 = vmatprep.subr.mxu0 %v1026
        %1644 = vmatpush1.msra.mxu0 %v1025
        %1645 = vmatprep.subr.mxu0 %v1032
        %1646 = vmatpush1.msra.mxu0 %v1031
        %1647 = vmatprep.subr.mxu0 %v1038
        %1648 = vmatpush1.msra.mxu0 %v1037
        %1649 = vmatprep.subr.mxu0 %v1044
        %1650 = vmatpush1.msra.mxu0 %v1043
        %1651 = vmatprep.subr.mxu0 %v1050
        %1652 = vmatpush1.msra.mxu0 %v1049
        %1653 = vmatprep.subr.mxu0 %v1056
        %1654 = vmatpush1.msra.mxu0 %v1055
        %1655 = vmatprep.subr.mxu0 %v1062
        %1656 = vmatpush1.msra.mxu0 %v1061
        %1657 = vmatprep.subr.mxu0 %v1068
        %1658 = vmatpush1.msra.mxu0 %v1067
        %1659 = vmatprep.subr.mxu0 %v1074
        %1660 = vmatpush1.msra.mxu0 %v1073
        %1661 = vmatprep.subr.mxu0 %v1080
        %1662 = vmatpush1.msra.mxu0 %v1079
        %1663 = vmatprep.subr.mxu0 %v1086
        %1664 = vmatpush1.msra.mxu0 %v1085
        %1665 = vmatprep.subr.mxu0 0.0
        %1666 = vmatpush1.msra.mxu0 0.0
        %1667 = vmatprep.subr.mxu0 0.0
        %1668 = vmatpush1.msra.mxu0 0.0
        %1669 = vmatprep.subr.mxu0 0.0
        %1670 = vmatpush1.msra.mxu0 0.0
        %1671 = vmatprep.subr.mxu0 0.0
        %1672 = vmatpush1.msra.mxu0 0.0
        %1673 = vmatprep.subr.mxu0 0.0
        %1674 = vmatpush1.msra.mxu0 0.0
        %1675 = vmatprep.subr.mxu0 0.0
        %1676 = vmatpush1.msra.mxu0 0.0
        %1677 = vmatprep.subr.mxu0 0.0
        %1678 = vmatpush1.msra.mxu0 0.0
        %1679 = vmatprep.subr.mxu0 0.0
        %1680 = vmatpush1.msra.mxu0 0.0
        %1681 = vmatprep.subr.mxu0 0.0
        %1682 = vmatpush1.msra.mxu0 0.0
        %1683 = vmatprep.subr.mxu0 0.0
        %1684 = vmatpush1.msra.mxu0 0.0
        %1685 = vmatprep.subr.mxu0 0.0
        %1686 = vmatpush1.msra.mxu0 0.0
        %1687 = vmatprep.subr.mxu0 0.0
        %1688 = vmatpush1.msra.mxu0 0.0
        %1689 = vmatprep.subr.mxu0 0.0
        %1690 = vmatpush1.msra.mxu0 0.0
        %1691 = vmatprep.subr.mxu0 0.0
        %1692 = vmatpush1.msra.mxu0 0.0
        %1693 = vmatprep.subr.mxu0 0.0
        %1694 = vmatpush1.msra.mxu0 0.0
        %1695 = vmatprep.subr.mxu0 0.0
        %1696 = vmatpush1.msra.mxu0 0.0
        %1697 = vmatprep.mubr.f32.mxu0 0.0
        %1698 = vmatmul.mubr.f32.gmra.mrb[0].mxu0 %v943
        %v1699 = vpop.f32.mrb[0].mxu0
        %v1700 = vadd.f32 %v1108, %v1699
        %v1701 = vpop.f32.mrb[0].mxu0
        %v1702 = vadd.f32 %v1112, %v1701
        %1703 = vmatprep.mubr.f32.mxu0 0.0
        %1704 = vmatmul.mubr.f32.gmra.mrb[0].mxu0 %v944
        %v1705 = vpop.f32.mrb[0].mxu0
        %v1706 = vadd.f32 %v1108, %v1705
        %v1707 = vpop.f32.mrb[0].mxu0
        %v1708 = vadd.f32 %v1112, %v1707
        %1709 = vmatprep.mubr.f32.mxu0 0.0
        %1710 = vmatmul.mubr.f32.gmra.mrb[0].mxu0 %v945
        %v1711 = vpop.f32.mrb[0].mxu0
        %v1712 = vadd.f32 %v1108, %v1711
        %v1713 = vpop.f32.mrb[0].mxu0
        %v1714 = vadd.f32 %v1112, %v1713
        %1715 = vmatprep.mubr.f32.mxu0 0.0
        %1716 = vmatmul.mubr.f32.gmra.mrb[0].mxu0 %v946
        %v1717 = vpop.f32.mrb[0].mxu0
        %v1718 = vadd.f32 %v1108, %v1717
        %v1719 = vpop.f32.mrb[0].mxu0
        %v1720 = vadd.f32 %v1112, %v1719
        %1721 = vmatprep.mubr.f32.mxu0 0.0
        %1722 = vmatmul.mubr.f32.gmra.mrb[0].mxu0 %v947
        %v1723 = vpop.f32.mrb[0].mxu0
        %v1724 = vadd.f32 %v1108, %v1723
        %v1725 = vpop.f32.mrb[0].mxu0
        %v1726 = vadd.f32 %v1112, %v1725
        %1727 = vmatprep.mubr.f32.mxu0 0.0
        %1728 = vmatmul.mubr.f32.gmra.mrb[0].mxu0 %v948
        %v1729 = vpop.f32.mrb[0].mxu0
        %v1730 = vadd.f32 %v1108, %v1729
        %v1731 = vpop.f32.mrb[0].mxu0
        %v1732 = vadd.f32 %v1112, %v1731
        %1733 = vmatprep.mubr.f32.mxu0 0.0
        %1734 = vmatmul.mubr.f32.gmra.mrb[0].mxu0 %v949
        %v1735 = vpop.f32.mrb[0].mxu0
        %v1736 = vadd.f32 %v1108, %v1735
        %v1737 = vpop.f32.mrb[0].mxu0
        %v1738 = vadd.f32 %v1112, %v1737
        %1739 = vmatprep.mubr.f32.mxu0 0.0
        %1740 = vmatmul.mubr.f32.gmra.mrb[0].mxu0 %v950
        %v1741 = vpop.f32.mrb[0].mxu0
        %v1742 = vadd.f32 %v1108, %v1741
        %v1743 = vpop.f32.mrb[0].mxu0
        %v1744 = vadd.f32 %v1112, %v1743
        %1745 = vmatprep.mubr.f32.mxu0 0.0
        %1746 = vmatmul.mubr.f32.gmra.mrb[0].mxu0 %v951
        %v1747 = vpop.f32.mrb[0].mxu0
        %v1748 = vadd.f32 %v1108, %v1747
        %v1749 = vpop.f32.mrb[0].mxu0
        %v1750 = vadd.f32 %v1112, %v1749
        %1751 = vmatprep.mubr.f32.mxu0 0.0
        %1752 = vmatmul.mubr.f32.gmra.mrb[0].mxu0 %v952
        %v1753 = vpop.f32.mrb[0].mxu0
        %v1754 = vadd.f32 %v1108, %v1753
        %v1755 = vpop.f32.mrb[0].mxu0
        %v1756 = vadd.f32 %v1112, %v1755
        %1757 = vmatprep.mubr.f32.mxu0 0.0
        %1758 = vmatmul.mubr.f32.gmra.mrb[0].mxu0 %v953
        %v1759 = vpop.f32.mrb[0].mxu0
        %v1760 = vadd.f32 %v1108, %v1759
        %v1761 = vpop.f32.mrb[0].mxu0
        %v1762 = vadd.f32 %v1112, %v1761
        %1763 = vmatprep.mubr.f32.mxu0 0.0
        %1764 = vmatmul.mubr.f32.gmra.mrb[0].mxu0 %v954
        %v1765 = vpop.f32.mrb[0].mxu0
        %v1766 = vadd.f32 %v1108, %v1765
        %v1767 = vpop.f32.mrb[0].mxu0
        %v1768 = vadd.f32 %v1112, %v1767
        %1769 = vmatprep.mubr.f32.mxu0 0.0
        %1770 = vmatmul.mubr.f32.gmra.mrb[0].mxu0 %v955
        %v1771 = vpop.f32.mrb[0].mxu0
        %v1772 = vadd.f32 %v1108, %v1771
        %v1773 = vpop.f32.mrb[0].mxu0
        %v1774 = vadd.f32 %v1112, %v1773
        %1775 = vmatprep.mubr.f32.mxu0 0.0
        %1776 = vmatmul.mubr.f32.gmra.mrb[0].mxu0 %v956
        %v1777 = vpop.f32.mrb[0].mxu0
        %v1778 = vadd.f32 %v1108, %v1777
        %v1779 = vpop.f32.mrb[0].mxu0
        %v1780 = vadd.f32 %v1112, %v1779
        %1781 = vmatprep.mubr.f32.mxu0 0.0
        %1782 = vmatmul.mubr.f32.gmra.mrb[0].mxu0 %v957
        %v1783 = vpop.f32.mrb[0].mxu0
        %v1784 = vadd.f32 %v1108, %v1783
        %v1785 = vpop.f32.mrb[0].mxu0
        %v1786 = vadd.f32 %v1112, %v1785
        %1787 = vmatprep.mubr.f32.mxu0 0.0
        %1788 = vmatmul.mubr.f32.gmra.mrb[0].mxu0 %v958
        %v1789 = vpop.f32.mrb[0].mxu0
        %v1790 = vadd.f32 %v1108, %v1789
        %v1791 = vpop.f32.mrb[0].mxu0
        %v1792 = vadd.f32 %v1112, %v1791
        %1793 = vmatprep.mubr.f32.mxu0 0.0
        %1794 = vmatmul.mubr.f32.gmra.mrb[0].mxu0 %v975
        %v1795 = vpop.f32.mrb[0].mxu0
        %v1796 = vadd.f32 %v1108, %v1795
        %v1797 = vpop.f32.mrb[0].mxu0
        %v1798 = vadd.f32 %v1112, %v1797
        %1799 = vmatprep.mubr.f32.mxu0 0.0
        %1800 = vmatmul.mubr.f32.gmra.mrb[0].mxu0 %v976
        %v1801 = vpop.f32.mrb[0].mxu0
        %v1802 = vadd.f32 %v1108, %v1801
        %v1803 = vpop.f32.mrb[0].mxu0
        %v1804 = vadd.f32 %v1112, %v1803
        %1805 = vmatprep.mubr.f32.mxu0 0.0
        %1806 = vmatmul.mubr.f32.gmra.mrb[0].mxu0 %v977
        %v1807 = vpop.f32.mrb[0].mxu0
        %v1808 = vadd.f32 %v1108, %v1807
        %v1809 = vpop.f32.mrb[0].mxu0
        %v1810 = vadd.f32 %v1112, %v1809
        %1811 = vmatprep.mubr.f32.mxu0 0.0
        %1812 = vmatmul.mubr.f32.gmra.mrb[0].mxu0 %v978
        %v1813 = vpop.f32.mrb[0].mxu0
        %v1814 = vadd.f32 %v1108, %v1813
        %v1815 = vpop.f32.mrb[0].mxu0
        %v1816 = vadd.f32 %v1112, %v1815
        %1817 = vmatprep.mubr.f32.mxu0 0.0
        %1818 = vmatmul.mubr.f32.gmra.mrb[0].mxu0 %v979
        %v1819 = vpop.f32.mrb[0].mxu0
        %v1820 = vadd.f32 %v1108, %v1819
        %v1821 = vpop.f32.mrb[0].mxu0
        %v1822 = vadd.f32 %v1112, %v1821
        %1823 = vmatprep.mubr.f32.mxu0 0.0
        %1824 = vmatmul.mubr.f32.gmra.mrb[0].mxu0 %v980
        %v1825 = vpop.f32.mrb[0].mxu0
        %v1826 = vadd.f32 %v1108, %v1825
        %v1827 = vpop.f32.mrb[0].mxu0
        %v1828 = vadd.f32 %v1112, %v1827
        %1829 = vmatprep.mubr.f32.mxu0 0.0
        %1830 = vmatmul.mubr.f32.gmra.mrb[0].mxu0 %v981
        %v1831 = vpop.f32.mrb[0].mxu0
        %v1832 = vadd.f32 %v1108, %v1831
        %v1833 = vpop.f32.mrb[0].mxu0
        %v1834 = vadd.f32 %v1112, %v1833
        %1835 = vmatprep.mubr.f32.mxu0 0.0
        %1836 = vmatmul.mubr.f32.gmra.mrb[0].mxu0 %v982
        %v1837 = vpop.f32.mrb[0].mxu0
        %v1838 = vadd.f32 %v1108, %v1837
        %v1839 = vpop.f32.mrb[0].mxu0
        %v1840 = vadd.f32 %v1112, %v1839
        %1841 = vmatprep.mubr.f32.mxu0 0.0
        %1842 = vmatmul.mubr.f32.gmra.mrb[0].mxu0 %v983
        %v1843 = vpop.f32.mrb[0].mxu0
        %v1844 = vadd.f32 %v1108, %v1843
        %v1845 = vpop.f32.mrb[0].mxu0
        %v1846 = vadd.f32 %v1112, %v1845
        %1847 = vmatprep.mubr.f32.mxu0 0.0
        %1848 = vmatmul.mubr.f32.gmra.mrb[0].mxu0 %v984
        %v1849 = vpop.f32.mrb[0].mxu0
        %v1850 = vadd.f32 %v1108, %v1849
        %v1851 = vpop.f32.mrb[0].mxu0
        %v1852 = vadd.f32 %v1112, %v1851
        %1853 = vmatprep.mubr.f32.mxu0 0.0
        %1854 = vmatmul.mubr.f32.gmra.mrb[0].mxu0 %v985
        %v1855 = vpop.f32.mrb[0].mxu0
        %v1856 = vadd.f32 %v1108, %v1855
        %v1857 = vpop.f32.mrb[0].mxu0
        %v1858 = vadd.f32 %v1112, %v1857
        %1859 = vmatprep.mubr.f32.mxu0 0.0
        %1860 = vmatmul.mubr.f32.gmra.mrb[0].mxu0 %v986
        %v1861 = vpop.f32.mrb[0].mxu0
        %v1862 = vadd.f32 %v1108, %v1861
        %v1863 = vpop.f32.mrb[0].mxu0
        %v1864 = vadd.f32 %v1112, %v1863
        %1865 = vmatprep.mubr.f32.mxu0 0.0
        %1866 = vmatmul.mubr.f32.gmra.mrb[0].mxu0 %v987
        %v1867 = vpop.f32.mrb[0].mxu0
        %v1868 = vadd.f32 %v1108, %v1867
        %v1869 = vpop.f32.mrb[0].mxu0
        %v1870 = vadd.f32 %v1112, %v1869
        %1871 = vmatprep.mubr.f32.mxu0 0.0
        %1872 = vmatmul.mubr.f32.gmra.mrb[0].mxu0 %v988
        %v1873 = vpop.f32.mrb[0].mxu0
        %v1874 = vadd.f32 %v1108, %v1873
        %v1875 = vpop.f32.mrb[0].mxu0
        %v1876 = vadd.f32 %v1112, %v1875
        %1877 = vmatprep.mubr.f32.mxu0 0.0
        %1878 = vmatmul.mubr.f32.gmra.mrb[0].mxu0 %v989
        %v1879 = vpop.f32.mrb[0].mxu0
        %v1880 = vadd.f32 %v1108, %v1879
        %v1881 = vpop.f32.mrb[0].mxu0
        %v1882 = vadd.f32 %v1112, %v1881
        %1883 = vmatprep.mubr.f32.mxu0 0.0
        %1884 = vmatmul.mubr.f32.gmra.mrb[0].mxu0 %v990
        %v1885 = vpop.f32.mrb[0].mxu0
        %v1886 = vadd.f32 %v1108, %v1885
        %v1887 = vpop.f32.mrb[0].mxu0
        %v1888 = vadd.f32 %v1112, %v1887
        %1889 = vdwg.mxu0
        %v1890 = vtanh.pop %v1186
        %v1891 = vtanh.pop %v1188
        %v1892 = vtanh.pop %v1443
        %v1893 = vtanh.pop %v1445
        %v1894 = vtanh.pop %v1700
        %v1895 = vtanh.pop %v1702
        %v1896 = vtanh.pop %v1192
        %v1897 = vtanh.pop %v1194
        %v1898 = vtanh.pop %v1449
        %v1899 = vtanh.pop %v1451
        %v1900 = vtanh.pop %v1706
        %v1901 = vtanh.pop %v1708
        %v1902 = vtanh.pop %v1198
        %v1903 = vtanh.pop %v1200
        %v1904 = vtanh.pop %v1455
        %v1905 = vtanh.pop %v1457
        %v1906 = vtanh.pop %v1712
        %v1907 = vtanh.pop %v1714
        %v1908 = vtanh.pop %v1204
        %v1909 = vtanh.pop %v1206
        %v1910 = vtanh.pop %v1461
        %v1911 = vtanh.pop %v1463
        %v1912 = vtanh.pop %v1718
        %v1913 = vtanh.pop %v1720
        %v1914 = vtanh.pop %v1210
        %v1915 = vtanh.pop %v1212
        %v1916 = vtanh.pop %v1467
        %v1917 = vtanh.pop %v1469
        %v1918 = vtanh.pop %v1724
        %v1919 = vtanh.pop %v1726
        %v1920 = vtanh.pop %v1216
        %v1921 = vtanh.pop %v1218
        %v1922 = vtanh.pop %v1473
        %v1923 = vtanh.pop %v1475
        %v1924 = vtanh.pop %v1730
        %v1925 = vtanh.pop %v1732
        %v1926 = vtanh.pop %v1222
        %v1927 = vtanh.pop %v1224
        %v1928 = vtanh.pop %v1479
        %v1929 = vtanh.pop %v1481
        %v1930 = vtanh.pop %v1736
        %v1931 = vtanh.pop %v1738
        %v1932 = vtanh.pop %v1228
        %v1933 = vtanh.pop %v1230
        %v1934 = vtanh.pop %v1485
        %v1935 = vtanh.pop %v1487
        %v1936 = vtanh.pop %v1742
        %v1937 = vtanh.pop %v1744
        %v1938 = vtanh.pop %v1234
        %v1939 = vtanh.pop %v1236
        %v1940 = vtanh.pop %v1491
        %v1941 = vtanh.pop %v1493
        %v1942 = vtanh.pop %v1748
        %v1943 = vtanh.pop %v1750
        %v1944 = vtanh.pop %v1240
        %v1945 = vtanh.pop %v1242
        %v1946 = vtanh.pop %v1497
        %v1947 = vtanh.pop %v1499
        %v1948 = vtanh.pop %v1754
        %v1949 = vtanh.pop %v1756
        %v1950 = vtanh.pop %v1246
        %v1951 = vtanh.pop %v1248
        %v1952 = vtanh.pop %v1503
        %v1953 = vtanh.pop %v1505
        %v1954 = vtanh.pop %v1760
        %v1955 = vtanh.pop %v1762
        %v1956 = vtanh.pop %v1252
        %v1957 = vtanh.pop %v1254
        %v1958 = vtanh.pop %v1509
        %v1959 = vtanh.pop %v1511
        %v1960 = vtanh.pop %v1766
        %v1961 = vtanh.pop %v1768
        %v1962 = vtanh.pop %v1258
        %v1963 = vtanh.pop %v1260
        %v1964 = vtanh.pop %v1515
        %v1965 = vtanh.pop %v1517
        %v1966 = vtanh.pop %v1772
        %v1967 = vtanh.pop %v1774
        %v1968 = vtanh.pop %v1264
        %v1969 = vtanh.pop %v1266
        %v1970 = vtanh.pop %v1521
        %v1971 = vtanh.pop %v1523
        %v1972 = vtanh.pop %v1778
        %v1973 = vtanh.pop %v1780
        %v1974 = vtanh.pop %v1270
        %v1975 = vtanh.pop %v1272
        %v1976 = vtanh.pop %v1527
        %v1977 = vtanh.pop %v1529
        %v1978 = vtanh.pop %v1784
        %v1979 = vtanh.pop %v1786
        %v1980 = vtanh.pop %v1276
        %v1981 = vtanh.pop %v1278
        %v1982 = vtanh.pop %v1533
        %v1983 = vtanh.pop %v1535
        %v1984 = vtanh.pop %v1790
        %v1985 = vtanh.pop %v1792
        %v1986 = vtanh.pop %v1282
        %v1987 = vtanh.pop %v1284
        %v1988 = vtanh.pop %v1539
        %v1989 = vtanh.pop %v1541
        %v1990 = vtanh.pop %v1796
        %v1991 = vtanh.pop %v1798
        %v1992 = vtanh.pop %v1288
        %v1993 = vtanh.pop %v1290
        %v1994 = vtanh.pop %v1545
        %v1995 = vtanh.pop %v1547
        %v1996 = vtanh.pop %v1802
        %v1997 = vtanh.pop %v1804
        %v1998 = vtanh.pop %v1294
        %v1999 = vtanh.pop %v1296
        %v2000 = vtanh.pop %v1551
        %v2001 = vtanh.pop %v1553
        %v2002 = vtanh.pop %v1808
        %v2003 = vtanh.pop %v1810
        %v2004 = vtanh.pop %v1300
        %v2005 = vtanh.pop %v1302
        %v2006 = vtanh.pop %v1557
        %v2007 = vtanh.pop %v1559
        %v2008 = vtanh.pop %v1814
        %v2009 = vtanh.pop %v1816
        %v2010 = vtanh.pop %v1306
        %v2011 = vtanh.pop %v1308
        %v2012 = vtanh.pop %v1563
        %v2013 = vtanh.pop %v1565
        %v2014 = vtanh.pop %v1820
        %v2015 = vtanh.pop %v1822
        %v2016 = vtanh.pop %v1312
        %v2017 = vtanh.pop %v1314
        %v2018 = vtanh.pop %v1569
        %v2019 = vtanh.pop %v1571
        %v2020 = vtanh.pop %v1826
        %v2021 = vtanh.pop %v1828
        %v2022 = vtanh.pop %v1318
        %v2023 = vtanh.pop %v1320
        %v2024 = vtanh.pop %v1575
        %v2025 = vtanh.pop %v1577
        %v2026 = vtanh.pop %v1832
        %v2027 = vtanh.pop %v1834
        %v2028 = vtanh.pop %v1324
        %v2029 = vtanh.pop %v1326
        %v2030 = vtanh.pop %v1581
        %v2031 = vtanh.pop %v1583
        %v2032 = vtanh.pop %v1838
        %v2033 = vtanh.pop %v1840
        %v2034 = vtanh.pop %v1330
        %v2035 = vtanh.pop %v1332
        %v2036 = vtanh.pop %v1587
        %v2037 = vtanh.pop %v1589
        %v2038 = vtanh.pop %v1844
        %v2039 = vtanh.pop %v1846
        %v2040 = vtanh.pop %v1336
        %v2041 = vtanh.pop %v1338
        %v2042 = vtanh.pop %v1593
        %v2043 = vtanh.pop %v1595
        %v2044 = vtanh.pop %v1850
        %v2045 = vtanh.pop %v1852
        %v2046 = vtanh.pop %v1342
        %v2047 = vtanh.pop %v1344
        %v2048 = vtanh.pop %v1599
        %v2049 = vtanh.pop %v1601
        %v2050 = vtanh.pop %v1856
        %v2051 = vtanh.pop %v1858
        %v2052 = vtanh.pop %v1348
        %v2053 = vtanh.pop %v1350
        %v2054 = vtanh.pop %v1605
        %v2055 = vtanh.pop %v1607
        %v2056 = vtanh.pop %v1862
        %v2057 = vtanh.pop %v1864
        %v2058 = vtanh.pop %v1354
        %v2059 = vtanh.pop %v1356
        %v2060 = vtanh.pop %v1611
        %v2061 = vtanh.pop %v1613
        %v2062 = vtanh.pop %v1868
        %v2063 = vtanh.pop %v1870
        %v2064 = vtanh.pop %v1360
        %v2065 = vtanh.pop %v1362
        %v2066 = vtanh.pop %v1617
        %v2067 = vtanh.pop %v1619
        %v2068 = vtanh.pop %v1874
        %v2069 = vtanh.pop %v1876
        %v2070 = vtanh.pop %v1366
        %v2071 = vtanh.pop %v1368
        %v2072 = vtanh.pop %v1623
        %v2073 = vtanh.pop %v1625
        %v2074 = vtanh.pop %v1880
        %v2075 = vtanh.pop %v1882
        %v2076 = vtanh.pop %v1372
        %v2077 = vtanh.pop %v1374
        %v2078 = vtanh.pop %v1629
        %v2079 = vtanh.pop %v1631
        %v2080 = vtanh.pop %v1886
        %v2081 = vtanh.pop %v1888
        %v2082 = vld [vmem:[#allocation8] sm:$0xff]
        %v2083 = vld [vmem:[#allocation8 + $0x8] sm:$0xff]
        %v2084 = vld [vmem:[#allocation8 + $0x10] sm:$0xff]
        %v2085 = vld [vmem:[#allocation8 + $0x18] sm:$0xff]
        %v2086 = vld [vmem:[#allocation8 + $0x20] sm:$0xff]
        %v2087 = vld [vmem:[#allocation8 + $0x28] sm:$0xff]
        %v2088 = vld [vmem:[#allocation8 + $0x30] sm:$0xff]
        %v2089 = vld [vmem:[#allocation8 + $0x38] sm:$0xff]
        %v2090 = vld [vmem:[#allocation8 + $0x40] sm:$0xff]
        %v2091 = vld [vmem:[#allocation8 + $0x48] sm:$0xff]
        %v2092 = vld [vmem:[#allocation8 + $0x50] sm:$0xff]
        %v2093 = vld [vmem:[#allocation8 + $0x58] sm:$0xff]
        %v2094 = vld [vmem:[#allocation8 + $0x60] sm:$0xff]
        %v2095 = vld [vmem:[#allocation8 + $0x68] sm:$0xff]
        %v2096 = vld [vmem:[#allocation8 + $0x70] sm:$0xff]
        %v2097 = vld [vmem:[#allocation8 + $0x78] sm:$0xff]
        %v2098 = vld [vmem:[#allocation8 + $0x80] sm:$0xff]
        %v2099 = vld [vmem:[#allocation8 + $0x88] sm:$0xff]
        %v2100 = vld [vmem:[#allocation8 + $0x90] sm:$0xff]
        %v2101 = vld [vmem:[#allocation8 + $0x98] sm:$0xff]
        %v2102 = vld [vmem:[#allocation8 + $0xa0] sm:$0xff]
        %v2103 = vld [vmem:[#allocation8 + $0xa8] sm:$0xff]
        %v2104 = vld [vmem:[#allocation8 + $0xb0] sm:$0xff]
        %v2105 = vld [vmem:[#allocation8 + $0xb8] sm:$0xff]
        %v2106 = vld [vmem:[#allocation8 + $0xc0] sm:$0xff]
        %v2107 = vld [vmem:[#allocation8 + $0xc8] sm:$0xff]
        %v2108 = vld [vmem:[#allocation8 + $0xd0] sm:$0xff]
        %v2109 = vld [vmem:[#allocation8 + $0xd8] sm:$0xff]
        %v2110 = vld [vmem:[#allocation8 + $0xe0] sm:$0xff]
        %v2111 = vld [vmem:[#allocation8 + $0xe8] sm:$0xff]
        %v2112 = vld [vmem:[#allocation8 + $0xf0] sm:$0xff]
        %v2113 = vld [vmem:[#allocation8 + $0xf8] sm:$0xff]
        %v2114 = vld [vmem:[#allocation8 + $0x100] sm:$0xff]
        %v2115 = vld [vmem:[#allocation8 + $0x108] sm:$0xff]
        %v2116 = vld [vmem:[#allocation8 + $0x110] sm:$0xff]
        %v2117 = vld [vmem:[#allocation8 + $0x118] sm:$0xff]
        %v2118 = vld [vmem:[#allocation8 + $0x120] sm:$0xff]
        %v2119 = vld [vmem:[#allocation8 + $0x128] sm:$0xff]
        %v2120 = vld [vmem:[#allocation8 + $0x130] sm:$0xff]
        %v2121 = vld [vmem:[#allocation8 + $0x138] sm:$0xff]
        %v2122 = vld [vmem:[#allocation8 + $0x140] sm:$0xff]
        %v2123 = vld [vmem:[#allocation8 + $0x148] sm:$0xff]
        %v2124 = vld [vmem:[#allocation8 + $0x150] sm:$0xff]
        %v2125 = vld [vmem:[#allocation8 + $0x158] sm:$0xff]
        %v2126 = vld [vmem:[#allocation8 + $0x160] sm:$0xff]
        %v2127 = vld [vmem:[#allocation8 + $0x168] sm:$0xff]
        %v2128 = vld [vmem:[#allocation8 + $0x170] sm:$0xff]
        %v2129 = vld [vmem:[#allocation8 + $0x178] sm:$0xff]
        %v2130 = vld [vmem:[#allocation8 + $0x180] sm:$0xff]
        %v2131 = vld [vmem:[#allocation8 + $0x188] sm:$0xff]
        %v2132 = vld [vmem:[#allocation8 + $0x190] sm:$0xff]
        %v2133 = vld [vmem:[#allocation8 + $0x198] sm:$0xff]
        %v2134 = vld [vmem:[#allocation8 + $0x1a0] sm:$0xff]
        %v2135 = vld [vmem:[#allocation8 + $0x1a8] sm:$0xff]
        %v2136 = vld [vmem:[#allocation8 + $0x1b0] sm:$0xff]
        %v2137 = vld [vmem:[#allocation8 + $0x1b8] sm:$0xff]
        %v2138 = vld [vmem:[#allocation8 + $0x1c0] sm:$0xff]
        %v2139 = vld [vmem:[#allocation8 + $0x1c8] sm:$0xff]
        %v2140 = vld [vmem:[#allocation8 + $0x1d0] sm:$0xff]
        %v2141 = vld [vmem:[#allocation8 + $0x1d8] sm:$0xff]
        %v2142 = vld [vmem:[#allocation8 + $0x1e0] sm:$0xff]
        %v2143 = vld [vmem:[#allocation8 + $0x1e8] sm:$0xff]
        %v2144 = vld [vmem:[#allocation8 + $0x1f0] sm:$0xff]
        %v2145 = vld [vmem:[#allocation8 + $0x1f8] sm:$0xff]
        %v2146 = vld [vmem:[#allocation8 + $0x200] sm:$0xff]
        %v2147 = vld [vmem:[#allocation8 + $0x208] sm:$0xff]
        %v2148 = vld [vmem:[#allocation8 + $0x210] sm:$0xff]
        %v2149 = vld [vmem:[#allocation8 + $0x218] sm:$0xff]
        %v2150 = vld [vmem:[#allocation8 + $0x220] sm:$0xff]
        %v2151 = vld [vmem:[#allocation8 + $0x228] sm:$0xff]
        %v2152 = vld [vmem:[#allocation8 + $0x230] sm:$0xff]
        %v2153 = vld [vmem:[#allocation8 + $0x238] sm:$0xff]
        %v2154 = vld [vmem:[#allocation8 + $0x240] sm:$0xff]
        %v2155 = vld [vmem:[#allocation8 + $0x248] sm:$0xff]
        %v2156 = vld [vmem:[#allocation8 + $0x250] sm:$0xff]
        %v2157 = vld [vmem:[#allocation8 + $0x258] sm:$0xff]
        %v2158 = vld [vmem:[#allocation8 + $0x260] sm:$0xff]
        %v2159 = vld [vmem:[#allocation8 + $0x268] sm:$0xff]
        %v2160 = vld [vmem:[#allocation8 + $0x270] sm:$0xff]
        %v2161 = vld [vmem:[#allocation8 + $0x278] sm:$0xff]
        %v2162 = vld [vmem:[#allocation8 + $0x280] sm:$0xff]
        %v2163 = vld [vmem:[#allocation8 + $0x288] sm:$0xff]
        %v2164 = vld [vmem:[#allocation8 + $0x290] sm:$0xff]
        %v2165 = vld [vmem:[#allocation8 + $0x298] sm:$0xff]
        %v2166 = vld [vmem:[#allocation8 + $0x2a0] sm:$0xff]
        %v2167 = vld [vmem:[#allocation8 + $0x2a8] sm:$0xff]
        %v2168 = vld [vmem:[#allocation8 + $0x2b0] sm:$0xff]
        %v2169 = vld [vmem:[#allocation8 + $0x2b8] sm:$0xff]
        %v2170 = vld [vmem:[#allocation8 + $0x2c0] sm:$0xff]
        %v2171 = vld [vmem:[#allocation8 + $0x2c8] sm:$0xff]
        %v2172 = vld [vmem:[#allocation8 + $0x2d0] sm:$0xff]
        %v2173 = vld [vmem:[#allocation8 + $0x2d8] sm:$0xff]
        %v2174 = vld [vmem:[#allocation8 + $0x2e0] sm:$0xff]
        %v2175 = vld [vmem:[#allocation8 + $0x2e8] sm:$0xff]
        %v2176 = vld [vmem:[#allocation8 + $0x2f0] sm:$0xff]
        %v2177 = vld [vmem:[#allocation8 + $0x2f8] sm:$0xff]
        %v2178 = vld [vmem:[%s8] sm:$0x1]
        %v2180 = vlaneseq
        %v2181 = vshrl.u32 %v2180, 7
        %v2182 = vsub.s32 0, %v2181
        %v2183 = vrot.slane %v2178, %v2182
        %2185 = vmatprep.subr.mxu0 0.0
        %2186 = vmatpush1.msra.mxu0 %v2082
        %2187 = vmatprep.subr.mxu0 0.0
        %2188 = vmatpush1.msra.mxu0 %v2083
        %2189 = vmatprep.subr.mxu0 0.0
        %2190 = vmatpush1.msra.mxu0 %v2084
        %2191 = vmatprep.subr.mxu0 0.0
        %2192 = vmatpush1.msra.mxu0 %v2085
        %2193 = vmatprep.subr.mxu0 0.0
        %2194 = vmatpush1.msra.mxu0 %v2086
        %2195 = vmatprep.subr.mxu0 0.0
        %2196 = vmatpush1.msra.mxu0 %v2087
        %2197 = vmatprep.subr.mxu0 0.0
        %2198 = vmatpush1.msra.mxu0 %v2088
        %2199 = vmatprep.subr.mxu0 0.0
        %2200 = vmatpush1.msra.mxu0 %v2089
        %2201 = vmatprep.subr.mxu0 0.0
        %2202 = vmatpush1.msra.mxu0 %v2090
        %2203 = vmatprep.subr.mxu0 0.0
        %2204 = vmatpush1.msra.mxu0 %v2091
        %2205 = vmatprep.subr.mxu0 0.0
        %2206 = vmatpush1.msra.mxu0 %v2092
        %2207 = vmatprep.subr.mxu0 0.0
        %2208 = vmatpush1.msra.mxu0 %v2093
        %2209 = vmatprep.subr.mxu0 0.0
        %2210 = vmatpush1.msra.mxu0 %v2094
        %2211 = vmatprep.subr.mxu0 0.0
        %2212 = vmatpush1.msra.mxu0 %v2095
        %2213 = vmatprep.subr.mxu0 0.0
        %2214 = vmatpush1.msra.mxu0 %v2096
        %2215 = vmatprep.subr.mxu0 0.0
        %2216 = vmatpush1.msra.mxu0 %v2097
        %2217 = vmatprep.subr.mxu0 0.0
        %2218 = vmatpush1.msra.mxu0 %v2098
        %2219 = vmatprep.subr.mxu0 0.0
        %2220 = vmatpush1.msra.mxu0 %v2099
        %2221 = vmatprep.subr.mxu0 0.0
        %2222 = vmatpush1.msra.mxu0 %v2100
        %2223 = vmatprep.subr.mxu0 0.0
        %2224 = vmatpush1.msra.mxu0 %v2101
        %2225 = vmatprep.subr.mxu0 0.0
        %2226 = vmatpush1.msra.mxu0 %v2102
        %2227 = vmatprep.subr.mxu0 0.0
        %2228 = vmatpush1.msra.mxu0 %v2103
        %2229 = vmatprep.subr.mxu0 0.0
        %2230 = vmatpush1.msra.mxu0 %v2104
        %2231 = vmatprep.subr.mxu0 0.0
        %2232 = vmatpush1.msra.mxu0 %v2105
        %2233 = vmatprep.subr.mxu0 0.0
        %2234 = vmatpush1.msra.mxu0 %v2106
        %2235 = vmatprep.subr.mxu0 0.0
        %2236 = vmatpush1.msra.mxu0 %v2107
        %2237 = vmatprep.subr.mxu0 0.0
        %2238 = vmatpush1.msra.mxu0 %v2108
        %2239 = vmatprep.subr.mxu0 0.0
        %2240 = vmatpush1.msra.mxu0 %v2109
        %2241 = vmatprep.subr.mxu0 0.0
        %2242 = vmatpush1.msra.mxu0 %v2110
        %2243 = vmatprep.subr.mxu0 0.0
        %2244 = vmatpush1.msra.mxu0 %v2111
        %2245 = vmatprep.subr.mxu0 0.0
        %2246 = vmatpush1.msra.mxu0 %v2112
        %2247 = vmatprep.subr.mxu0 0.0
        %2248 = vmatpush1.msra.mxu0 %v2113
        %2249 = vmatprep.mubr.f32.mxu0 %v1891
        %2250 = vmatmul.mubr.f32.gmra.mrb[0].mxu0 %v1890
        %v2251 = vpop.f32.mrb[0].mxu0
        %v2252 = vadd.f32 %v2183, %v2251
        %v2253 = vpop.f32.mrb[0].mxu0
        %2254 = vmatprep.mubr.f32.mxu0 %v1897
        %2255 = vmatmul.mubr.f32.gmra.mrb[0].mxu0 %v1896
        %v2256 = vpop.f32.mrb[0].mxu0
        %v2257 = vadd.f32 %v2183, %v2256
        %v2258 = vpop.f32.mrb[0].mxu0
        %2259 = vmatprep.mubr.f32.mxu0 %v1903
        %2260 = vmatmul.mubr.f32.gmra.mrb[0].mxu0 %v1902
        %v2261 = vpop.f32.mrb[0].mxu0
        %v2262 = vadd.f32 %v2183, %v2261
        %v2263 = vpop.f32.mrb[0].mxu0
        %2264 = vmatprep.mubr.f32.mxu0 %v1909
        %2265 = vmatmul.mubr.f32.gmra.mrb[0].mxu0 %v1908
        %v2266 = vpop.f32.mrb[0].mxu0
        %v2267 = vadd.f32 %v2183, %v2266
        %v2268 = vpop.f32.mrb[0].mxu0
        %2269 = vmatprep.mubr.f32.mxu0 %v1915
        %2270 = vmatmul.mubr.f32.gmra.mrb[0].mxu0 %v1914
        %v2271 = vpop.f32.mrb[0].mxu0
        %v2272 = vadd.f32 %v2183, %v2271
        %v2273 = vpop.f32.mrb[0].mxu0
        %2274 = vmatprep.mubr.f32.mxu0 %v1921
        %2275 = vmatmul.mubr.f32.gmra.mrb[0].mxu0 %v1920
        %v2276 = vpop.f32.mrb[0].mxu0
        %v2277 = vadd.f32 %v2183, %v2276
        %v2278 = vpop.f32.mrb[0].mxu0
        %2279 = vmatprep.mubr.f32.mxu0 %v1927
        %2280 = vmatmul.mubr.f32.gmra.mrb[0].mxu0 %v1926
        %v2281 = vpop.f32.mrb[0].mxu0
        %v2282 = vadd.f32 %v2183, %v2281
        %v2283 = vpop.f32.mrb[0].mxu0
        %2284 = vmatprep.mubr.f32.mxu0 %v1933
        %2285 = vmatmul.mubr.f32.gmra.mrb[0].mxu0 %v1932
        %v2286 = vpop.f32.mrb[0].mxu0
        %v2287 = vadd.f32 %v2183, %v2286
        %v2288 = vpop.f32.mrb[0].mxu0
        %2289 = vmatprep.mubr.f32.mxu0 %v1939
        %2290 = vmatmul.mubr.f32.gmra.mrb[0].mxu0 %v1938
        %v2291 = vpop.f32.mrb[0].mxu0
        %v2292 = vadd.f32 %v2183, %v2291
        %v2293 = vpop.f32.mrb[0].mxu0
        %2294 = vmatprep.mubr.f32.mxu0 %v1945
        %2295 = vmatmul.mubr.f32.gmra.mrb[0].mxu0 %v1944
        %v2296 = vpop.f32.mrb[0].mxu0
        %v2297 = vadd.f32 %v2183, %v2296
        %v2298 = vpop.f32.mrb[0].mxu0
        %2299 = vmatprep.mubr.f32.mxu0 %v1951
        %2300 = vmatmul.mubr.f32.gmra.mrb[0].mxu0 %v1950
        %v2301 = vpop.f32.mrb[0].mxu0
        %v2302 = vadd.f32 %v2183, %v2301
        %v2303 = vpop.f32.mrb[0].mxu0
        %2304 = vmatprep.mubr.f32.mxu0 %v1957
        %2305 = vmatmul.mubr.f32.gmra.mrb[0].mxu0 %v1956
        %v2306 = vpop.f32.mrb[0].mxu0
        %v2307 = vadd.f32 %v2183, %v2306
        %v2308 = vpop.f32.mrb[0].mxu0
        %2309 = vmatprep.mubr.f32.mxu0 %v1963
        %2310 = vmatmul.mubr.f32.gmra.mrb[0].mxu0 %v1962
        %v2311 = vpop.f32.mrb[0].mxu0
        %v2312 = vadd.f32 %v2183, %v2311
        %v2313 = vpop.f32.mrb[0].mxu0
        %2314 = vmatprep.mubr.f32.mxu0 %v1969
        %2315 = vmatmul.mubr.f32.gmra.mrb[0].mxu0 %v1968
        %v2316 = vpop.f32.mrb[0].mxu0
        %v2317 = vadd.f32 %v2183, %v2316
        %v2318 = vpop.f32.mrb[0].mxu0
        %2319 = vmatprep.mubr.f32.mxu0 %v1975
        %2320 = vmatmul.mubr.f32.gmra.mrb[0].mxu0 %v1974
        %v2321 = vpop.f32.mrb[0].mxu0
        %v2322 = vadd.f32 %v2183, %v2321
        %v2323 = vpop.f32.mrb[0].mxu0
        %2324 = vmatprep.mubr.f32.mxu0 %v1981
        %2325 = vmatmul.mubr.f32.gmra.mrb[0].mxu0 %v1980
        %v2326 = vpop.f32.mrb[0].mxu0
        %v2327 = vadd.f32 %v2183, %v2326
        %v2328 = vpop.f32.mrb[0].mxu0
        %2329 = vmatprep.mubr.f32.mxu0 %v1987
        %2330 = vmatmul.mubr.f32.gmra.mrb[0].mxu0 %v1986
        %v2331 = vpop.f32.mrb[0].mxu0
        %v2332 = vadd.f32 %v2183, %v2331
        %v2333 = vpop.f32.mrb[0].mxu0
        %2334 = vmatprep.mubr.f32.mxu0 %v1993
        %2335 = vmatmul.mubr.f32.gmra.mrb[0].mxu0 %v1992
        %v2336 = vpop.f32.mrb[0].mxu0
        %v2337 = vadd.f32 %v2183, %v2336
        %v2338 = vpop.f32.mrb[0].mxu0
        %2339 = vmatprep.mubr.f32.mxu0 %v1999
        %2340 = vmatmul.mubr.f32.gmra.mrb[0].mxu0 %v1998
        %v2341 = vpop.f32.mrb[0].mxu0
        %v2342 = vadd.f32 %v2183, %v2341
        %v2343 = vpop.f32.mrb[0].mxu0
        %2344 = vmatprep.mubr.f32.mxu0 %v2005
        %2345 = vmatmul.mubr.f32.gmra.mrb[0].mxu0 %v2004
        %v2346 = vpop.f32.mrb[0].mxu0
        %v2347 = vadd.f32 %v2183, %v2346
        %v2348 = vpop.f32.mrb[0].mxu0
        %2349 = vmatprep.mubr.f32.mxu0 %v2011
        %2350 = vmatmul.mubr.f32.gmra.mrb[0].mxu0 %v2010
        %v2351 = vpop.f32.mrb[0].mxu0
        %v2352 = vadd.f32 %v2183, %v2351
        %v2353 = vpop.f32.mrb[0].mxu0
        %2354 = vmatprep.mubr.f32.mxu0 %v2017
        %2355 = vmatmul.mubr.f32.gmra.mrb[0].mxu0 %v2016
        %v2356 = vpop.f32.mrb[0].mxu0
        %v2357 = vadd.f32 %v2183, %v2356
        %v2358 = vpop.f32.mrb[0].mxu0
        %2359 = vmatprep.mubr.f32.mxu0 %v2023
        %2360 = vmatmul.mubr.f32.gmra.mrb[0].mxu0 %v2022
        %v2361 = vpop.f32.mrb[0].mxu0
        %v2362 = vadd.f32 %v2183, %v2361
        %v2363 = vpop.f32.mrb[0].mxu0
        %2364 = vmatprep.mubr.f32.mxu0 %v2029
        %2365 = vmatmul.mubr.f32.gmra.mrb[0].mxu0 %v2028
        %v2366 = vpop.f32.mrb[0].mxu0
        %v2367 = vadd.f32 %v2183, %v2366
        %v2368 = vpop.f32.mrb[0].mxu0
        %2369 = vmatprep.mubr.f32.mxu0 %v2035
        %2370 = vmatmul.mubr.f32.gmra.mrb[0].mxu0 %v2034
        %v2371 = vpop.f32.mrb[0].mxu0
        %v2372 = vadd.f32 %v2183, %v2371
        %v2373 = vpop.f32.mrb[0].mxu0
        %2374 = vmatprep.mubr.f32.mxu0 %v2041
        %2375 = vmatmul.mubr.f32.gmra.mrb[0].mxu0 %v2040
        %v2376 = vpop.f32.mrb[0].mxu0
        %v2377 = vadd.f32 %v2183, %v2376
        %v2378 = vpop.f32.mrb[0].mxu0
        %2379 = vmatprep.mubr.f32.mxu0 %v2047
        %2380 = vmatmul.mubr.f32.gmra.mrb[0].mxu0 %v2046
        %v2381 = vpop.f32.mrb[0].mxu0
        %v2382 = vadd.f32 %v2183, %v2381
        %v2383 = vpop.f32.mrb[0].mxu0
        %2384 = vmatprep.mubr.f32.mxu0 %v2053
        %2385 = vmatmul.mubr.f32.gmra.mrb[0].mxu0 %v2052
        %v2386 = vpop.f32.mrb[0].mxu0
        %v2387 = vadd.f32 %v2183, %v2386
        %v2388 = vpop.f32.mrb[0].mxu0
        %2389 = vmatprep.mubr.f32.mxu0 %v2059
        %2390 = vmatmul.mubr.f32.gmra.mrb[0].mxu0 %v2058
        %v2391 = vpop.f32.mrb[0].mxu0
        %v2392 = vadd.f32 %v2183, %v2391
        %v2393 = vpop.f32.mrb[0].mxu0
        %2394 = vmatprep.mubr.f32.mxu0 %v2065
        %2395 = vmatmul.mubr.f32.gmra.mrb[0].mxu0 %v2064
        %v2396 = vpop.f32.mrb[0].mxu0
        %v2397 = vadd.f32 %v2183, %v2396
        %v2398 = vpop.f32.mrb[0].mxu0
        %2399 = vmatprep.mubr.f32.mxu0 %v2071
        %2400 = vmatmul.mubr.f32.gmra.mrb[0].mxu0 %v2070
        %v2401 = vpop.f32.mrb[0].mxu0
        %v2402 = vadd.f32 %v2183, %v2401
        %v2403 = vpop.f32.mrb[0].mxu0
        %2404 = vmatprep.mubr.f32.mxu0 %v2077
        %2405 = vmatmul.mubr.f32.gmra.mrb[0].mxu0 %v2076
        %v2406 = vpop.f32.mrb[0].mxu0
        %v2407 = vadd.f32 %v2183, %v2406
        %v2408 = vpop.f32.mrb[0].mxu0
        %2409 = vdwg.mxu0
        %2410 = vmatprep.subr.mxu0 0.0
        %2411 = vmatpush1.msra.mxu0 %v2114
        %2412 = vmatprep.subr.mxu0 0.0
        %2413 = vmatpush1.msra.mxu0 %v2115
        %2414 = vmatprep.subr.mxu0 0.0
        %2415 = vmatpush1.msra.mxu0 %v2116
        %2416 = vmatprep.subr.mxu0 0.0
        %2417 = vmatpush1.msra.mxu0 %v2117
        %2418 = vmatprep.subr.mxu0 0.0
        %2419 = vmatpush1.msra.mxu0 %v2118
        %2420 = vmatprep.subr.mxu0 0.0
        %2421 = vmatpush1.msra.mxu0 %v2119
        %2422 = vmatprep.subr.mxu0 0.0
        %2423 = vmatpush1.msra.mxu0 %v2120
        %2424 = vmatprep.subr.mxu0 0.0
        %2425 = vmatpush1.msra.mxu0 %v2121
        %2426 = vmatprep.subr.mxu0 0.0
        %2427 = vmatpush1.msra.mxu0 %v2122
        %2428 = vmatprep.subr.mxu0 0.0
        %2429 = vmatpush1.msra.mxu0 %v2123
        %2430 = vmatprep.subr.mxu0 0.0
        %2431 = vmatpush1.msra.mxu0 %v2124
        %2432 = vmatprep.subr.mxu0 0.0
        %2433 = vmatpush1.msra.mxu0 %v2125
        %2434 = vmatprep.subr.mxu0 0.0
        %2435 = vmatpush1.msra.mxu0 %v2126
        %2436 = vmatprep.subr.mxu0 0.0
        %2437 = vmatpush1.msra.mxu0 %v2127
        %2438 = vmatprep.subr.mxu0 0.0
        %2439 = vmatpush1.msra.mxu0 %v2128
        %2440 = vmatprep.subr.mxu0 0.0
        %2441 = vmatpush1.msra.mxu0 %v2129
        %2442 = vmatprep.subr.mxu0 0.0
        %2443 = vmatpush1.msra.mxu0 %v2130
        %2444 = vmatprep.subr.mxu0 0.0
        %2445 = vmatpush1.msra.mxu0 %v2131
        %2446 = vmatprep.subr.mxu0 0.0
        %2447 = vmatpush1.msra.mxu0 %v2132
        %2448 = vmatprep.subr.mxu0 0.0
        %2449 = vmatpush1.msra.mxu0 %v2133
        %2450 = vmatprep.subr.mxu0 0.0
        %2451 = vmatpush1.msra.mxu0 %v2134
        %2452 = vmatprep.subr.mxu0 0.0
        %2453 = vmatpush1.msra.mxu0 %v2135
        %2454 = vmatprep.subr.mxu0 0.0
        %2455 = vmatpush1.msra.mxu0 %v2136
        %2456 = vmatprep.subr.mxu0 0.0
        %2457 = vmatpush1.msra.mxu0 %v2137
        %2458 = vmatprep.subr.mxu0 0.0
        %2459 = vmatpush1.msra.mxu0 %v2138
        %2460 = vmatprep.subr.mxu0 0.0
        %2461 = vmatpush1.msra.mxu0 %v2139
        %2462 = vmatprep.subr.mxu0 0.0
        %2463 = vmatpush1.msra.mxu0 %v2140
        %2464 = vmatprep.subr.mxu0 0.0
        %2465 = vmatpush1.msra.mxu0 %v2141
        %2466 = vmatprep.subr.mxu0 0.0
        %2467 = vmatpush1.msra.mxu0 %v2142
        %2468 = vmatprep.subr.mxu0 0.0
        %2469 = vmatpush1.msra.mxu0 %v2143
        %2470 = vmatprep.subr.mxu0 0.0
        %2471 = vmatpush1.msra.mxu0 %v2144
        %2472 = vmatprep.subr.mxu0 0.0
        %2473 = vmatpush1.msra.mxu0 %v2145
        %2474 = vmatprep.mubr.f32.mxu0 %v1893
        %2475 = vmatmul.mubr.f32.gmra.mrb[0].mxu0 %v1892
        %v2476 = vpop.f32.mrb[0].mxu0
        %v2477 = vadd.f32 %v2252, %v2476
        %v2478 = vpop.f32.mrb[0].mxu0
        %2479 = vmatprep.mubr.f32.mxu0 %v1899
        %2480 = vmatmul.mubr.f32.gmra.mrb[0].mxu0 %v1898
        %v2481 = vpop.f32.mrb[0].mxu0
        %v2482 = vadd.f32 %v2257, %v2481
        %v2483 = vpop.f32.mrb[0].mxu0
        %2484 = vmatprep.mubr.f32.mxu0 %v1905
        %2485 = vmatmul.mubr.f32.gmra.mrb[0].mxu0 %v1904
        %v2486 = vpop.f32.mrb[0].mxu0
        %v2487 = vadd.f32 %v2262, %v2486
        %v2488 = vpop.f32.mrb[0].mxu0
        %2489 = vmatprep.mubr.f32.mxu0 %v1911
        %2490 = vmatmul.mubr.f32.gmra.mrb[0].mxu0 %v1910
        %v2491 = vpop.f32.mrb[0].mxu0
        %v2492 = vadd.f32 %v2267, %v2491
        %v2493 = vpop.f32.mrb[0].mxu0
        %2494 = vmatprep.mubr.f32.mxu0 %v1917
        %2495 = vmatmul.mubr.f32.gmra.mrb[0].mxu0 %v1916
        %v2496 = vpop.f32.mrb[0].mxu0
        %v2497 = vadd.f32 %v2272, %v2496
        %v2498 = vpop.f32.mrb[0].mxu0
        %2499 = vmatprep.mubr.f32.mxu0 %v1923
        %2500 = vmatmul.mubr.f32.gmra.mrb[0].mxu0 %v1922
        %v2501 = vpop.f32.mrb[0].mxu0
        %v2502 = vadd.f32 %v2277, %v2501
        %v2503 = vpop.f32.mrb[0].mxu0
        %2504 = vmatprep.mubr.f32.mxu0 %v1929
        %2505 = vmatmul.mubr.f32.gmra.mrb[0].mxu0 %v1928
        %v2506 = vpop.f32.mrb[0].mxu0
        %v2507 = vadd.f32 %v2282, %v2506
        %v2508 = vpop.f32.mrb[0].mxu0
        %2509 = vmatprep.mubr.f32.mxu0 %v1935
        %2510 = vmatmul.mubr.f32.gmra.mrb[0].mxu0 %v1934
        %v2511 = vpop.f32.mrb[0].mxu0
        %v2512 = vadd.f32 %v2287, %v2511
        %v2513 = vpop.f32.mrb[0].mxu0
        %2514 = vmatprep.mubr.f32.mxu0 %v1941
        %2515 = vmatmul.mubr.f32.gmra.mrb[0].mxu0 %v1940
        %v2516 = vpop.f32.mrb[0].mxu0
        %v2517 = vadd.f32 %v2292, %v2516
        %v2518 = vpop.f32.mrb[0].mxu0
        %2519 = vmatprep.mubr.f32.mxu0 %v1947
        %2520 = vmatmul.mubr.f32.gmra.mrb[0].mxu0 %v1946
        %v2521 = vpop.f32.mrb[0].mxu0
        %v2522 = vadd.f32 %v2297, %v2521
        %v2523 = vpop.f32.mrb[0].mxu0
        %2524 = vmatprep.mubr.f32.mxu0 %v1953
        %2525 = vmatmul.mubr.f32.gmra.mrb[0].mxu0 %v1952
        %v2526 = vpop.f32.mrb[0].mxu0
        %v2527 = vadd.f32 %v2302, %v2526
        %v2528 = vpop.f32.mrb[0].mxu0
        %2529 = vmatprep.mubr.f32.mxu0 %v1959
        %2530 = vmatmul.mubr.f32.gmra.mrb[0].mxu0 %v1958
        %v2531 = vpop.f32.mrb[0].mxu0
        %v2532 = vadd.f32 %v2307, %v2531
        %v2533 = vpop.f32.mrb[0].mxu0
        %2534 = vmatprep.mubr.f32.mxu0 %v1965
        %2535 = vmatmul.mubr.f32.gmra.mrb[0].mxu0 %v1964
        %v2536 = vpop.f32.mrb[0].mxu0
        %v2537 = vadd.f32 %v2312, %v2536
        %v2538 = vpop.f32.mrb[0].mxu0
        %2539 = vmatprep.mubr.f32.mxu0 %v1971
        %2540 = vmatmul.mubr.f32.gmra.mrb[0].mxu0 %v1970
        %v2541 = vpop.f32.mrb[0].mxu0
        %v2542 = vadd.f32 %v2317, %v2541
        %v2543 = vpop.f32.mrb[0].mxu0
        %2544 = vmatprep.mubr.f32.mxu0 %v1977
        %2545 = vmatmul.mubr.f32.gmra.mrb[0].mxu0 %v1976
        %v2546 = vpop.f32.mrb[0].mxu0
        %v2547 = vadd.f32 %v2322, %v2546
        %v2548 = vpop.f32.mrb[0].mxu0
        %2549 = vmatprep.mubr.f32.mxu0 %v1983
        %2550 = vmatmul.mubr.f32.gmra.mrb[0].mxu0 %v1982
        %v2551 = vpop.f32.mrb[0].mxu0
        %v2552 = vadd.f32 %v2327, %v2551
        %v2553 = vpop.f32.mrb[0].mxu0
        %2554 = vmatprep.mubr.f32.mxu0 %v1989
        %2555 = vmatmul.mubr.f32.gmra.mrb[0].mxu0 %v1988
        %v2556 = vpop.f32.mrb[0].mxu0
        %v2557 = vadd.f32 %v2332, %v2556
        %v2558 = vpop.f32.mrb[0].mxu0
        %2559 = vmatprep.mubr.f32.mxu0 %v1995
        %2560 = vmatmul.mubr.f32.gmra.mrb[0].mxu0 %v1994
        %v2561 = vpop.f32.mrb[0].mxu0
        %v2562 = vadd.f32 %v2337, %v2561
        %v2563 = vpop.f32.mrb[0].mxu0
        %2564 = vmatprep.mubr.f32.mxu0 %v2001
        %2565 = vmatmul.mubr.f32.gmra.mrb[0].mxu0 %v2000
        %v2566 = vpop.f32.mrb[0].mxu0
        %v2567 = vadd.f32 %v2342, %v2566
        %v2568 = vpop.f32.mrb[0].mxu0
        %2569 = vmatprep.mubr.f32.mxu0 %v2007
        %2570 = vmatmul.mubr.f32.gmra.mrb[0].mxu0 %v2006
        %v2571 = vpop.f32.mrb[0].mxu0
        %v2572 = vadd.f32 %v2347, %v2571
        %v2573 = vpop.f32.mrb[0].mxu0
        %2574 = vmatprep.mubr.f32.mxu0 %v2013
        %2575 = vmatmul.mubr.f32.gmra.mrb[0].mxu0 %v2012
        %v2576 = vpop.f32.mrb[0].mxu0
        %v2577 = vadd.f32 %v2352, %v2576
        %v2578 = vpop.f32.mrb[0].mxu0
        %2579 = vmatprep.mubr.f32.mxu0 %v2019
        %2580 = vmatmul.mubr.f32.gmra.mrb[0].mxu0 %v2018
        %v2581 = vpop.f32.mrb[0].mxu0
        %v2582 = vadd.f32 %v2357, %v2581
        %v2583 = vpop.f32.mrb[0].mxu0
        %2584 = vmatprep.mubr.f32.mxu0 %v2025
        %2585 = vmatmul.mubr.f32.gmra.mrb[0].mxu0 %v2024
        %v2586 = vpop.f32.mrb[0].mxu0
        %v2587 = vadd.f32 %v2362, %v2586
        %v2588 = vpop.f32.mrb[0].mxu0
        %2589 = vmatprep.mubr.f32.mxu0 %v2031
        %2590 = vmatmul.mubr.f32.gmra.mrb[0].mxu0 %v2030
        %v2591 = vpop.f32.mrb[0].mxu0
        %v2592 = vadd.f32 %v2367, %v2591
        %v2593 = vpop.f32.mrb[0].mxu0
        %2594 = vmatprep.mubr.f32.mxu0 %v2037
        %2595 = vmatmul.mubr.f32.gmra.mrb[0].mxu0 %v2036
        %v2596 = vpop.f32.mrb[0].mxu0
        %v2597 = vadd.f32 %v2372, %v2596
        %v2598 = vpop.f32.mrb[0].mxu0
        %2599 = vmatprep.mubr.f32.mxu0 %v2043
        %2600 = vmatmul.mubr.f32.gmra.mrb[0].mxu0 %v2042
        %v2601 = vpop.f32.mrb[0].mxu0
        %v2602 = vadd.f32 %v2377, %v2601
        %v2603 = vpop.f32.mrb[0].mxu0
        %2604 = vmatprep.mubr.f32.mxu0 %v2049
        %2605 = vmatmul.mubr.f32.gmra.mrb[0].mxu0 %v2048
        %v2606 = vpop.f32.mrb[0].mxu0
        %v2607 = vadd.f32 %v2382, %v2606
        %v2608 = vpop.f32.mrb[0].mxu0
        %2609 = vmatprep.mubr.f32.mxu0 %v2055
        %2610 = vmatmul.mubr.f32.gmra.mrb[0].mxu0 %v2054
        %v2611 = vpop.f32.mrb[0].mxu0
        %v2612 = vadd.f32 %v2387, %v2611
        %v2613 = vpop.f32.mrb[0].mxu0
        %2614 = vmatprep.mubr.f32.mxu0 %v2061
        %2615 = vmatmul.mubr.f32.gmra.mrb[0].mxu0 %v2060
        %v2616 = vpop.f32.mrb[0].mxu0
        %v2617 = vadd.f32 %v2392, %v2616
        %v2618 = vpop.f32.mrb[0].mxu0
        %2619 = vmatprep.mubr.f32.mxu0 %v2067
        %2620 = vmatmul.mubr.f32.gmra.mrb[0].mxu0 %v2066
        %v2621 = vpop.f32.mrb[0].mxu0
        %v2622 = vadd.f32 %v2397, %v2621
        %v2623 = vpop.f32.mrb[0].mxu0
        %2624 = vmatprep.mubr.f32.mxu0 %v2073
        %2625 = vmatmul.mubr.f32.gmra.mrb[0].mxu0 %v2072
        %v2626 = vpop.f32.mrb[0].mxu0
        %v2627 = vadd.f32 %v2402, %v2626
        %v2628 = vpop.f32.mrb[0].mxu0
        %2629 = vmatprep.mubr.f32.mxu0 %v2079
        %2630 = vmatmul.mubr.f32.gmra.mrb[0].mxu0 %v2078
        %v2631 = vpop.f32.mrb[0].mxu0
        %v2632 = vadd.f32 %v2407, %v2631
        %v2633 = vpop.f32.mrb[0].mxu0
        %2634 = vdwg.mxu0
        %2635 = vmatprep.subr.mxu0 0.0
        %2636 = vmatpush1.msra.mxu0 %v2146
        %2637 = vmatprep.subr.mxu0 0.0
        %2638 = vmatpush1.msra.mxu0 %v2147
        %2639 = vmatprep.subr.mxu0 0.0
        %2640 = vmatpush1.msra.mxu0 %v2148
        %2641 = vmatprep.subr.mxu0 0.0
        %2642 = vmatpush1.msra.mxu0 %v2149
        %2643 = vmatprep.subr.mxu0 0.0
        %2644 = vmatpush1.msra.mxu0 %v2150
        %2645 = vmatprep.subr.mxu0 0.0
        %2646 = vmatpush1.msra.mxu0 %v2151
        %2647 = vmatprep.subr.mxu0 0.0
        %2648 = vmatpush1.msra.mxu0 %v2152
        %2649 = vmatprep.subr.mxu0 0.0
        %2650 = vmatpush1.msra.mxu0 %v2153
        %2651 = vmatprep.subr.mxu0 0.0
        %2652 = vmatpush1.msra.mxu0 %v2154
        %2653 = vmatprep.subr.mxu0 0.0
        %2654 = vmatpush1.msra.mxu0 %v2155
        %2655 = vmatprep.subr.mxu0 0.0
        %2656 = vmatpush1.msra.mxu0 %v2156
        %2657 = vmatprep.subr.mxu0 0.0
        %2658 = vmatpush1.msra.mxu0 %v2157
        %2659 = vmatprep.subr.mxu0 0.0
        %2660 = vmatpush1.msra.mxu0 %v2158
        %2661 = vmatprep.subr.mxu0 0.0
        %2662 = vmatpush1.msra.mxu0 %v2159
        %2663 = vmatprep.subr.mxu0 0.0
        %2664 = vmatpush1.msra.mxu0 %v2160
        %2665 = vmatprep.subr.mxu0 0.0
        %2666 = vmatpush1.msra.mxu0 %v2161
        %2667 = vmatprep.subr.mxu0 0.0
        %2668 = vmatpush1.msra.mxu0 %v2162
        %2669 = vmatprep.subr.mxu0 0.0
        %2670 = vmatpush1.msra.mxu0 %v2163
        %2671 = vmatprep.subr.mxu0 0.0
        %2672 = vmatpush1.msra.mxu0 %v2164
        %2673 = vmatprep.subr.mxu0 0.0
        %2674 = vmatpush1.msra.mxu0 %v2165
        %2675 = vmatprep.subr.mxu0 0.0
        %2676 = vmatpush1.msra.mxu0 %v2166
        %2677 = vmatprep.subr.mxu0 0.0
        %2678 = vmatpush1.msra.mxu0 %v2167
        %2679 = vmatprep.subr.mxu0 0.0
        %2680 = vmatpush1.msra.mxu0 %v2168
        %2681 = vmatprep.subr.mxu0 0.0
        %2682 = vmatpush1.msra.mxu0 %v2169
        %2683 = vmatprep.subr.mxu0 0.0
        %2684 = vmatpush1.msra.mxu0 %v2170
        %2685 = vmatprep.subr.mxu0 0.0
        %2686 = vmatpush1.msra.mxu0 %v2171
        %2687 = vmatprep.subr.mxu0 0.0
        %2688 = vmatpush1.msra.mxu0 %v2172
        %2689 = vmatprep.subr.mxu0 0.0
        %2690 = vmatpush1.msra.mxu0 %v2173
        %2691 = vmatprep.subr.mxu0 0.0
        %2692 = vmatpush1.msra.mxu0 %v2174
        %2693 = vmatprep.subr.mxu0 0.0
        %2694 = vmatpush1.msra.mxu0 %v2175
        %2695 = vmatprep.subr.mxu0 0.0
        %2696 = vmatpush1.msra.mxu0 %v2176
        %2697 = vmatprep.subr.mxu0 0.0
        %2698 = vmatpush1.msra.mxu0 %v2177
        %2699 = vmatprep.mubr.f32.mxu0 %v1895
        %2700 = vmatmul.mubr.f32.gmra.mrb[0].mxu0 %v1894
        %v2701 = vpop.f32.mrb[0].mxu0
        %v2702 = vadd.f32 %v2477, %v2701
        %v2703 = vpop.f32.mrb[0].mxu0
        %2704 = vmatprep.mubr.f32.mxu0 %v1901
        %2705 = vmatmul.mubr.f32.gmra.mrb[0].mxu0 %v1900
        %v2706 = vpop.f32.mrb[0].mxu0
        %v2707 = vadd.f32 %v2482, %v2706
        %v2708 = vpop.f32.mrb[0].mxu0
        %2709 = vmatprep.mubr.f32.mxu0 %v1907
        %2710 = vmatmul.mubr.f32.gmra.mrb[0].mxu0 %v1906
        %v2711 = vpop.f32.mrb[0].mxu0
        %v2712 = vadd.f32 %v2487, %v2711
        %v2713 = vpop.f32.mrb[0].mxu0
        %2714 = vmatprep.mubr.f32.mxu0 %v1913
        %2715 = vmatmul.mubr.f32.gmra.mrb[0].mxu0 %v1912
        %v2716 = vpop.f32.mrb[0].mxu0
        %v2717 = vadd.f32 %v2492, %v2716
        %v2718 = vpop.f32.mrb[0].mxu0
        %2719 = vmatprep.mubr.f32.mxu0 %v1919
        %2720 = vmatmul.mubr.f32.gmra.mrb[0].mxu0 %v1918
        %v2721 = vpop.f32.mrb[0].mxu0
        %v2722 = vadd.f32 %v2497, %v2721
        %v2723 = vpop.f32.mrb[0].mxu0
        %2724 = vmatprep.mubr.f32.mxu0 %v1925
        %2725 = vmatmul.mubr.f32.gmra.mrb[0].mxu0 %v1924
        %v2726 = vpop.f32.mrb[0].mxu0
        %v2727 = vadd.f32 %v2502, %v2726
        %v2728 = vpop.f32.mrb[0].mxu0
        %2729 = vmatprep.mubr.f32.mxu0 %v1931
        %2730 = vmatmul.mubr.f32.gmra.mrb[0].mxu0 %v1930
        %v2731 = vpop.f32.mrb[0].mxu0
        %v2732 = vadd.f32 %v2507, %v2731
        %v2733 = vpop.f32.mrb[0].mxu0
        %2734 = vmatprep.mubr.f32.mxu0 %v1937
        %2735 = vmatmul.mubr.f32.gmra.mrb[0].mxu0 %v1936
        %v2736 = vpop.f32.mrb[0].mxu0
        %v2737 = vadd.f32 %v2512, %v2736
        %v2738 = vpop.f32.mrb[0].mxu0
        %2739 = vmatprep.mubr.f32.mxu0 %v1943
        %2740 = vmatmul.mubr.f32.gmra.mrb[0].mxu0 %v1942
        %v2741 = vpop.f32.mrb[0].mxu0
        %v2742 = vadd.f32 %v2517, %v2741
        %v2743 = vpop.f32.mrb[0].mxu0
        %2744 = vmatprep.mubr.f32.mxu0 %v1949
        %2745 = vmatmul.mubr.f32.gmra.mrb[0].mxu0 %v1948
        %v2746 = vpop.f32.mrb[0].mxu0
        %v2747 = vadd.f32 %v2522, %v2746
        %v2748 = vpop.f32.mrb[0].mxu0
        %2749 = vmatprep.mubr.f32.mxu0 %v1955
        %2750 = vmatmul.mubr.f32.gmra.mrb[0].mxu0 %v1954
        %v2751 = vpop.f32.mrb[0].mxu0
        %v2752 = vadd.f32 %v2527, %v2751
        %v2753 = vpop.f32.mrb[0].mxu0
        %2754 = vmatprep.mubr.f32.mxu0 %v1961
        %2755 = vmatmul.mubr.f32.gmra.mrb[0].mxu0 %v1960
        %v2756 = vpop.f32.mrb[0].mxu0
        %v2757 = vadd.f32 %v2532, %v2756
        %v2758 = vpop.f32.mrb[0].mxu0
        %2759 = vmatprep.mubr.f32.mxu0 %v1967
        %2760 = vmatmul.mubr.f32.gmra.mrb[0].mxu0 %v1966
        %v2761 = vpop.f32.mrb[0].mxu0
        %v2762 = vadd.f32 %v2537, %v2761
        %v2763 = vpop.f32.mrb[0].mxu0
        %2764 = vmatprep.mubr.f32.mxu0 %v1973
        %2765 = vmatmul.mubr.f32.gmra.mrb[0].mxu0 %v1972
        %v2766 = vpop.f32.mrb[0].mxu0
        %v2767 = vadd.f32 %v2542, %v2766
        %v2768 = vpop.f32.mrb[0].mxu0
        %2769 = vmatprep.mubr.f32.mxu0 %v1979
        %2770 = vmatmul.mubr.f32.gmra.mrb[0].mxu0 %v1978
        %v2771 = vpop.f32.mrb[0].mxu0
        %v2772 = vadd.f32 %v2547, %v2771
        %v2773 = vpop.f32.mrb[0].mxu0
        %2774 = vmatprep.mubr.f32.mxu0 %v1985
        %2775 = vmatmul.mubr.f32.gmra.mrb[0].mxu0 %v1984
        %v2776 = vpop.f32.mrb[0].mxu0
        %v2777 = vadd.f32 %v2552, %v2776
        %v2778 = vpop.f32.mrb[0].mxu0
        %2779 = vmatprep.mubr.f32.mxu0 %v1991
        %2780 = vmatmul.mubr.f32.gmra.mrb[0].mxu0 %v1990
        %v2781 = vpop.f32.mrb[0].mxu0
        %v2782 = vadd.f32 %v2557, %v2781
        %v2783 = vpop.f32.mrb[0].mxu0
        %2784 = vmatprep.mubr.f32.mxu0 %v1997
        %2785 = vmatmul.mubr.f32.gmra.mrb[0].mxu0 %v1996
        %v2786 = vpop.f32.mrb[0].mxu0
        %v2787 = vadd.f32 %v2562, %v2786
        %v2788 = vpop.f32.mrb[0].mxu0
        %2789 = vmatprep.mubr.f32.mxu0 %v2003
        %2790 = vmatmul.mubr.f32.gmra.mrb[0].mxu0 %v2002
        %v2791 = vpop.f32.mrb[0].mxu0
        %v2792 = vadd.f32 %v2567, %v2791
        %v2793 = vpop.f32.mrb[0].mxu0
        %2794 = vmatprep.mubr.f32.mxu0 %v2009
        %2795 = vmatmul.mubr.f32.gmra.mrb[0].mxu0 %v2008
        %v2796 = vpop.f32.mrb[0].mxu0
        %v2797 = vadd.f32 %v2572, %v2796
        %v2798 = vpop.f32.mrb[0].mxu0
        %2799 = vmatprep.mubr.f32.mxu0 %v2015
        %2800 = vmatmul.mubr.f32.gmra.mrb[0].mxu0 %v2014
        %v2801 = vpop.f32.mrb[0].mxu0
        %v2802 = vadd.f32 %v2577, %v2801
        %v2803 = vpop.f32.mrb[0].mxu0
        %2804 = vmatprep.mubr.f32.mxu0 %v2021
        %2805 = vmatmul.mubr.f32.gmra.mrb[0].mxu0 %v2020
        %v2806 = vpop.f32.mrb[0].mxu0
        %v2807 = vadd.f32 %v2582, %v2806
        %v2808 = vpop.f32.mrb[0].mxu0
        %2809 = vmatprep.mubr.f32.mxu0 %v2027
        %2810 = vmatmul.mubr.f32.gmra.mrb[0].mxu0 %v2026
        %v2811 = vpop.f32.mrb[0].mxu0
        %v2812 = vadd.f32 %v2587, %v2811
        %v2813 = vpop.f32.mrb[0].mxu0
        %2814 = vmatprep.mubr.f32.mxu0 %v2033
        %2815 = vmatmul.mubr.f32.gmra.mrb[0].mxu0 %v2032
        %v2816 = vpop.f32.mrb[0].mxu0
        %v2817 = vadd.f32 %v2592, %v2816
        %v2818 = vpop.f32.mrb[0].mxu0
        %2819 = vmatprep.mubr.f32.mxu0 %v2039
        %2820 = vmatmul.mubr.f32.gmra.mrb[0].mxu0 %v2038
        %v2821 = vpop.f32.mrb[0].mxu0
        %v2822 = vadd.f32 %v2597, %v2821
        %v2823 = vpop.f32.mrb[0].mxu0
        %2824 = vmatprep.mubr.f32.mxu0 %v2045
        %2825 = vmatmul.mubr.f32.gmra.mrb[0].mxu0 %v2044
        %v2826 = vpop.f32.mrb[0].mxu0
        %v2827 = vadd.f32 %v2602, %v2826
        %v2828 = vpop.f32.mrb[0].mxu0
        %2829 = vmatprep.mubr.f32.mxu0 %v2051
        %2830 = vmatmul.mubr.f32.gmra.mrb[0].mxu0 %v2050
        %v2831 = vpop.f32.mrb[0].mxu0
        %v2832 = vadd.f32 %v2607, %v2831
        %v2833 = vpop.f32.mrb[0].mxu0
        %2834 = vmatprep.mubr.f32.mxu0 %v2057
        %2835 = vmatmul.mubr.f32.gmra.mrb[0].mxu0 %v2056
        %v2836 = vpop.f32.mrb[0].mxu0
        %v2837 = vadd.f32 %v2612, %v2836
        %v2838 = vpop.f32.mrb[0].mxu0
        %2839 = vmatprep.mubr.f32.mxu0 %v2063
        %2840 = vmatmul.mubr.f32.gmra.mrb[0].mxu0 %v2062
        %v2841 = vpop.f32.mrb[0].mxu0
        %v2842 = vadd.f32 %v2617, %v2841
        %v2843 = vpop.f32.mrb[0].mxu0
        %2844 = vmatprep.mubr.f32.mxu0 %v2069
        %2845 = vmatmul.mubr.f32.gmra.mrb[0].mxu0 %v2068
        %v2846 = vpop.f32.mrb[0].mxu0
        %v2847 = vadd.f32 %v2622, %v2846
        %v2848 = vpop.f32.mrb[0].mxu0
        %2849 = vmatprep.mubr.f32.mxu0 %v2075
        %2850 = vmatmul.mubr.f32.gmra.mrb[0].mxu0 %v2074
        %v2851 = vpop.f32.mrb[0].mxu0
        %v2852 = vadd.f32 %v2627, %v2851
        %v2853 = vpop.f32.mrb[0].mxu0
        %2854 = vmatprep.mubr.f32.mxu0 %v2081
        %2855 = vmatmul.mubr.f32.gmra.mrb[0].mxu0 %v2080
        %v2856 = vpop.f32.mrb[0].mxu0
        %v2857 = vadd.f32 %v2632, %v2856
        %v2858 = vpop.f32.mrb[0].mxu0
        %2859 = vdwg.mxu0
        %v2860 = vmax.f32 %v2702, 0.0
        %v2861 = vmax.f32 %v2707, 0.0
        %v2862 = vmax.f32 %v2712, 0.0
        %v2863 = vmax.f32 %v2717, 0.0
        %v2864 = vmax.f32 %v2722, 0.0
        %v2865 = vmax.f32 %v2727, 0.0
        %v2866 = vmax.f32 %v2732, 0.0
        %v2867 = vmax.f32 %v2737, 0.0
        %v2868 = vmax.f32 %v2742, 0.0
        %v2869 = vmax.f32 %v2747, 0.0
        %v2870 = vmax.f32 %v2752, 0.0
        %v2871 = vmax.f32 %v2757, 0.0
        %v2872 = vmax.f32 %v2762, 0.0
        %v2873 = vmax.f32 %v2767, 0.0
        %v2874 = vmax.f32 %v2772, 0.0
        %v2875 = vmax.f32 %v2777, 0.0
        %v2876 = vmax.f32 %v2782, 0.0
        %v2877 = vmax.f32 %v2787, 0.0
        %v2878 = vmax.f32 %v2792, 0.0
        %v2879 = vmax.f32 %v2797, 0.0
        %v2880 = vmax.f32 %v2802, 0.0
        %v2881 = vmax.f32 %v2807, 0.0
        %v2882 = vmax.f32 %v2812, 0.0
        %v2883 = vmax.f32 %v2817, 0.0
        %v2884 = vmax.f32 %v2822, 0.0
        %v2885 = vmax.f32 %v2827, 0.0
        %v2886 = vmax.f32 %v2832, 0.0
        %v2887 = vmax.f32 %v2837, 0.0
        %v2888 = vmax.f32 %v2842, 0.0
        %v2889 = vmax.f32 %v2847, 0.0
        %v2890 = vmax.f32 %v2852, 0.0
        %v2891 = vmax.f32 %v2857, 0.0
        %v2892 = vmul.f32 %v2860, %v2860
        %v2893 = vmul.f32 %v2861, %v2861
        %v2894 = vmul.f32 %v2862, %v2862
        %v2895 = vmul.f32 %v2863, %v2863
        %v2896 = vmul.f32 %v2864, %v2864
        %v2897 = vmul.f32 %v2865, %v2865
        %v2898 = vmul.f32 %v2866, %v2866
        %v2899 = vmul.f32 %v2867, %v2867
        %v2900 = vmul.f32 %v2868, %v2868
        %v2901 = vmul.f32 %v2869, %v2869
        %v2902 = vmul.f32 %v2870, %v2870
        %v2903 = vmul.f32 %v2871, %v2871
        %v2904 = vmul.f32 %v2872, %v2872
        %v2905 = vmul.f32 %v2873, %v2873
        %v2906 = vmul.f32 %v2874, %v2874
        %v2907 = vmul.f32 %v2875, %v2875
        %v2908 = vmul.f32 %v2876, %v2876
        %v2909 = vmul.f32 %v2877, %v2877
        %v2910 = vmul.f32 %v2878, %v2878
        %v2911 = vmul.f32 %v2879, %v2879
        %v2912 = vmul.f32 %v2880, %v2880
        %v2913 = vmul.f32 %v2881, %v2881
        %v2914 = vmul.f32 %v2882, %v2882
        %v2915 = vmul.f32 %v2883, %v2883
        %v2916 = vmul.f32 %v2884, %v2884
        %v2917 = vmul.f32 %v2885, %v2885
        %v2918 = vmul.f32 %v2886, %v2886
        %v2919 = vmul.f32 %v2887, %v2887
        %v2920 = vmul.f32 %v2888, %v2888
        %v2921 = vmul.f32 %v2889, %v2889
        %v2922 = vmul.f32 %v2890, %v2890
        %v2923 = vmul.f32 %v2891, %v2891
        %2924 = vadd.xlane.f32.xlu0 %v2892
        %v2925 = vpop.xlane.xlu0 %2924
        %2926 = vadd.xlane.f32.xlu0 %v2893
        %v2927 = vpop.xlane.xlu0 %2926
        %2928 = vadd.xlane.f32.xlu0 %v2894
        %v2929 = vpop.xlane.xlu0 %2928
        %2930 = vadd.xlane.f32.xlu0 %v2895
        %v2931 = vpop.xlane.xlu0 %2930
        %2932 = vadd.xlane.f32.xlu0 %v2896
        %v2933 = vpop.xlane.xlu0 %2932
        %2934 = vadd.xlane.f32.xlu0 %v2897
        %v2935 = vpop.xlane.xlu0 %2934
        %2936 = vadd.xlane.f32.xlu0 %v2898
        %v2937 = vpop.xlane.xlu0 %2936
        %2938 = vadd.xlane.f32.xlu0 %v2899
        %v2939 = vpop.xlane.xlu0 %2938
        %2940 = vadd.xlane.f32.xlu0 %v2900
        %v2941 = vpop.xlane.xlu0 %2940
        %2942 = vadd.xlane.f32.xlu0 %v2901
        %v2943 = vpop.xlane.xlu0 %2942
        %2944 = vadd.xlane.f32.xlu0 %v2902
        %v2945 = vpop.xlane.xlu0 %2944
        %2946 = vadd.xlane.f32.xlu0 %v2903
        %v2947 = vpop.xlane.xlu0 %2946
        %2948 = vadd.xlane.f32.xlu0 %v2904
        %v2949 = vpop.xlane.xlu0 %2948
        %2950 = vadd.xlane.f32.xlu0 %v2905
        %v2951 = vpop.xlane.xlu0 %2950
        %2952 = vadd.xlane.f32.xlu0 %v2906
        %v2953 = vpop.xlane.xlu0 %2952
        %2954 = vadd.xlane.f32.xlu0 %v2907
        %v2955 = vpop.xlane.xlu0 %2954
        %2956 = vadd.xlane.f32.xlu0 %v2908
        %v2957 = vpop.xlane.xlu0 %2956
        %2958 = vadd.xlane.f32.xlu0 %v2909
        %v2959 = vpop.xlane.xlu0 %2958
        %2960 = vadd.xlane.f32.xlu0 %v2910
        %v2961 = vpop.xlane.xlu0 %2960
        %2962 = vadd.xlane.f32.xlu0 %v2911
        %v2963 = vpop.xlane.xlu0 %2962
        %2964 = vadd.xlane.f32.xlu0 %v2912
        %v2965 = vpop.xlane.xlu0 %2964
        %2966 = vadd.xlane.f32.xlu0 %v2913
        %v2967 = vpop.xlane.xlu0 %2966
        %2968 = vadd.xlane.f32.xlu0 %v2914
        %v2969 = vpop.xlane.xlu0 %2968
        %2970 = vadd.xlane.f32.xlu0 %v2915
        %v2971 = vpop.xlane.xlu0 %2970
        %2972 = vadd.xlane.f32.xlu0 %v2916
        %v2973 = vpop.xlane.xlu0 %2972
        %2974 = vadd.xlane.f32.xlu0 %v2917
        %v2975 = vpop.xlane.xlu0 %2974
        %2976 = vadd.xlane.f32.xlu0 %v2918
        %v2977 = vpop.xlane.xlu0 %2976
        %2978 = vadd.xlane.f32.xlu0 %v2919
        %v2979 = vpop.xlane.xlu0 %2978
        %2980 = vadd.xlane.f32.xlu0 %v2920
        %v2981 = vpop.xlane.xlu0 %2980
        %2982 = vadd.xlane.f32.xlu0 %v2921
        %v2983 = vpop.xlane.xlu0 %2982
        %2984 = vadd.xlane.f32.xlu0 %v2922
        %v2985 = vpop.xlane.xlu0 %2984
        %2986 = vadd.xlane.f32.xlu0 %v2923
        %v2987 = vpop.xlane.xlu0 %2986
        %v2988 = vadd.f32 %v2925, 1e-08
        %v2989 = vadd.f32 %v2927, 1e-08
        %v2990 = vadd.f32 %v2929, 1e-08
        %v2991 = vadd.f32 %v2931, 1e-08
        %v2992 = vadd.f32 %v2933, 1e-08
        %v2993 = vadd.f32 %v2935, 1e-08
        %v2994 = vadd.f32 %v2937, 1e-08
        %v2995 = vadd.f32 %v2939, 1e-08
        %v2996 = vadd.f32 %v2941, 1e-08
        %v2997 = vadd.f32 %v2943, 1e-08
        %v2998 = vadd.f32 %v2945, 1e-08
        %v2999 = vadd.f32 %v2947, 1e-08
        %v3000 = vadd.f32 %v2949, 1e-08
        %v3001 = vadd.f32 %v2951, 1e-08
        %v3002 = vadd.f32 %v2953, 1e-08
        %v3003 = vadd.f32 %v2955, 1e-08
        %v3004 = vadd.f32 %v2957, 1e-08
        %v3005 = vadd.f32 %v2959, 1e-08
        %v3006 = vadd.f32 %v2961, 1e-08
        %v3007 = vadd.f32 %v2963, 1e-08
        %v3008 = vadd.f32 %v2965, 1e-08
        %v3009 = vadd.f32 %v2967, 1e-08
        %v3010 = vadd.f32 %v2969, 1e-08
        %v3011 = vadd.f32 %v2971, 1e-08
        %v3012 = vadd.f32 %v2973, 1e-08
        %v3013 = vadd.f32 %v2975, 1e-08
        %v3014 = vadd.f32 %v2977, 1e-08
        %v3015 = vadd.f32 %v2979, 1e-08
        %v3016 = vadd.f32 %v2981, 1e-08
        %v3017 = vadd.f32 %v2983, 1e-08
        %v3018 = vadd.f32 %v2985, 1e-08
        %v3019 = vadd.f32 %v2987, 1e-08
        %v3020 = vrsqrt.pop %v2988
        %v3021 = vrsqrt.pop %v2989
        %v3022 = vrsqrt.pop %v2990
        %v3023 = vrsqrt.pop %v2991
        %v3024 = vrsqrt.pop %v2992
        %v3025 = vrsqrt.pop %v2993
        %v3026 = vrsqrt.pop %v2994
        %v3027 = vrsqrt.pop %v2995
        %v3028 = vrsqrt.pop %v2996
        %v3029 = vrsqrt.pop %v2997
        %v3030 = vrsqrt.pop %v2998
        %v3031 = vrsqrt.pop %v2999
        %v3032 = vrsqrt.pop %v3000
        %v3033 = vrsqrt.pop %v3001
        %v3034 = vrsqrt.pop %v3002
        %v3035 = vrsqrt.pop %v3003
        %v3036 = vrsqrt.pop %v3004
        %v3037 = vrsqrt.pop %v3005
        %v3038 = vrsqrt.pop %v3006
        %v3039 = vrsqrt.pop %v3007
        %v3040 = vrsqrt.pop %v3008
        %v3041 = vrsqrt.pop %v3009
        %v3042 = vrsqrt.pop %v3010
        %v3043 = vrsqrt.pop %v3011
        %v3044 = vrsqrt.pop %v3012
        %v3045 = vrsqrt.pop %v3013
        %v3046 = vrsqrt.pop %v3014
        %v3047 = vrsqrt.pop %v3015
        %v3048 = vrsqrt.pop %v3016
        %v3049 = vrsqrt.pop %v3017
        %v3050 = vrsqrt.pop %v3018
        %v3051 = vrsqrt.pop %v3019
        %v3052 = vmul.f32 %v2860, %v3020
        %v3053 = vmul.f32 %v2861, %v3021
        %v3054 = vmul.f32 %v2862, %v3022
        %v3055 = vmul.f32 %v2863, %v3023
        %v3056 = vmul.f32 %v2864, %v3024
        %v3057 = vmul.f32 %v2865, %v3025
        %v3058 = vmul.f32 %v2866, %v3026
        %v3059 = vmul.f32 %v2867, %v3027
        %v3060 = vmul.f32 %v2868, %v3028
        %v3061 = vmul.f32 %v2869, %v3029
        %v3062 = vmul.f32 %v2870, %v3030
        %v3063 = vmul.f32 %v2871, %v3031
        %v3064 = vmul.f32 %v2872, %v3032
        %v3065 = vmul.f32 %v2873, %v3033
        %v3066 = vmul.f32 %v2874, %v3034
        %v3067 = vmul.f32 %v2875, %v3035
        %v3068 = vmul.f32 %v2876, %v3036
        %v3069 = vmul.f32 %v2877, %v3037
        %v3070 = vmul.f32 %v2878, %v3038
        %v3071 = vmul.f32 %v2879, %v3039
        %v3072 = vmul.f32 %v2880, %v3040
        %v3073 = vmul.f32 %v2881, %v3041
        %v3074 = vmul.f32 %v2882, %v3042
        %v3075 = vmul.f32 %v2883, %v3043
        %v3076 = vmul.f32 %v2884, %v3044
        %v3077 = vmul.f32 %v2885, %v3045
        %v3078 = vmul.f32 %v2886, %v3046
        %v3079 = vmul.f32 %v2887, %v3047
        %v3080 = vmul.f32 %v2888, %v3048
        %v3081 = vmul.f32 %v2889, %v3049
        %v3082 = vmul.f32 %v2890, %v3050
        %v3083 = vmul.f32 %v2891, %v3051
        %v3084 = vsub.f32 %v3052, %v3068
        %v3085 = vsub.f32 %v3053, %v3069
        %v3086 = vsub.f32 %v3054, %v3070
        %v3087 = vsub.f32 %v3055, %v3071
        %v3088 = vsub.f32 %v3056, %v3072
        %v3089 = vsub.f32 %v3057, %v3073
        %v3090 = vsub.f32 %v3058, %v3074
        %v3091 = vsub.f32 %v3059, %v3075
        %v3092 = vsub.f32 %v3060, %v3076
        %v3093 = vsub.f32 %v3061, %v3077
        %v3094 = vsub.f32 %v3062, %v3078
        %v3095 = vsub.f32 %v3063, %v3079
        %v3096 = vsub.f32 %v3064, %v3080
        %v3097 = vsub.f32 %v3065, %v3081
        %v3098 = vsub.f32 %v3066, %v3082
        %v3099 = vsub.f32 %v3067, %v3083
        %v3100 = vmul.f32 %v3084, %v3084
        %v3101 = vmul.f32 %v3085, %v3085
        %v3102 = vmul.f32 %v3086, %v3086
        %v3103 = vmul.f32 %v3087, %v3087
        %v3104 = vmul.f32 %v3088, %v3088
        %v3105 = vmul.f32 %v3089, %v3089
        %v3106 = vmul.f32 %v3090, %v3090
        %v3107 = vmul.f32 %v3091, %v3091
        %v3108 = vmul.f32 %v3092, %v3092
        %v3109 = vmul.f32 %v3093, %v3093
        %v3110 = vmul.f32 %v3094, %v3094
        %v3111 = vmul.f32 %v3095, %v3095
        %v3112 = vmul.f32 %v3096, %v3096
        %v3113 = vmul.f32 %v3097, %v3097
        %v3114 = vmul.f32 %v3098, %v3098
        %v3115 = vmul.f32 %v3099, %v3099
        %3116 = vmatprep.subr.mxu0 0.0
        %3117 = vmatpush1.xpose.msra.mxu0 %v3100
        %3118 = vmatprep.subr.mxu0 0.0
        %3119 = vmatpush1.xpose.msra.mxu0 %v3101
        %3120 = vmatprep.subr.mxu0 0.0
        %3121 = vmatpush1.xpose.msra.mxu0 %v3102
        %3122 = vmatprep.subr.mxu0 0.0
        %3123 = vmatpush1.xpose.msra.mxu0 %v3103
        %3124 = vmatprep.subr.mxu0 0.0
        %3125 = vmatpush1.xpose.msra.mxu0 %v3104
        %3126 = vmatprep.subr.mxu0 0.0
        %3127 = vmatpush1.xpose.msra.mxu0 %v3105
        %3128 = vmatprep.subr.mxu0 0.0
        %3129 = vmatpush1.xpose.msra.mxu0 %v3106
        %3130 = vmatprep.subr.mxu0 0.0
        %3131 = vmatpush1.xpose.msra.mxu0 %v3107
        %3132 = vmatprep.subr.mxu0 0.0
        %3133 = vmatpush1.xpose.msra.mxu0 %v3108
        %3134 = vmatprep.subr.mxu0 0.0
        %3135 = vmatpush1.xpose.msra.mxu0 %v3109
        %3136 = vmatprep.subr.mxu0 0.0
        %3137 = vmatpush1.xpose.msra.mxu0 %v3110
        %3138 = vmatprep.subr.mxu0 0.0
        %3139 = vmatpush1.xpose.msra.mxu0 %v3111
        %3140 = vmatprep.subr.mxu0 0.0
        %3141 = vmatpush1.xpose.msra.mxu0 %v3112
        %3142 = vmatprep.subr.mxu0 0.0
        %3143 = vmatpush1.xpose.msra.mxu0 %v3113
        %3144 = vmatprep.subr.mxu0 0.0
        %3145 = vmatpush1.xpose.msra.mxu0 %v3114
        %3146 = vmatprep.subr.mxu0 0.0
        %3147 = vmatpush1.xpose.msra.mxu0 %v3115
        %3148 = vmatprep.subr.mxu0 0.0
        %3149 = vmatpush1.xpose.msra.mxu0 0.0
        %3150 = vmatprep.subr.mxu0 0.0
        %3151 = vmatpush1.xpose.msra.mxu0 0.0
        %3152 = vmatprep.subr.mxu0 0.0
        %3153 = vmatpush1.xpose.msra.mxu0 0.0
        %3154 = vmatprep.subr.mxu0 0.0
        %3155 = vmatpush1.xpose.msra.mxu0 0.0
        %3156 = vmatprep.subr.mxu0 0.0
        %3157 = vmatpush1.xpose.msra.mxu0 0.0
        %3158 = vmatprep.subr.mxu0 0.0
        %3159 = vmatpush1.xpose.msra.mxu0 0.0
        %3160 = vmatprep.subr.mxu0 0.0
        %3161 = vmatpush1.xpose.msra.mxu0 0.0
        %3162 = vmatprep.subr.mxu0 0.0
        %3163 = vmatpush1.xpose.msra.mxu0 0.0
        %3164 = vmatprep.subr.mxu0 0.0
        %3165 = vmatpush1.xpose.msra.mxu0 0.0
        %3166 = vmatprep.subr.mxu0 0.0
        %3167 = vmatpush1.xpose.msra.mxu0 0.0
        %3168 = vmatprep.subr.mxu0 0.0
        %3169 = vmatpush1.xpose.msra.mxu0 0.0
        %3170 = vmatprep.subr.mxu0 0.0
        %3171 = vmatpush1.xpose.msra.mxu0 0.0
        %3172 = vmatprep.subr.mxu0 0.0
        %3173 = vmatpush1.xpose.msra.mxu0 0.0
        %3174 = vmatprep.subr.mxu0 0.0
        %3175 = vmatpush1.xpose.msra.mxu0 0.0
        %3176 = vmatprep.subr.mxu0 0.0
        %3177 = vmatpush1.xpose.msra.mxu0 0.0
        %3178 = vmatprep.subr.mxu0 0.0
        %3179 = vmatpush1.xpose.msra.mxu0 0.0
        %3180 = vmatprep.mubr.f32.mxu0 0.0
        %3181 = vmatmul.mubr.f32.gmra.mrb[0].mxu0 1.0
        %v3182 = vpop.f32.mrb[0].mxu0
        %v3183 = vadd.f32 0.0, %v3182
        %v3184 = vpop.f32.mrb[0].mxu0
        %3185 = vdwg.mxu0
        %v3186 = vmul.f32 %v3183, 1e+08
        %3187 = vst [vmem:[%s425] sm:$0x1] %v3186
        %s3188 = sand.u32 %s240, 1
        %s3189 = scalar_lea.sflag [#allocation4], %s3188
        %s3190 = sand.u32 %s240, 1
        %s3191 = scalar_lea.vmem [#allocation10], %s3190
        // Predicated region
        $region73: #{tpu_custom_call.1} parent=55 // pred_check
          %p3192 = pneg %p250
        $region74: #{tpu_custom_call.1} parent=55 // pred_check_branch
          %3194 = sbr.rel (%p3192) target = $region76
        $region75: #{tpu_custom_call.1} parent=55 // pred_region
          %s3196 = ssub.s32 16, 16
          %3197 = vsyncadd %s3189, %s3196
          %s3198 = smul.addr %s28, 16
          %s3199 = scalar_lea.hbm %s9, %s3198
          %s3201 = sshll.u32 %s3191, 4
          %s3202 = int_to_ptr.vmem [resolvable:$true] %s3201
          %3204 = dma.vmem_to_hbm [thread:$0]  %s3202, 16, %s3199, %s3189
        $region76: #{tpu_custom_call.1} parent=55 // pred_fallthru
          _
      $region56: #{tpu_custom_call.1} parent=5 // pred_fallthru
        _
      %p3205 = scmp.le.s32.totalorder 2, %s23
      // Predicated region
      $region77: #{tpu_custom_call.1} parent=5 // pred_check
        %p3206 = pneg %p3205
      $region78: #{tpu_custom_call.1} parent=5 // pred_check_branch
        %3208 = sbr.rel (%p3206) target = $region80
      $region79: #{tpu_custom_call.1} parent=5 // pred_region
        %s3209 = ssub.s32 %s23, 2
        // Predicated region
        $region81: #{tpu_custom_call.1} parent=79 // pred_check
          %p3210 = pneg %p256
        $region82: #{tpu_custom_call.1} parent=79 // pred_check_branch
          %3212 = sbr.rel (%p3210) target = $region84
        $region83: #{tpu_custom_call.1} parent=79 // pred_region
          %s3213 = sand.u32 %s241, 1
          %s3214 = scalar_lea.sflag [#allocation4], %s3213
          %s3215 = sand.u32 %s241, 1
          %s3216 = scalar_lea.vmem [#allocation10], %s3215
          %3217 = dma.done %s3214, 16
        $region84: #{tpu_custom_call.1} parent=79 // pred_fallthru
          _
      $region80: #{tpu_custom_call.1} parent=5 // pred_fallthru
        _
    $region6: #{tpu_custom_call.1} parent=1 // loop_footer
      %s27 = sadd.s32 1, %s23
    $region7: #{tpu_custom_call.1} parent=1 // loop_footer_branch
      %22 = sbr.rel target = $region3
    $region8: #{tpu_custom_call.1} parent=1 // loop_exit
      _
    %3218 = vsyncpa [#allocation3], 1
    %s3219 = scalar_lea.sflag [#allocation3], 1
    %3220 = vsyncpa %s3219, 1
    %3221 = vsyncpa [#allocation6], 1
    %3222 = vsyncpa [#allocation9], 1
    %3223 = vsyncpa [#allocation4], 1
    %s3224 = scalar_lea.sflag [#allocation4], 1
    %3225 = vsyncpa %s3224, 1

</llo_original>
